<compile_context>
chip_gen: v5e
topology: v5e:2x2
jax: 0.10.0
libtpu: 0.0.40
codegen_flags: <defaults>
</compile_context>

<pallas_src>
import functools

import jax
import jax.numpy as jnp
from jax import lax
from jax.experimental import pallas as pl
from jax.experimental.pallas import tpu as pltpu


def _dilated_residual_kernel(x_ref, wdw_ref, scale_ref, shift_ref, w1_ref, b1_ref,
                             o_ref, pad_ref, *, dilation, T, H, W, C):
    # x_ref  : (1, T, H, W*C)   unpadded input, (W, C) packed into lanes
    # wdw_ref: (3, 3, 3, W*C)   depthwise weights, per-channel values tiled across W
    # scale_ref, shift_ref, b1_ref: (1, W*C) folded BN scale / (BN shift + dw-bias) / 1x1 bias
    # w1_ref : (W*C, W*C)       block-diagonal kron(I_W, w_1x1^T)
    # o_ref  : (1, T, H, W*C)
    # pad_ref: VMEM scratch (T+2d, H+2, (W+2)*C)
    d = dilation
    WC = W * C
    f32 = jnp.float32

    x = x_ref[0].astype(f32)                                 # (T, H, WC)

    # --- build zero-padded tensor in VMEM (causal on T, 1 on H/W) -------------
    pad_ref[...] = jnp.zeros_like(pad_ref)
    pad_ref[2 * d:2 * d + T, 1:1 + H, C:C + WC] = x

    # --- depthwise causal dilated 3x3x3 conv (groups == channels) ------------
    # kw/kh shifts are hoisted to the slab load (one shifted load per (kh, kw));
    # kt is a free leading-dim offset on the loaded value.
    acc = jnp.zeros((T, H, WC), f32)
    for kh in range(3):
        for kw in range(3):
            slab = pad_ref[:, kh:kh + H, kw * C:kw * C + WC]  # (T+2d, H, WC)
            for kt in range(3):
                w_tap = wdw_ref[kt, kh, kw, :].astype(f32)    # (WC,)
                acc = acc + slab[kt * d:kt * d + T] * w_tap

    # --- BatchNorm3d (eval, folded; depthwise bias folded into shift) + ReLU --
    h = jnp.maximum(acc * scale_ref[0, :].astype(f32)
                    + shift_ref[0, :].astype(f32), 0.0)

    # --- 1x1x1 conv: block-diagonal channel matmul on the MXU ----------------
    y = jnp.dot(h.reshape(T * H, WC), w1_ref[...].astype(f32),
                preferred_element_type=f32)
    y = (y + b1_ref[0, :].astype(f32)).reshape(T, H, WC)

    # dropout is identity in eval mode; residual add
    o_ref[0] = (x + y).astype(o_ref.dtype)


def dilated_residual_causal3d(x_ncthw, params, dilation, eps=1e-5):
    """x_ncthw: (N, C, T, H, W) float32. Returns same shape/dtype."""
    N, C, T, H, W = x_ncthw.shape
    d = dilation
    WC = W * C

    # glue: NCDHW -> (N, T, H, W*C)  (lane-dense packed layout)
    x = jnp.transpose(x_ncthw, (0, 2, 3, 4, 1)).reshape(N, T, H, WC)

    # glue: parameter prep (BN folding w/ running stats, dw-bias fold, lane tiling)
    scale = params["gamma"] / jnp.sqrt(params["running_var"] + eps)
    shift = params["beta"] - params["running_mean"] * scale + params["b_dw"] * scale
    wdw = jnp.transpose(params["w_dw"], (1, 2, 3, 0))                 # (3,3,3,C)
    wdw_t = jnp.broadcast_to(wdw[:, :, :, None, :], (3, 3, 3, W, C)).reshape(3, 3, 3, WC)
    scale_t = jnp.tile(scale, W).reshape(1, WC)
    shift_t = jnp.tile(shift, W).reshape(1, WC)
    b1_t = jnp.tile(params["b_1x1"], W).reshape(1, WC)
    # block-diagonal 1x1 weight: (W*C, W*C) = kron(I_W, w_1x1^T)
    w1_blk = jnp.kron(jnp.eye(W, dtype=x.dtype), params["w_1x1"].T.astype(x.dtype))

    kernel = functools.partial(_dilated_residual_kernel,
                               dilation=d, T=T, H=H, W=W, C=C)

    out = pl.pallas_call(
        kernel,
        out_shape=jax.ShapeDtypeStruct((N, T, H, WC), x.dtype),
        grid=(N,),
        in_specs=[
            pl.BlockSpec((1, T, H, WC), lambda n: (n, 0, 0, 0)),
            pl.BlockSpec((3, 3, 3, WC), lambda n: (0, 0, 0, 0)),
            pl.BlockSpec((1, WC), lambda n: (0, 0)),
            pl.BlockSpec((1, WC), lambda n: (0, 0)),
            pl.BlockSpec((WC, WC), lambda n: (0, 0)),
            pl.BlockSpec((1, WC), lambda n: (0, 0)),
        ],
        out_specs=pl.BlockSpec((1, T, H, WC), lambda n: (n, 0, 0, 0)),
        scratch_shapes=[pltpu.VMEM((T + 2 * d, H + 2, (W + 2) * C), jnp.float32)],
        input_output_aliases={0: 0},
        compiler_params=pltpu.CompilerParams(dimension_semantics=("parallel",)),
    )(x, wdw_t, scale_t, shift_t, w1_blk, b1_t)

    return jnp.transpose(out.reshape(N, T, H, W, C), (0, 4, 1, 2, 3))  # back to NCDHW


def reference_forward(x_ncthw, params, dilation, eps=1e-5):
    """Pure-JAX reference mirroring the PyTorch eval() forward."""
    d = dilation
    C = x_ncthw.shape[1]
    xpad = jnp.pad(x_ncthw, ((0, 0), (0, 0), (2 * d, 0), (1, 1), (1, 1)))
    rhs = params["w_dw"][:, None, :, :, :]                             # (C,1,3,3,3)
    conv = lax.conv_general_dilated(
        xpad, rhs, window_strides=(1, 1, 1), padding="VALID",
        rhs_dilation=(d, 1, 1),
        dimension_numbers=("NCDHW", "OIDHW", "NCDHW"),
        feature_group_count=C, precision=lax.Precision.HIGHEST)
    conv = conv + params["b_dw"][None, :, None, None, None]
    scale = params["gamma"] / jnp.sqrt(params["running_var"] + eps)
    shift = params["beta"] - params["running_mean"] * scale
    h = jnp.maximum(conv * scale[None, :, None, None, None]
                    + shift[None, :, None, None, None], 0.0)
    y = jnp.einsum("oc,ncthw->nothw", params["w_1x1"], h,
                   precision=lax.Precision.HIGHEST) \
        + params["b_1x1"][None, :, None, None, None]
    return x_ncthw + y                                                 # dropout = identity (eval)


if __name__ == "__main__":
    key = jax.random.PRNGKey(0)
    # in_channels == out_channels (required by the module); W*C = 128 -> lane-dense.
    N, C, T, H, W = 2, 4, 8, 16, 32
    dilation = 2
    ks = jax.random.split(key, 9)

    x = jax.random.normal(ks[0], (N, C, T, H, W), dtype=jnp.float32)
    params = {
        "w_dw": 0.1 * jax.random.normal(ks[1], (C, 3, 3, 3), jnp.float32),   # grouped Conv3d weight (O,1,3,3,3) squeezed
        "b_dw": 0.1 * jax.random.normal(ks[2], (C,), jnp.float32),
        "gamma": jax.random.uniform(ks[3], (C,), jnp.float32, 0.5, 1.5),
        "beta": 0.1 * jax.random.normal(ks[4], (C,), jnp.float32),
        "running_mean": 0.1 * jax.random.normal(ks[5], (C,), jnp.float32),
        "running_var": jax.random.uniform(ks[6], (C,), jnp.float32, 0.5, 1.5),
        "w_1x1": 0.1 * jax.random.normal(ks[7], (C, C), jnp.float32),        # 1x1x1 Conv3d weight (O,I,1,1,1) squeezed
        "b_1x1": 0.1 * jax.random.normal(ks[8], (C,), jnp.float32),
    }

    out = dilated_residual_causal3d(x, params, dilation)
    out = jax.block_until_ready(out)

    ref = reference_forward(x, params, dilation)
    assert out.shape == x.shape and out.dtype == x.dtype
    assert jnp.allclose(out, ref, rtol=2e-4, atol=2e-4)

    print("KERNEL_OK")
</pallas_src>

<mosaic_0001>
module attributes {stable_mosaic.version = 11 : i64} {
  func.func @_dilated_residual_kernel(%arg0: i32, %arg1: memref<1x8x16x128xf32, #tpu.memory_space<vmem>>, %arg2: memref<3x3x3x128xf32, #tpu.memory_space<vmem>>, %arg3: memref<1x128xf32, #tpu.memory_space<vmem>>, %arg4: memref<1x128xf32, #tpu.memory_space<vmem>>, %arg5: memref<128x128xf32, #tpu.memory_space<vmem>>, %arg6: memref<1x128xf32, #tpu.memory_space<vmem>>, %arg7: memref<1x8x16x128xf32, #tpu.memory_space<vmem>>, %arg8: memref<12x18x136xf32, #tpu.memory_space<vmem>>) attributes {dimension_semantics = [#tpu.dimension_semantics<parallel>], iteration_bounds = array<i64: 2>, scalar_prefetch = 0 : i64, scratch_operands = 1 : i64, tpu.core_type = #tpu.core_type<tc>, window_params = [{transform_indices = @transform_0, window_bounds = array<i64: 1, 8, 16, 128>}, {pipeline_mode = #tpu.pipeline_mode<synchronous>, transform_indices = @transform_1, window_bounds = array<i64: 3, 3, 3, 128>}, {pipeline_mode = #tpu.pipeline_mode<synchronous>, transform_indices = @transform_2, window_bounds = array<i64: 1, 128>}, {pipeline_mode = #tpu.pipeline_mode<synchronous>, transform_indices = @transform_3, window_bounds = array<i64: 1, 128>}, {pipeline_mode = #tpu.pipeline_mode<synchronous>, transform_indices = @transform_4, window_bounds = array<i64: 128, 128>}, {pipeline_mode = #tpu.pipeline_mode<synchronous>, transform_indices = @transform_5, window_bounds = array<i64: 1, 128>}, {transform_indices = @transform_6, window_bounds = array<i64: 1, 8, 16, 128>}]} {
    %c0 = arith.constant 0 : index
    %c0_0 = arith.constant 0 : index
    %c0_1 = arith.constant 0 : index
    %c0_2 = arith.constant 0 : index
    %0 = vector.load %arg1[%c0, %c0_0, %c0_1, %c0_2] : memref<1x8x16x128xf32, #tpu.memory_space<vmem>>, vector<1x8x16x128xf32>
    %1 = vector.shape_cast %0 : vector<1x8x16x128xf32> to vector<8x16x128xf32>
    %cst = arith.constant 0.000000e+00 : f32
    %2 = vector.broadcast %cst : f32 to vector<12x18x136xf32>
    %c0_3 = arith.constant 0 : index
    %c0_4 = arith.constant 0 : index
    %c0_5 = arith.constant 0 : index
    %3 = vector.load %arg8[%c0_3, %c0_4, %c0_5] : memref<12x18x136xf32, #tpu.memory_space<vmem>>, vector<12x18x136xf32>
    tpu.vector_store %arg8[%c0_3, %c0_4, %c0_5], %2 {strides = array<i32>} : memref<12x18x136xf32, #tpu.memory_space<vmem>>, vector<12x18x136xf32>,
    %c4 = arith.constant 4 : index
    %c1 = arith.constant 1 : index
    %c4_6 = arith.constant 4 : index
    %4 = vector.load %arg8[%c4, %c1, %c4_6] : memref<12x18x136xf32, #tpu.memory_space<vmem>>, vector<8x16x128xf32>
    tpu.vector_store %arg8[%c4, %c1, %c4_6], %1 {strides = array<i32>} : memref<12x18x136xf32, #tpu.memory_space<vmem>>, vector<8x16x128xf32>,
    %cst_7 = arith.constant 0.000000e+00 : f32
    %5 = vector.broadcast %cst_7 : f32 to vector<8x16x128xf32>
    %c0_8 = arith.constant 0 : index
    %c0_9 = arith.constant 0 : index
    %c0_10 = arith.constant 0 : index
    %6 = vector.load %arg8[%c0_8, %c0_9, %c0_10] : memref<12x18x136xf32, #tpu.memory_space<vmem>>, vector<12x16x128xf32>
    %c0_11 = arith.constant 0 : index
    %c0_12 = arith.constant 0 : index
    %c0_13 = arith.constant 0 : index
    %c0_14 = arith.constant 0 : index
    %7 = vector.load %arg2[%c0_11, %c0_12, %c0_13, %c0_14] : memref<3x3x3x128xf32, #tpu.memory_space<vmem>>, vector<1x1x1x128xf32>
    %8 = vector.shape_cast %7 : vector<1x1x1x128xf32> to vector<128xf32>
    %9 = vector.extract_strided_slice %6 {offsets = [0, 0, 0], sizes = [8, 16, 128], strides = [1, 1, 1]} : vector<12x16x128xf32> to vector<8x16x128xf32>
    %10 = vector.shape_cast %8 : vector<128xf32> to vector<1x1x128xf32>
    %11 = vector.broadcast %10 : vector<1x1x128xf32> to vector<8x16x128xf32>
    %12 = arith.mulf %9, %11 : vector<8x16x128xf32>
    %13 = arith.addf %5, %12 : vector<8x16x128xf32>
    %c1_15 = arith.constant 1 : index
    %c0_16 = arith.constant 0 : index
    %c0_17 = arith.constant 0 : index
    %c0_18 = arith.constant 0 : index
    %14 = vector.load %arg2[%c1_15, %c0_16, %c0_17, %c0_18] : memref<3x3x3x128xf32, #tpu.memory_space<vmem>>, vector<1x1x1x128xf32>
    %15 = vector.shape_cast %14 : vector<1x1x1x128xf32> to vector<128xf32>
    %16 = vector.extract_strided_slice %6 {offsets = [2, 0, 0], sizes = [8, 16, 128], strides = [1, 1, 1]} : vector<12x16x128xf32> to vector<8x16x128xf32>
    %17 = vector.shape_cast %15 : vector<128xf32> to vector<1x1x128xf32>
    %18 = vector.broadcast %17 : vector<1x1x128xf32> to vector<8x16x128xf32>
    %19 = arith.mulf %16, %18 : vector<8x16x128xf32>
    %20 = arith.addf %13, %19 : vector<8x16x128xf32>
    %c2 = arith.constant 2 : index
    %c0_19 = arith.constant 0 : index
    %c0_20 = arith.constant 0 : index
    %c0_21 = arith.constant 0 : index
    %21 = vector.load %arg2[%c2, %c0_19, %c0_20, %c0_21] : memref<3x3x3x128xf32, #tpu.memory_space<vmem>>, vector<1x1x1x128xf32>
    %22 = vector.shape_cast %21 : vector<1x1x1x128xf32> to vector<128xf32>
    %23 = vector.extract_strided_slice %6 {offsets = [4, 0, 0], sizes = [8, 16, 128], strides = [1, 1, 1]} : vector<12x16x128xf32> to vector<8x16x128xf32>
    %24 = vector.shape_cast %22 : vector<128xf32> to vector<1x1x128xf32>
    %25 = vector.broadcast %24 : vector<1x1x128xf32> to vector<8x16x128xf32>
    %26 = arith.mulf %23, %25 : vector<8x16x128xf32>
    %27 = arith.addf %20, %26 : vector<8x16x128xf32>
    %c0_22 = arith.constant 0 : index
    %c0_23 = arith.constant 0 : index
    %c4_24 = arith.constant 4 : index
    %28 = vector.load %arg8[%c0_22, %c0_23, %c4_24] : memref<12x18x136xf32, #tpu.memory_space<vmem>>, vector<12x16x128xf32>
    %c0_25 = arith.constant 0 : index
    %c0_26 = arith.constant 0 : index
    %c1_27 = arith.constant 1 : index
    %c0_28 = arith.constant 0 : index
    %29 = vector.load %arg2[%c0_25, %c0_26, %c1_27, %c0_28] : memref<3x3x3x128xf32, #tpu.memory_space<vmem>>, vector<1x1x1x128xf32>
    %30 = vector.shape_cast %29 : vector<1x1x1x128xf32> to vector<128xf32>
    %31 = vector.extract_strided_slice %28 {offsets = [0, 0, 0], sizes = [8, 16, 128], strides = [1, 1, 1]} : vector<12x16x128xf32> to vector<8x16x128xf32>
    %32 = vector.shape_cast %30 : vector<128xf32> to vector<1x1x128xf32>
    %33 = vector.broadcast %32 : vector<1x1x128xf32> to vector<8x16x128xf32>
    %34 = arith.mulf %31, %33 : vector<8x16x128xf32>
    %35 = arith.addf %27, %34 : vector<8x16x128xf32>
    %c1_29 = arith.constant 1 : index
    %c0_30 = arith.constant 0 : index
    %c1_31 = arith.constant 1 : index
    %c0_32 = arith.constant 0 : index
    %36 = vector.load %arg2[%c1_29, %c0_30, %c1_31, %c0_32] : memref<3x3x3x128xf32, #tpu.memory_space<vmem>>, vector<1x1x1x128xf32>
    %37 = vector.shape_cast %36 : vector<1x1x1x128xf32> to vector<128xf32>
    %38 = vector.extract_strided_slice %28 {offsets = [2, 0, 0], sizes = [8, 16, 128], strides = [1, 1, 1]} : vector<12x16x128xf32> to vector<8x16x128xf32>
    %39 = vector.shape_cast %37 : vector<128xf32> to vector<1x1x128xf32>
    %40 = vector.broadcast %39 : vector<1x1x128xf32> to vector<8x16x128xf32>
    %41 = arith.mulf %38, %40 : vector<8x16x128xf32>
    %42 = arith.addf %35, %41 : vector<8x16x128xf32>
    %c2_33 = arith.constant 2 : index
    %c0_34 = arith.constant 0 : index
    %c1_35 = arith.constant 1 : index
    %c0_36 = arith.constant 0 : index
    %43 = vector.load %arg2[%c2_33, %c0_34, %c1_35, %c0_36] : memref<3x3x3x128xf32, #tpu.memory_space<vmem>>, vector<1x1x1x128xf32>
    %44 = vector.shape_cast %43 : vector<1x1x1x128xf32> to vector<128xf32>
    %45 = vector.extract_strided_slice %28 {offsets = [4, 0, 0], sizes = [8, 16, 128], strides = [1, 1, 1]} : vector<12x16x128xf32> to vector<8x16x128xf32>
    %46 = vector.shape_cast %44 : vector<128xf32> to vector<1x1x128xf32>
    %47 = vector.broadcast %46 : vector<1x1x128xf32> to vector<8x16x128xf32>
    %48 = arith.mulf %45, %47 : vector<8x16x128xf32>
    %49 = arith.addf %42, %48 : vector<8x16x128xf32>
    %c0_37 = arith.constant 0 : index
    %c0_38 = arith.constant 0 : index
    %c8 = arith.constant 8 : index
    %50 = vector.load %arg8[%c0_37, %c0_38, %c8] : memref<12x18x136xf32, #tpu.memory_space<vmem>>, vector<12x16x128xf32>
    %c0_39 = arith.constant 0 : index
    %c0_40 = arith.constant 0 : index
    %c2_41 = arith.constant 2 : index
    %c0_42 = arith.constant 0 : index
    %51 = vector.load %arg2[%c0_39, %c0_40, %c2_41, %c0_42] : memref<3x3x3x128xf32, #tpu.memory_space<vmem>>, vector<1x1x1x128xf32>
    %52 = vector.shape_cast %51 : vector<1x1x1x128xf32> to vector<128xf32>
    %53 = vector.extract_strided_slice %50 {offsets = [0, 0, 0], sizes = [8, 16, 128], strides = [1, 1, 1]} : vector<12x16x128xf32> to vector<8x16x128xf32>
    %54 = vector.shape_cast %52 : vector<128xf32> to vector<1x1x128xf32>
    %55 = vector.broadcast %54 : vector<1x1x128xf32> to vector<8x16x128xf32>
    %56 = arith.mulf %53, %55 : vector<8x16x128xf32>
    %57 = arith.addf %49, %56 : vector<8x16x128xf32>
    %c1_43 = arith.constant 1 : index
    %c0_44 = arith.constant 0 : index
    %c2_45 = arith.constant 2 : index
    %c0_46 = arith.constant 0 : index
    %58 = vector.load %arg2[%c1_43, %c0_44, %c2_45, %c0_46] : memref<3x3x3x128xf32, #tpu.memory_space<vmem>>, vector<1x1x1x128xf32>
    %59 = vector.shape_cast %58 : vector<1x1x1x128xf32> to vector<128xf32>
    %60 = vector.extract_strided_slice %50 {offsets = [2, 0, 0], sizes = [8, 16, 128], strides = [1, 1, 1]} : vector<12x16x128xf32> to vector<8x16x128xf32>
    %61 = vector.shape_cast %59 : vector<128xf32> to vector<1x1x128xf32>
    %62 = vector.broadcast %61 : vector<1x1x128xf32> to vector<8x16x128xf32>
    %63 = arith.mulf %60, %62 : vector<8x16x128xf32>
    %64 = arith.addf %57, %63 : vector<8x16x128xf32>
    %c2_47 = arith.constant 2 : index
    %c0_48 = arith.constant 0 : index
    %c2_49 = arith.constant 2 : index
    %c0_50 = arith.constant 0 : index
    %65 = vector.load %arg2[%c2_47, %c0_48, %c2_49, %c0_50] : memref<3x3x3x128xf32, #tpu.memory_space<vmem>>, vector<1x1x1x128xf32>
    %66 = vector.shape_cast %65 : vector<1x1x1x128xf32> to vector<128xf32>
    %67 = vector.extract_strided_slice %50 {offsets = [4, 0, 0], sizes = [8, 16, 128], strides = [1, 1, 1]} : vector<12x16x128xf32> to vector<8x16x128xf32>
    %68 = vector.shape_cast %66 : vector<128xf32> to vector<1x1x128xf32>
    %69 = vector.broadcast %68 : vector<1x1x128xf32> to vector<8x16x128xf32>
    %70 = arith.mulf %67, %69 : vector<8x16x128xf32>
    %71 = arith.addf %64, %70 : vector<8x16x128xf32>
    %c0_51 = arith.constant 0 : index
    %c1_52 = arith.constant 1 : index
    %c0_53 = arith.constant 0 : index
    %72 = vector.load %arg8[%c0_51, %c1_52, %c0_53] : memref<12x18x136xf32, #tpu.memory_space<vmem>>, vector<12x16x128xf32>
    %c0_54 = arith.constant 0 : index
    %c1_55 = arith.constant 1 : index
    %c0_56 = arith.constant 0 : index
    %c0_57 = arith.constant 0 : index
    %73 = vector.load %arg2[%c0_54, %c1_55, %c0_56, %c0_57] : memref<3x3x3x128xf32, #tpu.memory_space<vmem>>, vector<1x1x1x128xf32>
    %74 = vector.shape_cast %73 : vector<1x1x1x128xf32> to vector<128xf32>
    %75 = vector.extract_strided_slice %72 {offsets = [0, 0, 0], sizes = [8, 16, 128], strides = [1, 1, 1]} : vector<12x16x128xf32> to vector<8x16x128xf32>
    %76 = vector.shape_cast %74 : vector<128xf32> to vector<1x1x128xf32>
    %77 = vector.broadcast %76 : vector<1x1x128xf32> to vector<8x16x128xf32>
    %78 = arith.mulf %75, %77 : vector<8x16x128xf32>
    %79 = arith.addf %71, %78 : vector<8x16x128xf32>
    %c1_58 = arith.constant 1 : index
    %c1_59 = arith.constant 1 : index
    %c0_60 = arith.constant 0 : index
    %c0_61 = arith.constant 0 : index
    %80 = vector.load %arg2[%c1_58, %c1_59, %c0_60, %c0_61] : memref<3x3x3x128xf32, #tpu.memory_space<vmem>>, vector<1x1x1x128xf32>
    %81 = vector.shape_cast %80 : vector<1x1x1x128xf32> to vector<128xf32>
    %82 = vector.extract_strided_slice %72 {offsets = [2, 0, 0], sizes = [8, 16, 128], strides = [1, 1, 1]} : vector<12x16x128xf32> to vector<8x16x128xf32>
    %83 = vector.shape_cast %81 : vector<128xf32> to vector<1x1x128xf32>
    %84 = vector.broadcast %83 : vector<1x1x128xf32> to vector<8x16x128xf32>
    %85 = arith.mulf %82, %84 : vector<8x16x128xf32>
    %86 = arith.addf %79, %85 : vector<8x16x128xf32>
    %c2_62 = arith.constant 2 : index
    %c1_63 = arith.constant 1 : index
    %c0_64 = arith.constant 0 : index
    %c0_65 = arith.constant 0 : index
    %87 = vector.load %arg2[%c2_62, %c1_63, %c0_64, %c0_65] : memref<3x3x3x128xf32, #tpu.memory_space<vmem>>, vector<1x1x1x128xf32>
    %88 = vector.shape_cast %87 : vector<1x1x1x128xf32> to vector<128xf32>
    %89 = vector.extract_strided_slice %72 {offsets = [4, 0, 0], sizes = [8, 16, 128], strides = [1, 1, 1]} : vector<12x16x128xf32> to vector<8x16x128xf32>
    %90 = vector.shape_cast %88 : vector<128xf32> to vector<1x1x128xf32>
    %91 = vector.broadcast %90 : vector<1x1x128xf32> to vector<8x16x128xf32>
    %92 = arith.mulf %89, %91 : vector<8x16x128xf32>
    %93 = arith.addf %86, %92 : vector<8x16x128xf32>
    %c0_66 = arith.constant 0 : index
    %c1_67 = arith.constant 1 : index
    %c4_68 = arith.constant 4 : index
    %94 = vector.load %arg8[%c0_66, %c1_67, %c4_68] : memref<12x18x136xf32, #tpu.memory_space<vmem>>, vector<12x16x128xf32>
    %c0_69 = arith.constant 0 : index
    %c1_70 = arith.constant 1 : index
    %c1_71 = arith.constant 1 : index
    %c0_72 = arith.constant 0 : index
    %95 = vector.load %arg2[%c0_69, %c1_70, %c1_71, %c0_72] : memref<3x3x3x128xf32, #tpu.memory_space<vmem>>, vector<1x1x1x128xf32>
    %96 = vector.shape_cast %95 : vector<1x1x1x128xf32> to vector<128xf32>
    %97 = vector.extract_strided_slice %94 {offsets = [0, 0, 0], sizes = [8, 16, 128], strides = [1, 1, 1]} : vector<12x16x128xf32> to vector<8x16x128xf32>
    %98 = vector.shape_cast %96 : vector<128xf32> to vector<1x1x128xf32>
    %99 = vector.broadcast %98 : vector<1x1x128xf32> to vector<8x16x128xf32>
    %100 = arith.mulf %97, %99 : vector<8x16x128xf32>
    %101 = arith.addf %93, %100 : vector<8x16x128xf32>
    %c1_73 = arith.constant 1 : index
    %c1_74 = arith.constant 1 : index
    %c1_75 = arith.constant 1 : index
    %c0_76 = arith.constant 0 : index
    %102 = vector.load %arg2[%c1_73, %c1_74, %c1_75, %c0_76] : memref<3x3x3x128xf32, #tpu.memory_space<vmem>>, vector<1x1x1x128xf32>
    %103 = vector.shape_cast %102 : vector<1x1x1x128xf32> to vector<128xf32>
    %104 = vector.extract_strided_slice %94 {offsets = [2, 0, 0], sizes = [8, 16, 128], strides = [1, 1, 1]} : vector<12x16x128xf32> to vector<8x16x128xf32>
    %105 = vector.shape_cast %103 : vector<128xf32> to vector<1x1x128xf32>
    %106 = vector.broadcast %105 : vector<1x1x128xf32> to vector<8x16x128xf32>
    %107 = arith.mulf %104, %106 : vector<8x16x128xf32>
    %108 = arith.addf %101, %107 : vector<8x16x128xf32>
    %c2_77 = arith.constant 2 : index
    %c1_78 = arith.constant 1 : index
    %c1_79 = arith.constant 1 : index
    %c0_80 = arith.constant 0 : index
    %109 = vector.load %arg2[%c2_77, %c1_78, %c1_79, %c0_80] : memref<3x3x3x128xf32, #tpu.memory_space<vmem>>, vector<1x1x1x128xf32>
    %110 = vector.shape_cast %109 : vector<1x1x1x128xf32> to vector<128xf32>
    %111 = vector.extract_strided_slice %94 {offsets = [4, 0, 0], sizes = [8, 16, 128], strides = [1, 1, 1]} : vector<12x16x128xf32> to vector<8x16x128xf32>
    %112 = vector.shape_cast %110 : vector<128xf32> to vector<1x1x128xf32>
    %113 = vector.broadcast %112 : vector<1x1x128xf32> to vector<8x16x128xf32>
    %114 = arith.mulf %111, %113 : vector<8x16x128xf32>
    %115 = arith.addf %108, %114 : vector<8x16x128xf32>
    %c0_81 = arith.constant 0 : index
    %c1_82 = arith.constant 1 : index
    %c8_83 = arith.constant 8 : index
    %116 = vector.load %arg8[%c0_81, %c1_82, %c8_83] : memref<12x18x136xf32, #tpu.memory_space<vmem>>, vector<12x16x128xf32>
    %c0_84 = arith.constant 0 : index
    %c1_85 = arith.constant 1 : index
    %c2_86 = arith.constant 2 : index
    %c0_87 = arith.constant 0 : index
    %117 = vector.load %arg2[%c0_84, %c1_85, %c2_86, %c0_87] : memref<3x3x3x128xf32, #tpu.memory_space<vmem>>, vector<1x1x1x128xf32>
    %118 = vector.shape_cast %117 : vector<1x1x1x128xf32> to vector<128xf32>
    %119 = vector.extract_strided_slice %116 {offsets = [0, 0, 0], sizes = [8, 16, 128], strides = [1, 1, 1]} : vector<12x16x128xf32> to vector<8x16x128xf32>
    %120 = vector.shape_cast %118 : vector<128xf32> to vector<1x1x128xf32>
    %121 = vector.broadcast %120 : vector<1x1x128xf32> to vector<8x16x128xf32>
    %122 = arith.mulf %119, %121 : vector<8x16x128xf32>
    %123 = arith.addf %115, %122 : vector<8x16x128xf32>
    %c1_88 = arith.constant 1 : index
    %c1_89 = arith.constant 1 : index
    %c2_90 = arith.constant 2 : index
    %c0_91 = arith.constant 0 : index
    %124 = vector.load %arg2[%c1_88, %c1_89, %c2_90, %c0_91] : memref<3x3x3x128xf32, #tpu.memory_space<vmem>>, vector<1x1x1x128xf32>
    %125 = vector.shape_cast %124 : vector<1x1x1x128xf32> to vector<128xf32>
    %126 = vector.extract_strided_slice %116 {offsets = [2, 0, 0], sizes = [8, 16, 128], strides = [1, 1, 1]} : vector<12x16x128xf32> to vector<8x16x128xf32>
    %127 = vector.shape_cast %125 : vector<128xf32> to vector<1x1x128xf32>
    %128 = vector.broadcast %127 : vector<1x1x128xf32> to vector<8x16x128xf32>
    %129 = arith.mulf %126, %128 : vector<8x16x128xf32>
    %130 = arith.addf %123, %129 : vector<8x16x128xf32>
    %c2_92 = arith.constant 2 : index
    %c1_93 = arith.constant 1 : index
    %c2_94 = arith.constant 2 : index
    %c0_95 = arith.constant 0 : index
    %131 = vector.load %arg2[%c2_92, %c1_93, %c2_94, %c0_95] : memref<3x3x3x128xf32, #tpu.memory_space<vmem>>, vector<1x1x1x128xf32>
    %132 = vector.shape_cast %131 : vector<1x1x1x128xf32> to vector<128xf32>
    %133 = vector.extract_strided_slice %116 {offsets = [4, 0, 0], sizes = [8, 16, 128], strides = [1, 1, 1]} : vector<12x16x128xf32> to vector<8x16x128xf32>
    %134 = vector.shape_cast %132 : vector<128xf32> to vector<1x1x128xf32>
    %135 = vector.broadcast %134 : vector<1x1x128xf32> to vector<8x16x128xf32>
    %136 = arith.mulf %133, %135 : vector<8x16x128xf32>
    %137 = arith.addf %130, %136 : vector<8x16x128xf32>
    %c0_96 = arith.constant 0 : index
    %c2_97 = arith.constant 2 : index
    %c0_98 = arith.constant 0 : index
    %138 = vector.load %arg8[%c0_96, %c2_97, %c0_98] : memref<12x18x136xf32, #tpu.memory_space<vmem>>, vector<12x16x128xf32>
    %c0_99 = arith.constant 0 : index
    %c2_100 = arith.constant 2 : index
    %c0_101 = arith.constant 0 : index
    %c0_102 = arith.constant 0 : index
    %139 = vector.load %arg2[%c0_99, %c2_100, %c0_101, %c0_102] : memref<3x3x3x128xf32, #tpu.memory_space<vmem>>, vector<1x1x1x128xf32>
    %140 = vector.shape_cast %139 : vector<1x1x1x128xf32> to vector<128xf32>
    %141 = vector.extract_strided_slice %138 {offsets = [0, 0, 0], sizes = [8, 16, 128], strides = [1, 1, 1]} : vector<12x16x128xf32> to vector<8x16x128xf32>
    %142 = vector.shape_cast %140 : vector<128xf32> to vector<1x1x128xf32>
    %143 = vector.broadcast %142 : vector<1x1x128xf32> to vector<8x16x128xf32>
    %144 = arith.mulf %141, %143 : vector<8x16x128xf32>
    %145 = arith.addf %137, %144 : vector<8x16x128xf32>
    %c1_103 = arith.constant 1 : index
    %c2_104 = arith.constant 2 : index
    %c0_105 = arith.constant 0 : index
    %c0_106 = arith.constant 0 : index
    %146 = vector.load %arg2[%c1_103, %c2_104, %c0_105, %c0_106] : memref<3x3x3x128xf32, #tpu.memory_space<vmem>>, vector<1x1x1x128xf32>
    %147 = vector.shape_cast %146 : vector<1x1x1x128xf32> to vector<128xf32>
    %148 = vector.extract_strided_slice %138 {offsets = [2, 0, 0], sizes = [8, 16, 128], strides = [1, 1, 1]} : vector<12x16x128xf32> to vector<8x16x128xf32>
    %149 = vector.shape_cast %147 : vector<128xf32> to vector<1x1x128xf32>
    %150 = vector.broadcast %149 : vector<1x1x128xf32> to vector<8x16x128xf32>
    %151 = arith.mulf %148, %150 : vector<8x16x128xf32>
    %152 = arith.addf %145, %151 : vector<8x16x128xf32>
    %c2_107 = arith.constant 2 : index
    %c2_108 = arith.constant 2 : index
    %c0_109 = arith.constant 0 : index
    %c0_110 = arith.constant 0 : index
    %153 = vector.load %arg2[%c2_107, %c2_108, %c0_109, %c0_110] : memref<3x3x3x128xf32, #tpu.memory_space<vmem>>, vector<1x1x1x128xf32>
    %154 = vector.shape_cast %153 : vector<1x1x1x128xf32> to vector<128xf32>
    %155 = vector.extract_strided_slice %138 {offsets = [4, 0, 0], sizes = [8, 16, 128], strides = [1, 1, 1]} : vector<12x16x128xf32> to vector<8x16x128xf32>
    %156 = vector.shape_cast %154 : vector<128xf32> to vector<1x1x128xf32>
    %157 = vector.broadcast %156 : vector<1x1x128xf32> to vector<8x16x128xf32>
    %158 = arith.mulf %155, %157 : vector<8x16x128xf32>
    %159 = arith.addf %152, %158 : vector<8x16x128xf32>
    %c0_111 = arith.constant 0 : index
    %c2_112 = arith.constant 2 : index
    %c4_113 = arith.constant 4 : index
    %160 = vector.load %arg8[%c0_111, %c2_112, %c4_113] : memref<12x18x136xf32, #tpu.memory_space<vmem>>, vector<12x16x128xf32>
    %c0_114 = arith.constant 0 : index
    %c2_115 = arith.constant 2 : index
    %c1_116 = arith.constant 1 : index
    %c0_117 = arith.constant 0 : index
    %161 = vector.load %arg2[%c0_114, %c2_115, %c1_116, %c0_117] : memref<3x3x3x128xf32, #tpu.memory_space<vmem>>, vector<1x1x1x128xf32>
    %162 = vector.shape_cast %161 : vector<1x1x1x128xf32> to vector<128xf32>
    %163 = vector.extract_strided_slice %160 {offsets = [0, 0, 0], sizes = [8, 16, 128], strides = [1, 1, 1]} : vector<12x16x128xf32> to vector<8x16x128xf32>
    %164 = vector.shape_cast %162 : vector<128xf32> to vector<1x1x128xf32>
    %165 = vector.broadcast %164 : vector<1x1x128xf32> to vector<8x16x128xf32>
    %166 = arith.mulf %163, %165 : vector<8x16x128xf32>
    %167 = arith.addf %159, %166 : vector<8x16x128xf32>
    %c1_118 = arith.constant 1 : index
    %c2_119 = arith.constant 2 : index
    %c1_120 = arith.constant 1 : index
    %c0_121 = arith.constant 0 : index
    %168 = vector.load %arg2[%c1_118, %c2_119, %c1_120, %c0_121] : memref<3x3x3x128xf32, #tpu.memory_space<vmem>>, vector<1x1x1x128xf32>
    %169 = vector.shape_cast %168 : vector<1x1x1x128xf32> to vector<128xf32>
    %170 = vector.extract_strided_slice %160 {offsets = [2, 0, 0], sizes = [8, 16, 128], strides = [1, 1, 1]} : vector<12x16x128xf32> to vector<8x16x128xf32>
    %171 = vector.shape_cast %169 : vector<128xf32> to vector<1x1x128xf32>
    %172 = vector.broadcast %171 : vector<1x1x128xf32> to vector<8x16x128xf32>
    %173 = arith.mulf %170, %172 : vector<8x16x128xf32>
    %174 = arith.addf %167, %173 : vector<8x16x128xf32>
    %c2_122 = arith.constant 2 : index
    %c2_123 = arith.constant 2 : index
    %c1_124 = arith.constant 1 : index
    %c0_125 = arith.constant 0 : index
    %175 = vector.load %arg2[%c2_122, %c2_123, %c1_124, %c0_125] : memref<3x3x3x128xf32, #tpu.memory_space<vmem>>, vector<1x1x1x128xf32>
    %176 = vector.shape_cast %175 : vector<1x1x1x128xf32> to vector<128xf32>
    %177 = vector.extract_strided_slice %160 {offsets = [4, 0, 0], sizes = [8, 16, 128], strides = [1, 1, 1]} : vector<12x16x128xf32> to vector<8x16x128xf32>
    %178 = vector.shape_cast %176 : vector<128xf32> to vector<1x1x128xf32>
    %179 = vector.broadcast %178 : vector<1x1x128xf32> to vector<8x16x128xf32>
    %180 = arith.mulf %177, %179 : vector<8x16x128xf32>
    %181 = arith.addf %174, %180 : vector<8x16x128xf32>
    %c0_126 = arith.constant 0 : index
    %c2_127 = arith.constant 2 : index
    %c8_128 = arith.constant 8 : index
    %182 = vector.load %arg8[%c0_126, %c2_127, %c8_128] : memref<12x18x136xf32, #tpu.memory_space<vmem>>, vector<12x16x128xf32>
    %c0_129 = arith.constant 0 : index
    %c2_130 = arith.constant 2 : index
    %c2_131 = arith.constant 2 : index
    %c0_132 = arith.constant 0 : index
    %183 = vector.load %arg2[%c0_129, %c2_130, %c2_131, %c0_132] : memref<3x3x3x128xf32, #tpu.memory_space<vmem>>, vector<1x1x1x128xf32>
    %184 = vector.shape_cast %183 : vector<1x1x1x128xf32> to vector<128xf32>
    %185 = vector.extract_strided_slice %182 {offsets = [0, 0, 0], sizes = [8, 16, 128], strides = [1, 1, 1]} : vector<12x16x128xf32> to vector<8x16x128xf32>
    %186 = vector.shape_cast %184 : vector<128xf32> to vector<1x1x128xf32>
    %187 = vector.broadcast %186 : vector<1x1x128xf32> to vector<8x16x128xf32>
    %188 = arith.mulf %185, %187 : vector<8x16x128xf32>
    %189 = arith.addf %181, %188 : vector<8x16x128xf32>
    %c1_133 = arith.constant 1 : index
    %c2_134 = arith.constant 2 : index
    %c2_135 = arith.constant 2 : index
    %c0_136 = arith.constant 0 : index
    %190 = vector.load %arg2[%c1_133, %c2_134, %c2_135, %c0_136] : memref<3x3x3x128xf32, #tpu.memory_space<vmem>>, vector<1x1x1x128xf32>
    %191 = vector.shape_cast %190 : vector<1x1x1x128xf32> to vector<128xf32>
    %192 = vector.extract_strided_slice %182 {offsets = [2, 0, 0], sizes = [8, 16, 128], strides = [1, 1, 1]} : vector<12x16x128xf32> to vector<8x16x128xf32>
    %193 = vector.shape_cast %191 : vector<128xf32> to vector<1x1x128xf32>
    %194 = vector.broadcast %193 : vector<1x1x128xf32> to vector<8x16x128xf32>
    %195 = arith.mulf %192, %194 : vector<8x16x128xf32>
    %196 = arith.addf %189, %195 : vector<8x16x128xf32>
    %c2_137 = arith.constant 2 : index
    %c2_138 = arith.constant 2 : index
    %c2_139 = arith.constant 2 : index
    %c0_140 = arith.constant 0 : index
    %197 = vector.load %arg2[%c2_137, %c2_138, %c2_139, %c0_140] : memref<3x3x3x128xf32, #tpu.memory_space<vmem>>, vector<1x1x1x128xf32>
    %198 = vector.shape_cast %197 : vector<1x1x1x128xf32> to vector<128xf32>
    %199 = vector.extract_strided_slice %182 {offsets = [4, 0, 0], sizes = [8, 16, 128], strides = [1, 1, 1]} : vector<12x16x128xf32> to vector<8x16x128xf32>
    %200 = vector.shape_cast %198 : vector<128xf32> to vector<1x1x128xf32>
    %201 = vector.broadcast %200 : vector<1x1x128xf32> to vector<8x16x128xf32>
    %202 = arith.mulf %199, %201 : vector<8x16x128xf32>
    %203 = arith.addf %196, %202 : vector<8x16x128xf32>
    %c0_141 = arith.constant 0 : index
    %c0_142 = arith.constant 0 : index
    %204 = vector.load %arg3[%c0_141, %c0_142] : memref<1x128xf32, #tpu.memory_space<vmem>>, vector<1x128xf32>
    %205 = vector.shape_cast %204 : vector<1x128xf32> to vector<128xf32>
    %206 = vector.shape_cast %205 : vector<128xf32> to vector<1x1x128xf32>
    %207 = vector.broadcast %206 : vector<1x1x128xf32> to vector<8x16x128xf32>
    %208 = arith.mulf %203, %207 : vector<8x16x128xf32>
    %c0_143 = arith.constant 0 : index
    %c0_144 = arith.constant 0 : index
    %209 = vector.load %arg4[%c0_143, %c0_144] : memref<1x128xf32, #tpu.memory_space<vmem>>, vector<1x128xf32>
    %210 = vector.shape_cast %209 : vector<1x128xf32> to vector<128xf32>
    %211 = vector.shape_cast %210 : vector<128xf32> to vector<1x1x128xf32>
    %212 = vector.broadcast %211 : vector<1x1x128xf32> to vector<8x16x128xf32>
    %213 = arith.addf %208, %212 : vector<8x16x128xf32>
    %cst_145 = arith.constant 0.000000e+00 : f32
    %214 = vector.broadcast %cst_145 : f32 to vector<8x16x128xf32>
    %215 = arith.maximumf %213, %214 : vector<8x16x128xf32>
    %216 = vector.shape_cast %215 : vector<8x16x128xf32> to vector<128x128xf32>
    %c0_146 = arith.constant 0 : index
    %c0_147 = arith.constant 0 : index
    %217 = vector.load %arg5[%c0_146, %c0_147] : memref<128x128xf32, #tpu.memory_space<vmem>>, vector<128x128xf32>
    %cst_148 = arith.constant dense<0.000000e+00> : vector<128x128xf32>
    %218 = tpu.matmul %216, %217, %cst_148 {dimension_numbers = #tpu.dot_dimension_numbers<[1], [0], [0], [1], [0, 0, 1, 1], [], []>} : vector<128x128xf32>, vector<128x128xf32>, vector<128x128xf32> -> vector<128x128xf32>
    %c0_149 = arith.constant 0 : index
    %c0_150 = arith.constant 0 : index
    %219 = vector.load %arg6[%c0_149, %c0_150] : memref<1x128xf32, #tpu.memory_space<vmem>>, vector<1x128xf32>
    %220 = vector.shape_cast %219 : vector<1x128xf32> to vector<128xf32>
    %221 = vector.shape_cast %220 : vector<128xf32> to vector<1x128xf32>
    %222 = vector.broadcast %221 : vector<1x128xf32> to vector<128x128xf32>
    %223 = arith.addf %218, %222 : vector<128x128xf32>
    %224 = vector.shape_cast %223 : vector<128x128xf32> to vector<8x16x128xf32>
    %225 = arith.addf %1, %224 : vector<8x16x128xf32>
    %c0_151 = arith.constant 0 : index
    %c0_152 = arith.constant 0 : index
    %c0_153 = arith.constant 0 : index
    %c0_154 = arith.constant 0 : index
    %226 = vector.load %arg7[%c0_151, %c0_152, %c0_153, %c0_154] : memref<1x8x16x128xf32, #tpu.memory_space<vmem>>, vector<1x8x16x128xf32>
    %227 = vector.shape_cast %226 : vector<1x8x16x128xf32> to vector<8x16x128xf32>
    %228 = vector.shape_cast %225 : vector<8x16x128xf32> to vector<1x8x16x128xf32>
    tpu.vector_store %arg7[%c0_151, %c0_152, %c0_153, %c0_154], %228 {strides = array<i32>} : memref<1x8x16x128xf32, #tpu.memory_space<vmem>>, vector<1x8x16x128xf32>,
    return
  }
  func.func @transform_0(%arg0: i32) -> (i32, i32, i32, i32) {
    %c0_i32 = arith.constant 0 : i32
    %c0_i32_0 = arith.constant 0 : i32
    %c0_i32_1 = arith.constant 0 : i32
    %c0_i32_2 = arith.constant 0 : i32
    return %arg0, %c0_i32, %c0_i32_0, %c0_i32_1 : i32, i32, i32, i32
  }
  func.func @transform_1(%arg0: i32) -> (i32, i32, i32, i32) {
    %c0_i32 = arith.constant 0 : i32
    %c0_i32_0 = arith.constant 0 : i32
    %c0_i32_1 = arith.constant 0 : i32
    %c0_i32_2 = arith.constant 0 : i32
    %c0_i32_3 = arith.constant 0 : i32
    return %c0_i32, %c0_i32_0, %c0_i32_1, %c0_i32_2 : i32, i32, i32, i32
  }
  func.func @transform_2(%arg0: i32) -> (i32, i32) {
    %c0_i32 = arith.constant 0 : i32
    %c0_i32_0 = arith.constant 0 : i32
    %c0_i32_1 = arith.constant 0 : i32
    return %c0_i32, %c0_i32_0 : i32, i32
  }
  func.func @transform_3(%arg0: i32) -> (i32, i32) {
    %c0_i32 = arith.constant 0 : i32
    %c0_i32_0 = arith.constant 0 : i32
    %c0_i32_1 = arith.constant 0 : i32
    return %c0_i32, %c0_i32_0 : i32, i32
  }
  func.func @transform_4(%arg0: i32) -> (i32, i32) {
    %c0_i32 = arith.constant 0 : i32
    %c0_i32_0 = arith.constant 0 : i32
    %c0_i32_1 = arith.constant 0 : i32
    return %c0_i32, %c0_i32_0 : i32, i32
  }
  func.func @transform_5(%arg0: i32) -> (i32, i32) {
    %c0_i32 = arith.constant 0 : i32
    %c0_i32_0 = arith.constant 0 : i32
    %c0_i32_1 = arith.constant 0 : i32
    return %c0_i32, %c0_i32_0 : i32, i32
  }
  func.func @transform_6(%arg0: i32) -> (i32, i32, i32, i32) {
    %c0_i32 = arith.constant 0 : i32
    %c0_i32_0 = arith.constant 0 : i32
    %c0_i32_1 = arith.constant 0 : i32
    %c0_i32_2 = arith.constant 0 : i32
    return %arg0, %c0_i32, %c0_i32_0, %c0_i32_1 : i32, i32, i32, i32
  }
}

</mosaic_0001>

<llo_original>
// kernel: tpu_custom_call.1
$region0: #{tpu_custom_call.1}
  #allocation0 [shape = 'u32[]', space=smem, size = 0x4, offset = 0x4, fixed_abs, tag = 'smem constant byte address 0x4 - core index']
  #allocation1 [shape = 'u32[72,128]{1,0:T(1,128)}', space=vmem, size = 0x9000, scoped, tag = 'internal scratch']
  #allocation2 [shape = 'f32[12,18,136]{2,1,0:T(8,128)}', space=vmem, size = 0x48000, scoped, tag = 'scratch operand']
  %s0 = inlined_call_operand.hbm [shape: f32[2,8,16,128], index: 0, kind: input, shape index: {}, may-alias: {0,6}]
  %s1 = inlined_call_operand.vmem [shape: f32[3,3,3,128], index: 1, kind: input, shape index: {}]
  %s2 = inlined_call_operand.vmem [shape: f32[1,128], index: 2, kind: input, shape index: {}]
  %s3 = inlined_call_operand.vmem [shape: f32[1,128], index: 3, kind: input, shape index: {}]
  %s4 = inlined_call_operand.vmem [shape: f32[128,128], index: 4, kind: input, shape index: {}]
  %s5 = inlined_call_operand.vmem [shape: f32[1,128], index: 5, kind: input, shape index: {}]
  %s6 = inlined_call_operand.hbm [shape: f32[2,8,16,128], index: 6, kind: output, shape index: {}, may-alias: {0,6}]
  %s7 = sld [smem:[#allocation0]]
  $region61: #{tpu_custom_call.1} parent=0
    _
  %s9 = ssub.s32 1, %s7
  %s10 = scalar_select 0, %s9, %s7
  $region1: #{tpu_custom_call.1} parent=0
    #allocation3 [shape = 'u8[131072]{0}', space=vmem, size = 0x20000, scoped, tag = 'input window, operand 0']
    #allocation4 [shape = 's32[2]{0}', space=sflag, size = 0x8, scoped, tag = 'scoped memory for tpu_custom_call.1']
    #allocation5 [shape = 's32[2]{0}', space=sflag, size = 0x8, scoped, tag = 'scoped memory for tpu_custom_call.1']
    #allocation6 [shape = 'u8[131072]{0}', space=vmem, size = 0x20000, scoped, tag = 'output window, operand 0']
    %11 = vsyncpa [#allocation4], 0
    %s12 = scalar_lea.sflag [#allocation4], 1
    %13 = vsyncpa %s12, 0
    %14 = vsyncpa [#allocation5], 0
    %s15 = scalar_lea.sflag [#allocation5], 1
    %16 = vsyncpa %s15, 0
    loop: start=0, step=1, limit=4
    $region2: #{tpu_custom_call.1} parent=1 // loop_pre_header
      _
    $region3: #{tpu_custom_call.1} parent=1 // loop_header
      %s18 = sphi 0, %s22
      %p19 = scmp.ge.s32.totalorder %s18, 4
      %s28 = sphi 0, %s30
      %s31 = sphi 0, %s28
      %s32 = sphi 0, %s31
      %s48 = sphi 0, %s32
      %s52 = sphi 0, %s52
      %s54 = sphi 0, %s52
      %s55 = sphi 0, %s54
      %s69 = sphi 0, %s55
      %s73 = sphi 0, %s73
      %s75 = sphi 0, %s73
      %s76 = sphi 0, %s75
      %s90 = sphi 0, %s76
      %s94 = sphi 0, %s94
      %s96 = sphi 0, %s94
      %s97 = sphi 0, %s96
      %s111 = sphi 0, %s97
      %s115 = sphi 0, %s115
      %s117 = sphi 0, %s115
      %s118 = sphi 0, %s117
      %s132 = sphi 0, %s118
      %s136 = sphi 0, %s136
      %s138 = sphi 0, %s136
      %s139 = sphi 0, %s138
      %s153 = sphi 0, %s139
      %s159 = sphi 0, %s161
      %s162 = sphi 0, %s159
      %s163 = sphi 0, %s162
      %s179 = sphi 0, %s163
    $region4: #{tpu_custom_call.1} parent=1 // loop_header_branch
      %21 = sbr.rel (%p19) target = $region8
    $region5: #{tpu_custom_call.1} parent=1 // loop_body
      %s23 = ssub.s32 %s18, 1
      %s24 = ssub.s32 %s18, 2
      %s25 = sadd.s32 %s18, 1
      %s26 = ssub.s32 %s18, %s25
      %p27 = scmp.eq.s32.totalorder %s26, 0
      %s29 = sadd.s32 %s28, 1
      %s30 = scalar_select %p27, %s28, %s29
      %p33 = pneg %p27
      %p34 = scmp.eq.s32.totalorder %s18, 1
      %p35 = por %p33, %p34
      %p36 = scmp.ne.s32.totalorder %s28, %s31
      %p37 = scmp.eq.s32.totalorder %s18, 0
      %p38 = por %p36, %p37
      %p39 = scmp.ne.s32.totalorder %s28, %s31
      %p40 = scmp.eq.s32.totalorder %s23, 1
      %p41 = por %p39, %p40
      %p42 = scmp.ne.s32.totalorder %s31, %s32
      %p43 = scmp.eq.s32.totalorder %s23, 0
      %p44 = por %p42, %p43
      %p45 = scmp.ne.s32.totalorder %s31, %s32
      %p46 = scmp.eq.s32.totalorder %s24, 1
      %p47 = por %p45, %p46
      %p49 = scmp.ne.s32.totalorder %s32, %s48
      %p50 = scmp.eq.s32.totalorder %s24, 0
      %p51 = por %p49, %p50
      %s53 = sadd.s32 %s52, 1
      %p56 = scmp.eq.s32.totalorder %s18, 1
      %p57 = scmp.ne.s32.totalorder %s52, %s54
      %p58 = scmp.eq.s32.totalorder %s18, 0
      %p59 = por %p57, %p58
      %p60 = scmp.ne.s32.totalorder %s52, %s54
      %p61 = scmp.eq.s32.totalorder %s23, 1
      %p62 = por %p60, %p61
      %p63 = scmp.ne.s32.totalorder %s54, %s55
      %p64 = scmp.eq.s32.totalorder %s23, 0
      %p65 = por %p63, %p64
      %p66 = scmp.ne.s32.totalorder %s54, %s55
      %p67 = scmp.eq.s32.totalorder %s24, 1
      %p68 = por %p66, %p67
      %p70 = scmp.ne.s32.totalorder %s55, %s69
      %p71 = scmp.eq.s32.totalorder %s24, 0
      %p72 = por %p70, %p71
      %s74 = sadd.s32 %s73, 1
      %p77 = scmp.eq.s32.totalorder %s18, 1
      %p78 = scmp.ne.s32.totalorder %s73, %s75
      %p79 = scmp.eq.s32.totalorder %s18, 0
      %p80 = por %p78, %p79
      %p81 = scmp.ne.s32.totalorder %s73, %s75
      %p82 = scmp.eq.s32.totalorder %s23, 1
      %p83 = por %p81, %p82
      %p84 = scmp.ne.s32.totalorder %s75, %s76
      %p85 = scmp.eq.s32.totalorder %s23, 0
      %p86 = por %p84, %p85
      %p87 = scmp.ne.s32.totalorder %s75, %s76
      %p88 = scmp.eq.s32.totalorder %s24, 1
      %p89 = por %p87, %p88
      %p91 = scmp.ne.s32.totalorder %s76, %s90
      %p92 = scmp.eq.s32.totalorder %s24, 0
      %p93 = por %p91, %p92
      %s95 = sadd.s32 %s94, 1
      %p98 = scmp.eq.s32.totalorder %s18, 1
      %p99 = scmp.ne.s32.totalorder %s94, %s96
      %p100 = scmp.eq.s32.totalorder %s18, 0
      %p101 = por %p99, %p100
      %p102 = scmp.ne.s32.totalorder %s94, %s96
      %p103 = scmp.eq.s32.totalorder %s23, 1
      %p104 = por %p102, %p103
      %p105 = scmp.ne.s32.totalorder %s96, %s97
      %p106 = scmp.eq.s32.totalorder %s23, 0
      %p107 = por %p105, %p106
      %p108 = scmp.ne.s32.totalorder %s96, %s97
      %p109 = scmp.eq.s32.totalorder %s24, 1
      %p110 = por %p108, %p109
      %p112 = scmp.ne.s32.totalorder %s97, %s111
      %p113 = scmp.eq.s32.totalorder %s24, 0
      %p114 = por %p112, %p113
      %s116 = sadd.s32 %s115, 1
      %p119 = scmp.eq.s32.totalorder %s18, 1
      %p120 = scmp.ne.s32.totalorder %s115, %s117
      %p121 = scmp.eq.s32.totalorder %s18, 0
      %p122 = por %p120, %p121
      %p123 = scmp.ne.s32.totalorder %s115, %s117
      %p124 = scmp.eq.s32.totalorder %s23, 1
      %p125 = por %p123, %p124
      %p126 = scmp.ne.s32.totalorder %s117, %s118
      %p127 = scmp.eq.s32.totalorder %s23, 0
      %p128 = por %p126, %p127
      %p129 = scmp.ne.s32.totalorder %s117, %s118
      %p130 = scmp.eq.s32.totalorder %s24, 1
      %p131 = por %p129, %p130
      %p133 = scmp.ne.s32.totalorder %s118, %s132
      %p134 = scmp.eq.s32.totalorder %s24, 0
      %p135 = por %p133, %p134
      %s137 = sadd.s32 %s136, 1
      %p140 = scmp.eq.s32.totalorder %s18, 1
      %p141 = scmp.ne.s32.totalorder %s136, %s138
      %p142 = scmp.eq.s32.totalorder %s18, 0
      %p143 = por %p141, %p142
      %p144 = scmp.ne.s32.totalorder %s136, %s138
      %p145 = scmp.eq.s32.totalorder %s23, 1
      %p146 = por %p144, %p145
      %p147 = scmp.ne.s32.totalorder %s138, %s139
      %p148 = scmp.eq.s32.totalorder %s23, 0
      %p149 = por %p147, %p148
      %p150 = scmp.ne.s32.totalorder %s138, %s139
      %p151 = scmp.eq.s32.totalorder %s24, 1
      %p152 = por %p150, %p151
      %p154 = scmp.ne.s32.totalorder %s139, %s153
      %p155 = scmp.eq.s32.totalorder %s24, 0
      %p156 = por %p154, %p155
      %s157 = ssub.s32 %s18, %s25
      %p158 = scmp.eq.s32.totalorder %s157, 0
      %s160 = sadd.s32 %s159, 1
      %s161 = scalar_select %p158, %s159, %s160
      %p164 = pneg %p158
      %p165 = scmp.eq.s32.totalorder %s18, 1
      %p166 = por %p164, %p165
      %p167 = scmp.ne.s32.totalorder %s159, %s162
      %p168 = scmp.eq.s32.totalorder %s18, 0
      %p169 = por %p167, %p168
      %p170 = scmp.ne.s32.totalorder %s159, %s162
      %p171 = scmp.eq.s32.totalorder %s23, 1
      %p172 = por %p170, %p171
      %p173 = scmp.ne.s32.totalorder %s162, %s163
      %p174 = scmp.eq.s32.totalorder %s23, 0
      %p175 = por %p173, %p174
      %p176 = scmp.ne.s32.totalorder %s162, %s163
      %p177 = scmp.eq.s32.totalorder %s24, 1
      %p178 = por %p176, %p177
      %p180 = scmp.ne.s32.totalorder %s163, %s179
      %p181 = scmp.eq.s32.totalorder %s24, 0
      %p182 = por %p180, %p181
      %p183 = scmp.le.s32.totalorder 1, %s18
      %p184 = scmp.lt.s32.totalorder %s18, 3
      %p185 = pnand %p183, %p184
      %p186 = pneg %p185
      // Predicated region
      $region9: #{tpu_custom_call.1} parent=5 // pred_check
        _
      $region10: #{tpu_custom_call.1} parent=5 // pred_check_branch
        %188 = sbr.rel (%p185) target = $region12
      $region11: #{tpu_custom_call.1} parent=5 // pred_region
        %s189 = ssub.s32 %s18, 1
        // Predicated region
        $region13: #{tpu_custom_call.1} parent=11 // pred_check
          %p190 = pneg %p65
        $region14: #{tpu_custom_call.1} parent=11 // pred_check_branch
          %192 = sbr.rel (%p190) target = $region16
        $region15: #{tpu_custom_call.1} parent=11 // pred_region
          _
        $region16: #{tpu_custom_call.1} parent=11 // pred_fallthru
          _
        // Predicated region
        $region17: #{tpu_custom_call.1} parent=11 // pred_check
          %p193 = pneg %p86
        $region18: #{tpu_custom_call.1} parent=11 // pred_check_branch
          %195 = sbr.rel (%p193) target = $region20
        $region19: #{tpu_custom_call.1} parent=11 // pred_region
          _
        $region20: #{tpu_custom_call.1} parent=11 // pred_fallthru
          _
        // Predicated region
        $region21: #{tpu_custom_call.1} parent=11 // pred_check
          %p196 = pneg %p107
        $region22: #{tpu_custom_call.1} parent=11 // pred_check_branch
          %198 = sbr.rel (%p196) target = $region24
        $region23: #{tpu_custom_call.1} parent=11 // pred_region
          _
        $region24: #{tpu_custom_call.1} parent=11 // pred_fallthru
          _
        // Predicated region
        $region25: #{tpu_custom_call.1} parent=11 // pred_check
          %p199 = pneg %p128
        $region26: #{tpu_custom_call.1} parent=11 // pred_check_branch
          %201 = sbr.rel (%p199) target = $region28
        $region27: #{tpu_custom_call.1} parent=11 // pred_region
          _
        $region28: #{tpu_custom_call.1} parent=11 // pred_fallthru
          _
        // Predicated region
        $region29: #{tpu_custom_call.1} parent=11 // pred_check
          %p202 = pneg %p149
        $region30: #{tpu_custom_call.1} parent=11 // pred_check_branch
          %204 = sbr.rel (%p202) target = $region32
        $region31: #{tpu_custom_call.1} parent=11 // pred_region
          _
        $region32: #{tpu_custom_call.1} parent=11 // pred_fallthru
          _
      $region12: #{tpu_custom_call.1} parent=5 // pred_fallthru
        _
      %p205 = scmp.lt.s32.totalorder %s18, 2
      // Predicated region
      $region33: #{tpu_custom_call.1} parent=5 // pred_check
        %p206 = pneg %p205
      $region34: #{tpu_custom_call.1} parent=5 // pred_check_branch
        %208 = sbr.rel (%p206) target = $region36
      $region35: #{tpu_custom_call.1} parent=5 // pred_region
        // Predicated region
        $region37: #{tpu_custom_call.1} parent=35 // pred_check
          %p209 = pneg %p38
        $region38: #{tpu_custom_call.1} parent=35 // pred_check_branch
          %211 = sbr.rel (%p209) target = $region40
        $region39: #{tpu_custom_call.1} parent=35 // pred_region
          %s212 = sand.u32 %s28, 1
          %s213 = scalar_lea.sflag [#allocation4], %s212
          %s214 = sand.u32 %s28, 1
          %s215 = smul.addr %s214, 128
          %s216 = scalar_lea.vmem [#allocation3], %s215
          %218 = vsyncadd %s213, 0
          %s219 = smul.addr %s18, 16
          %s220 = smul.addr %s219, 8
          %s221 = scalar_lea.hbm %s0, %s220
          %s222 = sshll.u32 %s221, 4
          %s223 = int_to_ptr.hbm [resolvable:$true] %s222
          %s224 = sshll.u32 %s216, 4
          %s225 = int_to_ptr.vmem [resolvable:$true] %s224
          %230 = dma.hbm_to_vmem [thread:$0]  %s223, 2048, %s225, %s213, 128, 128, 8
        $region40: #{tpu_custom_call.1} parent=35 // pred_fallthru
          _
      $region36: #{tpu_custom_call.1} parent=5 // pred_fallthru
        _
      %p231 = scmp.le.s32.totalorder 1, %s18
      %p232 = scmp.lt.s32.totalorder %s18, 3
      %p233 = pnand %p231, %p232
      %p234 = pneg %p233
      // Predicated region
      $region41: #{tpu_custom_call.1} parent=5 // pred_check
        _
      $region42: #{tpu_custom_call.1} parent=5 // pred_check_branch
        %236 = sbr.rel (%p233) target = $region44
      $region43: #{tpu_custom_call.1} parent=5 // pred_region
        %s237 = ssub.s32 %s18, 1
        %s238 = sand.u32 %s31, 1
        %s239 = scalar_lea.sflag [#allocation4], %s238
        %s240 = sand.u32 %s31, 1
        %s241 = smul.addr %s240, 128
        %s242 = scalar_lea.vmem [#allocation3], %s241
        // Predicated region
        $region45: #{tpu_custom_call.1} parent=43 // pred_check
          %p243 = pneg %p44
        $region46: #{tpu_custom_call.1} parent=43 // pred_check_branch
          %245 = sbr.rel (%p243) target = $region48
        $region47: #{tpu_custom_call.1} parent=43 // pred_region
          %247 = dma.done %s239, 2048
        $region48: #{tpu_custom_call.1} parent=43 // pred_fallthru
          _
        %s248 = sand.u32 %s31, 1
        %s249 = scalar_lea.sflag [#allocation4], %s248
        %s250 = sand.u32 %s31, 1
        %s251 = smul.addr %s250, 128
        %s252 = scalar_lea.vmem [#allocation3], %s251
        %p253 = pneg %p44
        %p254 = pneg %p41
        %p255 = pneg %p65
        %p256 = pneg %p62
        %p257 = pneg %p86
        %p258 = pneg %p83
        %p259 = pneg %p107
        %p260 = pneg %p104
        %p261 = pneg %p128
        %p262 = pneg %p125
        %p263 = pneg %p149
        %p264 = pneg %p146
        %p265 = pneg %p175
        %p266 = pneg %p172
        %s267 = sand.u32 %s162, 1
        %s268 = scalar_lea.sflag [#allocation5], %s267
        %s269 = sand.u32 %s162, 1
        %s270 = smul.addr %s269, 128
        %s271 = scalar_lea.vmem [#allocation6], %s270
        %v272 = vld [vmem:[%s242] sm:$0xff]
        %v273 = vld [vmem:[%s242 + $0x8] sm:$0xff]
        %v274 = vld [vmem:[%s242 + $0x10] sm:$0xff]
        %v275 = vld [vmem:[%s242 + $0x18] sm:$0xff]
        %v276 = vld [vmem:[%s242 + $0x20] sm:$0xff]
        %v277 = vld [vmem:[%s242 + $0x28] sm:$0xff]
        %v278 = vld [vmem:[%s242 + $0x30] sm:$0xff]
        %v279 = vld [vmem:[%s242 + $0x38] sm:$0xff]
        %v280 = vld [vmem:[%s242 + $0x40] sm:$0xff]
        %v281 = vld [vmem:[%s242 + $0x48] sm:$0xff]
        %v282 = vld [vmem:[%s242 + $0x50] sm:$0xff]
        %v283 = vld [vmem:[%s242 + $0x58] sm:$0xff]
        %v284 = vld [vmem:[%s242 + $0x60] sm:$0xff]
        %v285 = vld [vmem:[%s242 + $0x68] sm:$0xff]
        %v286 = vld [vmem:[%s242 + $0x70] sm:$0xff]
        %v287 = vld [vmem:[%s242 + $0x78] sm:$0xff]
        %288 = vst [vmem:[#allocation2] sm:$0xff] 0.0
        %vm289 = vcmask 64512
        %290 = vst.msk [vmem:[#allocation2 + $0x8] sm:$0xff] %vm289, 0.0
        %291 = vst [vmem:[#allocation2 + $0x10] sm:$0xff] 0.0
        %292 = vst.msk [vmem:[#allocation2 + $0x18] sm:$0xff] %vm289, 0.0
        %293 = vst [vmem:[#allocation2 + $0x20] sm:$0x3] 0.0
        %vm294 = vcmask 58368
        %295 = vst.msk [vmem:[#allocation2 + $0x28] sm:$0x3] %vm294, 0.0
        %296 = vst [vmem:[#allocation2 + $0x30] sm:$0xff] 0.0
        %297 = vst.msk [vmem:[#allocation2 + $0x38] sm:$0xff] %vm289, 0.0
        %298 = vst [vmem:[#allocation2 + $0x40] sm:$0xff] 0.0
        %299 = vst.msk [vmem:[#allocation2 + $0x48] sm:$0xff] %vm289, 0.0
        %300 = vst [vmem:[#allocation2 + $0x50] sm:$0x3] 0.0
        %301 = vst.msk [vmem:[#allocation2 + $0x58] sm:$0x3] %vm294, 0.0
        %302 = vst [vmem:[#allocation2 + $0x60] sm:$0xff] 0.0
        %303 = vst.msk [vmem:[#allocation2 + $0x68] sm:$0xff] %vm289, 0.0
        %304 = vst [vmem:[#allocation2 + $0x70] sm:$0xff] 0.0
        %305 = vst.msk [vmem:[#allocation2 + $0x78] sm:$0xff] %vm289, 0.0
        %306 = vst [vmem:[#allocation2 + $0x80] sm:$0x3] 0.0
        %307 = vst.msk [vmem:[#allocation2 + $0x88] sm:$0x3] %vm294, 0.0
        %308 = vst [vmem:[#allocation2 + $0x90] sm:$0xff] 0.0
        %309 = vst.msk [vmem:[#allocation2 + $0x98] sm:$0xff] %vm289, 0.0
        %310 = vst [vmem:[#allocation2 + $0xa0] sm:$0xff] 0.0
        %311 = vst.msk [vmem:[#allocation2 + $0xa8] sm:$0xff] %vm289, 0.0
        %312 = vst [vmem:[#allocation2 + $0xb0] sm:$0x3] 0.0
        %313 = vst.msk [vmem:[#allocation2 + $0xb8] sm:$0x3] %vm294, 0.0
        %314 = vst [vmem:[#allocation2 + $0xc0] sm:$0xff] 0.0
        %315 = vst.msk [vmem:[#allocation2 + $0xc8] sm:$0xff] %vm289, 0.0
        %316 = vst [vmem:[#allocation2 + $0xd0] sm:$0xff] 0.0
        %317 = vst.msk [vmem:[#allocation2 + $0xd8] sm:$0xff] %vm289, 0.0
        %318 = vst [vmem:[#allocation2 + $0xe0] sm:$0x3] 0.0
        %319 = vst.msk [vmem:[#allocation2 + $0xe8] sm:$0x3] %vm294, 0.0
        %320 = vst [vmem:[#allocation2 + $0xf0] sm:$0xff] 0.0
        %321 = vst.msk [vmem:[#allocation2 + $0xf8] sm:$0xff] %vm289, 0.0
        %322 = vst [vmem:[#allocation2 + $0x100] sm:$0xff] 0.0
        %323 = vst.msk [vmem:[#allocation2 + $0x108] sm:$0xff] %vm289, 0.0
        %324 = vst [vmem:[#allocation2 + $0x110] sm:$0x3] 0.0
        %325 = vst.msk [vmem:[#allocation2 + $0x118] sm:$0x3] %vm294, 0.0
        %326 = vst [vmem:[#allocation2 + $0x120] sm:$0xff] 0.0
        %327 = vst.msk [vmem:[#allocation2 + $0x128] sm:$0xff] %vm289, 0.0
        %328 = vst [vmem:[#allocation2 + $0x130] sm:$0xff] 0.0
        %329 = vst.msk [vmem:[#allocation2 + $0x138] sm:$0xff] %vm289, 0.0
        %330 = vst [vmem:[#allocation2 + $0x140] sm:$0x3] 0.0
        %331 = vst.msk [vmem:[#allocation2 + $0x148] sm:$0x3] %vm294, 0.0
        %332 = vst [vmem:[#allocation2 + $0x150] sm:$0xff] 0.0
        %333 = vst.msk [vmem:[#allocation2 + $0x158] sm:$0xff] %vm289, 0.0
        %334 = vst [vmem:[#allocation2 + $0x160] sm:$0xff] 0.0
        %335 = vst.msk [vmem:[#allocation2 + $0x168] sm:$0xff] %vm289, 0.0
        %336 = vst [vmem:[#allocation2 + $0x170] sm:$0x3] 0.0
        %337 = vst.msk [vmem:[#allocation2 + $0x178] sm:$0x3] %vm294, 0.0
        %338 = vst [vmem:[#allocation2 + $0x180] sm:$0xff] 0.0
        %339 = vst.msk [vmem:[#allocation2 + $0x188] sm:$0xff] %vm289, 0.0
        %340 = vst [vmem:[#allocation2 + $0x190] sm:$0xff] 0.0
        %341 = vst.msk [vmem:[#allocation2 + $0x198] sm:$0xff] %vm289, 0.0
        %342 = vst [vmem:[#allocation2 + $0x1a0] sm:$0x3] 0.0
        %343 = vst.msk [vmem:[#allocation2 + $0x1a8] sm:$0x3] %vm294, 0.0
        %344 = vst [vmem:[#allocation2 + $0x1b0] sm:$0xff] 0.0
        %345 = vst.msk [vmem:[#allocation2 + $0x1b8] sm:$0xff] %vm289, 0.0
        %346 = vst [vmem:[#allocation2 + $0x1c0] sm:$0xff] 0.0
        %347 = vst.msk [vmem:[#allocation2 + $0x1c8] sm:$0xff] %vm289, 0.0
        %348 = vst [vmem:[#allocation2 + $0x1d0] sm:$0x3] 0.0
        %349 = vst.msk [vmem:[#allocation2 + $0x1d8] sm:$0x3] %vm294, 0.0
        %350 = vst [vmem:[#allocation2 + $0x1e0] sm:$0xff] 0.0
        %351 = vst.msk [vmem:[#allocation2 + $0x1e8] sm:$0xff] %vm289, 0.0
        %352 = vst [vmem:[#allocation2 + $0x1f0] sm:$0xff] 0.0
        %353 = vst.msk [vmem:[#allocation2 + $0x1f8] sm:$0xff] %vm289, 0.0
        %354 = vst [vmem:[#allocation2 + $0x200] sm:$0x3] 0.0
        %355 = vst.msk [vmem:[#allocation2 + $0x208] sm:$0x3] %vm294, 0.0
        %356 = vst [vmem:[#allocation2 + $0x210] sm:$0xff] 0.0
        %357 = vst.msk [vmem:[#allocation2 + $0x218] sm:$0xff] %vm289, 0.0
        %358 = vst [vmem:[#allocation2 + $0x220] sm:$0xff] 0.0
        %359 = vst.msk [vmem:[#allocation2 + $0x228] sm:$0xff] %vm289, 0.0
        %360 = vst [vmem:[#allocation2 + $0x230] sm:$0x3] 0.0
        %361 = vst.msk [vmem:[#allocation2 + $0x238] sm:$0x3] %vm294, 0.0
        %vm378 = vcmask 1040384
        %v379 = vrot.slane %v272, 7
        %v380 = vrot.slane %v273, 7
        %v381 = vsel %vm378, %v379, %v380
        %v382 = vrot.slane %v274, 7
        %v383 = vrot.slane %v275, 7
        %v384 = vsel %vm378, %v382, %v383
        %v385 = vrot.slane %v276, 7
        %v386 = vrot.slane %v277, 7
        %v387 = vsel %vm378, %v385, %v386
        %v388 = vrot.slane %v278, 7
        %v389 = vrot.slane %v279, 7
        %v390 = vsel %vm378, %v388, %v389
        %v391 = vrot.slane %v280, 7
        %v392 = vrot.slane %v281, 7
        %v393 = vsel %vm378, %v391, %v392
        %v394 = vrot.slane %v282, 7
        %v395 = vrot.slane %v283, 7
        %v396 = vsel %vm378, %v394, %v395
        %v397 = vrot.slane %v284, 7
        %v398 = vrot.slane %v285, 7
        %v399 = vsel %vm378, %v397, %v398
        %v400 = vrot.slane %v286, 7
        %v401 = vrot.slane %v287, 7
        %v402 = vsel %vm378, %v400, %v401
        %403 = vrot.lane.b32.xlu0 %v379, 4
        %v404 = vpop.permute.xlu0 %403
        %405 = vrot.lane.b32.xlu0 %v381, 4
        %v406 = vpop.permute.xlu0 %405
        %407 = vrot.lane.b32.xlu0 %v380, 4
        %v408 = vpop.permute.xlu0 %407
        %409 = vrot.lane.b32.xlu0 %v382, 4
        %v410 = vpop.permute.xlu0 %409
        %411 = vrot.lane.b32.xlu0 %v384, 4
        %v412 = vpop.permute.xlu0 %411
        %413 = vrot.lane.b32.xlu0 %v383, 4
        %v414 = vpop.permute.xlu0 %413
        %415 = vrot.lane.b32.xlu0 %v385, 4
        %v416 = vpop.permute.xlu0 %415
        %417 = vrot.lane.b32.xlu0 %v387, 4
        %v418 = vpop.permute.xlu0 %417
        %419 = vrot.lane.b32.xlu0 %v386, 4
        %v420 = vpop.permute.xlu0 %419
        %421 = vrot.lane.b32.xlu0 %v388, 4
        %v422 = vpop.permute.xlu0 %421
        %423 = vrot.lane.b32.xlu0 %v390, 4
        %v424 = vpop.permute.xlu0 %423
        %425 = vrot.lane.b32.xlu0 %v389, 4
        %v426 = vpop.permute.xlu0 %425
        %427 = vrot.lane.b32.xlu0 %v391, 4
        %v428 = vpop.permute.xlu0 %427
        %429 = vrot.lane.b32.xlu0 %v393, 4
        %v430 = vpop.permute.xlu0 %429
        %431 = vrot.lane.b32.xlu0 %v392, 4
        %v432 = vpop.permute.xlu0 %431
        %433 = vrot.lane.b32.xlu0 %v394, 4
        %v434 = vpop.permute.xlu0 %433
        %435 = vrot.lane.b32.xlu0 %v396, 4
        %v436 = vpop.permute.xlu0 %435
        %437 = vrot.lane.b32.xlu0 %v395, 4
        %v438 = vpop.permute.xlu0 %437
        %439 = vrot.lane.b32.xlu0 %v397, 4
        %v440 = vpop.permute.xlu0 %439
        %441 = vrot.lane.b32.xlu0 %v399, 4
        %v442 = vpop.permute.xlu0 %441
        %443 = vrot.lane.b32.xlu0 %v398, 4
        %v444 = vpop.permute.xlu0 %443
        %445 = vrot.lane.b32.xlu0 %v400, 4
        %v446 = vpop.permute.xlu0 %445
        %447 = vrot.lane.b32.xlu0 %v402, 4
        %v448 = vpop.permute.xlu0 %447
        %449 = vrot.lane.b32.xlu0 %v401, 4
        %v450 = vpop.permute.xlu0 %449
        %s475 = scalar_lea.vmem [#allocation2], 192
        %vm476 = vcmask 1047585
        %477 = vst.msk [vmem:[%s475] sm:$0xfe] %vm476, %v404
        %vm478 = vcmask 31745
        %479 = vst.msk [vmem:[%s475 + $0x8] sm:$0xfe] %vm478, %v404
        %vm480 = vcmask 1047584
        %481 = vst.msk [vmem:[%s475 + $0x10] sm:$0xff] %vm480, %v406
        %vm482 = vcmask 31744
        %483 = vst.msk [vmem:[%s475 + $0x18] sm:$0xff] %vm482, %v406
        %vm484 = vcmask 1040416
        %485 = vst.msk [vmem:[%s475 + $0x20] sm:$0x1] %vm484, %v408
        %vm486 = vcmask 24576
        %487 = vst.msk [vmem:[%s475 + $0x28] sm:$0x1] %vm486, %v408
        %488 = vst.msk [vmem:[%s475 + $0x30] sm:$0xfe] %vm476, %v410
        %489 = vst.msk [vmem:[%s475 + $0x38] sm:$0xfe] %vm478, %v410
        %490 = vst.msk [vmem:[%s475 + $0x40] sm:$0xff] %vm480, %v412
        %491 = vst.msk [vmem:[%s475 + $0x48] sm:$0xff] %vm482, %v412
        %492 = vst.msk [vmem:[%s475 + $0x50] sm:$0x1] %vm484, %v414
        %493 = vst.msk [vmem:[%s475 + $0x58] sm:$0x1] %vm486, %v414
        %494 = vst.msk [vmem:[%s475 + $0x60] sm:$0xfe] %vm476, %v416
        %495 = vst.msk [vmem:[%s475 + $0x68] sm:$0xfe] %vm478, %v416
        %496 = vst.msk [vmem:[%s475 + $0x70] sm:$0xff] %vm480, %v418
        %497 = vst.msk [vmem:[%s475 + $0x78] sm:$0xff] %vm482, %v418
        %498 = vst.msk [vmem:[%s475 + $0x80] sm:$0x1] %vm484, %v420
        %499 = vst.msk [vmem:[%s475 + $0x88] sm:$0x1] %vm486, %v420
        %500 = vst.msk [vmem:[%s475 + $0x90] sm:$0xfe] %vm476, %v422
        %501 = vst.msk [vmem:[%s475 + $0x98] sm:$0xfe] %vm478, %v422
        %502 = vst.msk [vmem:[%s475 + $0xa0] sm:$0xff] %vm480, %v424
        %503 = vst.msk [vmem:[%s475 + $0xa8] sm:$0xff] %vm482, %v424
        %504 = vst.msk [vmem:[%s475 + $0xb0] sm:$0x1] %vm484, %v426
        %505 = vst.msk [vmem:[%s475 + $0xb8] sm:$0x1] %vm486, %v426
        %506 = vst.msk [vmem:[%s475 + $0xc0] sm:$0xfe] %vm476, %v428
        %507 = vst.msk [vmem:[%s475 + $0xc8] sm:$0xfe] %vm478, %v428
        %508 = vst.msk [vmem:[%s475 + $0xd0] sm:$0xff] %vm480, %v430
        %509 = vst.msk [vmem:[%s475 + $0xd8] sm:$0xff] %vm482, %v430
        %510 = vst.msk [vmem:[%s475 + $0xe0] sm:$0x1] %vm484, %v432
        %511 = vst.msk [vmem:[%s475 + $0xe8] sm:$0x1] %vm486, %v432
        %512 = vst.msk [vmem:[%s475 + $0xf0] sm:$0xfe] %vm476, %v434
        %513 = vst.msk [vmem:[%s475 + $0xf8] sm:$0xfe] %vm478, %v434
        %514 = vst.msk [vmem:[%s475 + $0x100] sm:$0xff] %vm480, %v436
        %515 = vst.msk [vmem:[%s475 + $0x108] sm:$0xff] %vm482, %v436
        %516 = vst.msk [vmem:[%s475 + $0x110] sm:$0x1] %vm484, %v438
        %517 = vst.msk [vmem:[%s475 + $0x118] sm:$0x1] %vm486, %v438
        %518 = vst.msk [vmem:[%s475 + $0x120] sm:$0xfe] %vm476, %v440
        %519 = vst.msk [vmem:[%s475 + $0x128] sm:$0xfe] %vm478, %v440
        %520 = vst.msk [vmem:[%s475 + $0x130] sm:$0xff] %vm480, %v442
        %521 = vst.msk [vmem:[%s475 + $0x138] sm:$0xff] %vm482, %v442
        %522 = vst.msk [vmem:[%s475 + $0x140] sm:$0x1] %vm484, %v444
        %523 = vst.msk [vmem:[%s475 + $0x148] sm:$0x1] %vm486, %v444
        %524 = vst.msk [vmem:[%s475 + $0x150] sm:$0xfe] %vm476, %v446
        %525 = vst.msk [vmem:[%s475 + $0x158] sm:$0xfe] %vm478, %v446
        %526 = vst.msk [vmem:[%s475 + $0x160] sm:$0xff] %vm480, %v448
        %527 = vst.msk [vmem:[%s475 + $0x168] sm:$0xff] %vm482, %v448
        %528 = vst.msk [vmem:[%s475 + $0x170] sm:$0x1] %vm484, %v450
        %529 = vst.msk [vmem:[%s475 + $0x178] sm:$0x1] %vm486, %v450
        %v530 = vld [vmem:[#allocation2] sm:$0xff]
        %v531 = vld [vmem:[#allocation2 + $0x10] sm:$0xff]
        %v532 = vld [vmem:[#allocation2 + $0x30] sm:$0xff]
        %v533 = vld [vmem:[#allocation2 + $0x40] sm:$0xff]
        %v534 = vld [vmem:[#allocation2 + $0x60] sm:$0xff]
        %v535 = vld [vmem:[#allocation2 + $0x70] sm:$0xff]
        %v536 = vld [vmem:[#allocation2 + $0x90] sm:$0xff]
        %v537 = vld [vmem:[#allocation2 + $0xa0] sm:$0xff]
        %v538 = vld [vmem:[#allocation2 + $0xc0] sm:$0xff]
        %v539 = vld [vmem:[#allocation2 + $0xd0] sm:$0xff]
        %v540 = vld [vmem:[#allocation2 + $0xf0] sm:$0xff]
        %v541 = vld [vmem:[#allocation2 + $0x100] sm:$0xff]
        %v542 = vld [vmem:[#allocation2 + $0x120] sm:$0xff]
        %v543 = vld [vmem:[#allocation2 + $0x130] sm:$0xff]
        %v544 = vld [vmem:[#allocation2 + $0x150] sm:$0xff]
        %v545 = vld [vmem:[#allocation2 + $0x160] sm:$0xff]
        %v546 = vld [vmem:[#allocation2 + $0x180] sm:$0xff]
        %v547 = vld [vmem:[#allocation2 + $0x190] sm:$0xff]
        %v548 = vld [vmem:[#allocation2 + $0x1b0] sm:$0xff]
        %v549 = vld [vmem:[#allocation2 + $0x1c0] sm:$0xff]
        %v550 = vld [vmem:[#allocation2 + $0x1e0] sm:$0xff]
        %v551 = vld [vmem:[#allocation2 + $0x1f0] sm:$0xff]
        %v552 = vld [vmem:[#allocation2 + $0x210] sm:$0xff]
        %v553 = vld [vmem:[#allocation2 + $0x220] sm:$0xff]
        %v554 = vld [vmem:[%s1] sm:$0x1]
        %v555 = vperm.slane %v554, 0
        %v556 = vmul.f32 %v530, %v555
        %v557 = vmul.f32 %v531, %v555
        %v558 = vmul.f32 %v532, %v555
        %v559 = vmul.f32 %v533, %v555
        %v560 = vmul.f32 %v534, %v555
        %v561 = vmul.f32 %v535, %v555
        %v562 = vmul.f32 %v536, %v555
        %v563 = vmul.f32 %v537, %v555
        %v564 = vmul.f32 %v538, %v555
        %v565 = vmul.f32 %v539, %v555
        %v566 = vmul.f32 %v540, %v555
        %v567 = vmul.f32 %v541, %v555
        %v568 = vmul.f32 %v542, %v555
        %v569 = vmul.f32 %v543, %v555
        %v570 = vmul.f32 %v544, %v555
        %v571 = vmul.f32 %v545, %v555
        %v572 = vadd.f32 %v556, 0.0
        %v573 = vadd.f32 %v557, 0.0
        %v574 = vadd.f32 %v558, 0.0
        %v575 = vadd.f32 %v559, 0.0
        %v576 = vadd.f32 %v560, 0.0
        %v577 = vadd.f32 %v561, 0.0
        %v578 = vadd.f32 %v562, 0.0
        %v579 = vadd.f32 %v563, 0.0
        %v580 = vadd.f32 %v564, 0.0
        %v581 = vadd.f32 %v565, 0.0
        %v582 = vadd.f32 %v566, 0.0
        %v583 = vadd.f32 %v567, 0.0
        %v584 = vadd.f32 %v568, 0.0
        %v585 = vadd.f32 %v569, 0.0
        %v586 = vadd.f32 %v570, 0.0
        %v587 = vadd.f32 %v571, 0.0
        %s588 = scalar_lea.vmem %s1, 12
        %v589 = vld [vmem:[%s588] sm:$0x1]
        %v590 = vperm.slane %v589, 0
        %v591 = vmul.f32 %v534, %v590
        %v592 = vmul.f32 %v535, %v590
        %v593 = vmul.f32 %v536, %v590
        %v594 = vmul.f32 %v537, %v590
        %v595 = vmul.f32 %v538, %v590
        %v596 = vmul.f32 %v539, %v590
        %v597 = vmul.f32 %v540, %v590
        %v598 = vmul.f32 %v541, %v590
        %v599 = vmul.f32 %v542, %v590
        %v600 = vmul.f32 %v543, %v590
        %v601 = vmul.f32 %v544, %v590
        %v602 = vmul.f32 %v545, %v590
        %v603 = vmul.f32 %v546, %v590
        %v604 = vmul.f32 %v547, %v590
        %v605 = vmul.f32 %v548, %v590
        %v606 = vmul.f32 %v549, %v590
        %v607 = vadd.f32 %v572, %v591
        %v608 = vadd.f32 %v573, %v592
        %v609 = vadd.f32 %v574, %v593
        %v610 = vadd.f32 %v575, %v594
        %v611 = vadd.f32 %v576, %v595
        %v612 = vadd.f32 %v577, %v596
        %v613 = vadd.f32 %v578, %v597
        %v614 = vadd.f32 %v579, %v598
        %v615 = vadd.f32 %v580, %v599
        %v616 = vadd.f32 %v581, %v600
        %v617 = vadd.f32 %v582, %v601
        %v618 = vadd.f32 %v583, %v602
        %v619 = vadd.f32 %v584, %v603
        %v620 = vadd.f32 %v585, %v604
        %v621 = vadd.f32 %v586, %v605
        %v622 = vadd.f32 %v587, %v606
        %s623 = scalar_lea.vmem %s1, 24
        %v624 = vld [vmem:[%s623] sm:$0x1]
        %v625 = vperm.slane %v624, 0
        %v626 = vmul.f32 %v538, %v625
        %v627 = vmul.f32 %v539, %v625
        %v628 = vmul.f32 %v540, %v625
        %v629 = vmul.f32 %v541, %v625
        %v630 = vmul.f32 %v542, %v625
        %v631 = vmul.f32 %v543, %v625
        %v632 = vmul.f32 %v544, %v625
        %v633 = vmul.f32 %v545, %v625
        %v634 = vmul.f32 %v546, %v625
        %v635 = vmul.f32 %v547, %v625
        %v636 = vmul.f32 %v548, %v625
        %v637 = vmul.f32 %v549, %v625
        %v638 = vmul.f32 %v550, %v625
        %v639 = vmul.f32 %v551, %v625
        %v640 = vmul.f32 %v552, %v625
        %v641 = vmul.f32 %v553, %v625
        %v642 = vadd.f32 %v607, %v626
        %v643 = vadd.f32 %v608, %v627
        %v644 = vadd.f32 %v609, %v628
        %v645 = vadd.f32 %v610, %v629
        %v646 = vadd.f32 %v611, %v630
        %v647 = vadd.f32 %v612, %v631
        %v648 = vadd.f32 %v613, %v632
        %v649 = vadd.f32 %v614, %v633
        %v650 = vadd.f32 %v615, %v634
        %v651 = vadd.f32 %v616, %v635
        %v652 = vadd.f32 %v617, %v636
        %v653 = vadd.f32 %v618, %v637
        %v654 = vadd.f32 %v619, %v638
        %v655 = vadd.f32 %v620, %v639
        %v656 = vadd.f32 %v621, %v640
        %v657 = vadd.f32 %v622, %v641
        %v658 = vld [vmem:[#allocation2 + $0x8] sm:$0xff]
        %v659 = vld [vmem:[#allocation2 + $0x18] sm:$0xff]
        %v660 = vld [vmem:[#allocation2 + $0x38] sm:$0xff]
        %v661 = vld [vmem:[#allocation2 + $0x48] sm:$0xff]
        %v662 = vld [vmem:[#allocation2 + $0x68] sm:$0xff]
        %v663 = vld [vmem:[#allocation2 + $0x78] sm:$0xff]
        %v664 = vld [vmem:[#allocation2 + $0x98] sm:$0xff]
        %v665 = vld [vmem:[#allocation2 + $0xa8] sm:$0xff]
        %v666 = vld [vmem:[#allocation2 + $0xc8] sm:$0xff]
        %v667 = vld [vmem:[#allocation2 + $0xd8] sm:$0xff]
        %v668 = vld [vmem:[#allocation2 + $0xf8] sm:$0xff]
        %v669 = vld [vmem:[#allocation2 + $0x108] sm:$0xff]
        %v670 = vld [vmem:[#allocation2 + $0x128] sm:$0xff]
        %v671 = vld [vmem:[#allocation2 + $0x138] sm:$0xff]
        %v672 = vld [vmem:[#allocation2 + $0x158] sm:$0xff]
        %v673 = vld [vmem:[#allocation2 + $0x168] sm:$0xff]
        %v674 = vld [vmem:[#allocation2 + $0x188] sm:$0xff]
        %v675 = vld [vmem:[#allocation2 + $0x198] sm:$0xff]
        %v676 = vld [vmem:[#allocation2 + $0x1b8] sm:$0xff]
        %v677 = vld [vmem:[#allocation2 + $0x1c8] sm:$0xff]
        %v678 = vld [vmem:[#allocation2 + $0x1e8] sm:$0xff]
        %v679 = vld [vmem:[#allocation2 + $0x1f8] sm:$0xff]
        %v680 = vld [vmem:[#allocation2 + $0x218] sm:$0xff]
        %v681 = vld [vmem:[#allocation2 + $0x228] sm:$0xff]
        %v682 = vld [vmem:[%s1 + $0x1] sm:$0x1]
        %v683 = vperm.slane %v682, 0
        %685 = vrot.lane.b32.xlu0 %v683, 4
        %v686 = vpop.permute.xlu0 %685
        %v688 = vmul.f32 %v530, %v686
        %v689 = vmul.f32 %v658, %v686
        %v690 = vmul.f32 %v531, %v686
        %v691 = vmul.f32 %v659, %v686
        %v692 = vmul.f32 %v532, %v686
        %v693 = vmul.f32 %v660, %v686
        %v694 = vmul.f32 %v533, %v686
        %v695 = vmul.f32 %v661, %v686
        %v696 = vmul.f32 %v534, %v686
        %v697 = vmul.f32 %v662, %v686
        %v698 = vmul.f32 %v535, %v686
        %v699 = vmul.f32 %v663, %v686
        %v700 = vmul.f32 %v536, %v686
        %v701 = vmul.f32 %v664, %v686
        %v702 = vmul.f32 %v537, %v686
        %v703 = vmul.f32 %v665, %v686
        %v704 = vmul.f32 %v538, %v686
        %v705 = vmul.f32 %v666, %v686
        %v706 = vmul.f32 %v539, %v686
        %v707 = vmul.f32 %v667, %v686
        %v708 = vmul.f32 %v540, %v686
        %v709 = vmul.f32 %v668, %v686
        %v710 = vmul.f32 %v541, %v686
        %v711 = vmul.f32 %v669, %v686
        %v712 = vmul.f32 %v542, %v686
        %v713 = vmul.f32 %v670, %v686
        %v714 = vmul.f32 %v543, %v686
        %v715 = vmul.f32 %v671, %v686
        %v716 = vmul.f32 %v544, %v686
        %v717 = vmul.f32 %v672, %v686
        %v718 = vmul.f32 %v545, %v686
        %v719 = vmul.f32 %v673, %v686
        %752 = vrot.lane.b32.xlu0 %v688, 124
        %v753 = vpop.permute.xlu0 %752
        %754 = vrot.lane.b32.xlu0 %v689, 124
        %v755 = vpop.permute.xlu0 %754
        %756 = vrot.lane.b32.xlu0 %v690, 124
        %v757 = vpop.permute.xlu0 %756
        %758 = vrot.lane.b32.xlu0 %v691, 124
        %v759 = vpop.permute.xlu0 %758
        %760 = vrot.lane.b32.xlu0 %v692, 124
        %v761 = vpop.permute.xlu0 %760
        %762 = vrot.lane.b32.xlu0 %v693, 124
        %v763 = vpop.permute.xlu0 %762
        %764 = vrot.lane.b32.xlu0 %v694, 124
        %v765 = vpop.permute.xlu0 %764
        %766 = vrot.lane.b32.xlu0 %v695, 124
        %v767 = vpop.permute.xlu0 %766
        %768 = vrot.lane.b32.xlu0 %v696, 124
        %v769 = vpop.permute.xlu0 %768
        %770 = vrot.lane.b32.xlu0 %v697, 124
        %v771 = vpop.permute.xlu0 %770
        %772 = vrot.lane.b32.xlu0 %v698, 124
        %v773 = vpop.permute.xlu0 %772
        %774 = vrot.lane.b32.xlu0 %v699, 124
        %v775 = vpop.permute.xlu0 %774
        %776 = vrot.lane.b32.xlu0 %v700, 124
        %v777 = vpop.permute.xlu0 %776
        %778 = vrot.lane.b32.xlu0 %v701, 124
        %v779 = vpop.permute.xlu0 %778
        %780 = vrot.lane.b32.xlu0 %v702, 124
        %v781 = vpop.permute.xlu0 %780
        %782 = vrot.lane.b32.xlu0 %v703, 124
        %v783 = vpop.permute.xlu0 %782
        %784 = vrot.lane.b32.xlu0 %v704, 124
        %v785 = vpop.permute.xlu0 %784
        %786 = vrot.lane.b32.xlu0 %v705, 124
        %v787 = vpop.permute.xlu0 %786
        %788 = vrot.lane.b32.xlu0 %v706, 124
        %v789 = vpop.permute.xlu0 %788
        %790 = vrot.lane.b32.xlu0 %v707, 124
        %v791 = vpop.permute.xlu0 %790
        %792 = vrot.lane.b32.xlu0 %v708, 124
        %v793 = vpop.permute.xlu0 %792
        %794 = vrot.lane.b32.xlu0 %v709, 124
        %v795 = vpop.permute.xlu0 %794
        %796 = vrot.lane.b32.xlu0 %v710, 124
        %v797 = vpop.permute.xlu0 %796
        %798 = vrot.lane.b32.xlu0 %v711, 124
        %v799 = vpop.permute.xlu0 %798
        %800 = vrot.lane.b32.xlu0 %v712, 124
        %v801 = vpop.permute.xlu0 %800
        %802 = vrot.lane.b32.xlu0 %v713, 124
        %v803 = vpop.permute.xlu0 %802
        %804 = vrot.lane.b32.xlu0 %v714, 124
        %v805 = vpop.permute.xlu0 %804
        %806 = vrot.lane.b32.xlu0 %v715, 124
        %v807 = vpop.permute.xlu0 %806
        %808 = vrot.lane.b32.xlu0 %v716, 124
        %v809 = vpop.permute.xlu0 %808
        %810 = vrot.lane.b32.xlu0 %v717, 124
        %v811 = vpop.permute.xlu0 %810
        %812 = vrot.lane.b32.xlu0 %v718, 124
        %v813 = vpop.permute.xlu0 %812
        %814 = vrot.lane.b32.xlu0 %v719, 124
        %v815 = vpop.permute.xlu0 %814
        %vm816 = vcmask 1014784
        %v817 = vsel %vm816, %v753, %v755
        %v818 = vsel %vm816, %v757, %v759
        %v819 = vsel %vm816, %v761, %v763
        %v820 = vsel %vm816, %v765, %v767
        %v821 = vsel %vm816, %v769, %v771
        %v822 = vsel %vm816, %v773, %v775
        %v823 = vsel %vm816, %v777, %v779
        %v824 = vsel %vm816, %v781, %v783
        %v825 = vsel %vm816, %v785, %v787
        %v826 = vsel %vm816, %v789, %v791
        %v827 = vsel %vm816, %v793, %v795
        %v828 = vsel %vm816, %v797, %v799
        %v829 = vsel %vm816, %v801, %v803
        %v830 = vsel %vm816, %v805, %v807
        %v831 = vsel %vm816, %v809, %v811
        %v832 = vsel %vm816, %v813, %v815
        %v849 = vadd.f32 %v642, %v817
        %v850 = vadd.f32 %v643, %v818
        %v851 = vadd.f32 %v644, %v819
        %v852 = vadd.f32 %v645, %v820
        %v853 = vadd.f32 %v646, %v821
        %v854 = vadd.f32 %v647, %v822
        %v855 = vadd.f32 %v648, %v823
        %v856 = vadd.f32 %v649, %v824
        %v857 = vadd.f32 %v650, %v825
        %v858 = vadd.f32 %v651, %v826
        %v859 = vadd.f32 %v652, %v827
        %v860 = vadd.f32 %v653, %v828
        %v861 = vadd.f32 %v654, %v829
        %v862 = vadd.f32 %v655, %v830
        %v863 = vadd.f32 %v656, %v831
        %v864 = vadd.f32 %v657, %v832
        %v865 = vld [vmem:[%s588 + $0x1] sm:$0x1]
        %v866 = vperm.slane %v865, 0
        %868 = vrot.lane.b32.xlu0 %v866, 4
        %v869 = vpop.permute.xlu0 %868
        %v871 = vmul.f32 %v534, %v869
        %v872 = vmul.f32 %v662, %v869
        %v873 = vmul.f32 %v535, %v869
        %v874 = vmul.f32 %v663, %v869
        %v875 = vmul.f32 %v536, %v869
        %v876 = vmul.f32 %v664, %v869
        %v877 = vmul.f32 %v537, %v869
        %v878 = vmul.f32 %v665, %v869
        %v879 = vmul.f32 %v538, %v869
        %v880 = vmul.f32 %v666, %v869
        %v881 = vmul.f32 %v539, %v869
        %v882 = vmul.f32 %v667, %v869
        %v883 = vmul.f32 %v540, %v869
        %v884 = vmul.f32 %v668, %v869
        %v885 = vmul.f32 %v541, %v869
        %v886 = vmul.f32 %v669, %v869
        %v887 = vmul.f32 %v542, %v869
        %v888 = vmul.f32 %v670, %v869
        %v889 = vmul.f32 %v543, %v869
        %v890 = vmul.f32 %v671, %v869
        %v891 = vmul.f32 %v544, %v869
        %v892 = vmul.f32 %v672, %v869
        %v893 = vmul.f32 %v545, %v869
        %v894 = vmul.f32 %v673, %v869
        %v895 = vmul.f32 %v546, %v869
        %v896 = vmul.f32 %v674, %v869
        %v897 = vmul.f32 %v547, %v869
        %v898 = vmul.f32 %v675, %v869
        %v899 = vmul.f32 %v548, %v869
        %v900 = vmul.f32 %v676, %v869
        %v901 = vmul.f32 %v549, %v869
        %v902 = vmul.f32 %v677, %v869
        %935 = vrot.lane.b32.xlu0 %v871, 124
        %v936 = vpop.permute.xlu0 %935
        %937 = vrot.lane.b32.xlu0 %v872, 124
        %v938 = vpop.permute.xlu0 %937
        %939 = vrot.lane.b32.xlu0 %v873, 124
        %v940 = vpop.permute.xlu0 %939
        %941 = vrot.lane.b32.xlu0 %v874, 124
        %v942 = vpop.permute.xlu0 %941
        %943 = vrot.lane.b32.xlu0 %v875, 124
        %v944 = vpop.permute.xlu0 %943
        %945 = vrot.lane.b32.xlu0 %v876, 124
        %v946 = vpop.permute.xlu0 %945
        %947 = vrot.lane.b32.xlu0 %v877, 124
        %v948 = vpop.permute.xlu0 %947
        %949 = vrot.lane.b32.xlu0 %v878, 124
        %v950 = vpop.permute.xlu0 %949
        %951 = vrot.lane.b32.xlu0 %v879, 124
        %v952 = vpop.permute.xlu0 %951
        %953 = vrot.lane.b32.xlu0 %v880, 124
        %v954 = vpop.permute.xlu0 %953
        %955 = vrot.lane.b32.xlu0 %v881, 124
        %v956 = vpop.permute.xlu0 %955
        %957 = vrot.lane.b32.xlu0 %v882, 124
        %v958 = vpop.permute.xlu0 %957
        %959 = vrot.lane.b32.xlu0 %v883, 124
        %v960 = vpop.permute.xlu0 %959
        %961 = vrot.lane.b32.xlu0 %v884, 124
        %v962 = vpop.permute.xlu0 %961
        %963 = vrot.lane.b32.xlu0 %v885, 124
        %v964 = vpop.permute.xlu0 %963
        %965 = vrot.lane.b32.xlu0 %v886, 124
        %v966 = vpop.permute.xlu0 %965
        %967 = vrot.lane.b32.xlu0 %v887, 124
        %v968 = vpop.permute.xlu0 %967
        %969 = vrot.lane.b32.xlu0 %v888, 124
        %v970 = vpop.permute.xlu0 %969
        %971 = vrot.lane.b32.xlu0 %v889, 124
        %v972 = vpop.permute.xlu0 %971
        %973 = vrot.lane.b32.xlu0 %v890, 124
        %v974 = vpop.permute.xlu0 %973
        %975 = vrot.lane.b32.xlu0 %v891, 124
        %v976 = vpop.permute.xlu0 %975
        %977 = vrot.lane.b32.xlu0 %v892, 124
        %v978 = vpop.permute.xlu0 %977
        %979 = vrot.lane.b32.xlu0 %v893, 124
        %v980 = vpop.permute.xlu0 %979
        %981 = vrot.lane.b32.xlu0 %v894, 124
        %v982 = vpop.permute.xlu0 %981
        %983 = vrot.lane.b32.xlu0 %v895, 124
        %v984 = vpop.permute.xlu0 %983
        %985 = vrot.lane.b32.xlu0 %v896, 124
        %v986 = vpop.permute.xlu0 %985
        %987 = vrot.lane.b32.xlu0 %v897, 124
        %v988 = vpop.permute.xlu0 %987
        %989 = vrot.lane.b32.xlu0 %v898, 124
        %v990 = vpop.permute.xlu0 %989
        %991 = vrot.lane.b32.xlu0 %v899, 124
        %v992 = vpop.permute.xlu0 %991
        %993 = vrot.lane.b32.xlu0 %v900, 124
        %v994 = vpop.permute.xlu0 %993
        %995 = vrot.lane.b32.xlu0 %v901, 124
        %v996 = vpop.permute.xlu0 %995
        %997 = vrot.lane.b32.xlu0 %v902, 124
        %v998 = vpop.permute.xlu0 %997
        %v999 = vsel %vm816, %v936, %v938
        %v1000 = vsel %vm816, %v940, %v942
        %v1001 = vsel %vm816, %v944, %v946
        %v1002 = vsel %vm816, %v948, %v950
        %v1003 = vsel %vm816, %v952, %v954
        %v1004 = vsel %vm816, %v956, %v958
        %v1005 = vsel %vm816, %v960, %v962
        %v1006 = vsel %vm816, %v964, %v966
        %v1007 = vsel %vm816, %v968, %v970
        %v1008 = vsel %vm816, %v972, %v974
        %v1009 = vsel %vm816, %v976, %v978
        %v1010 = vsel %vm816, %v980, %v982
        %v1011 = vsel %vm816, %v984, %v986
        %v1012 = vsel %vm816, %v988, %v990
        %v1013 = vsel %vm816, %v992, %v994
        %v1014 = vsel %vm816, %v996, %v998
        %v1031 = vadd.f32 %v849, %v999
        %v1032 = vadd.f32 %v850, %v1000
        %v1033 = vadd.f32 %v851, %v1001
        %v1034 = vadd.f32 %v852, %v1002
        %v1035 = vadd.f32 %v853, %v1003
        %v1036 = vadd.f32 %v854, %v1004
        %v1037 = vadd.f32 %v855, %v1005
        %v1038 = vadd.f32 %v856, %v1006
        %v1039 = vadd.f32 %v857, %v1007
        %v1040 = vadd.f32 %v858, %v1008
        %v1041 = vadd.f32 %v859, %v1009
        %v1042 = vadd.f32 %v860, %v1010
        %v1043 = vadd.f32 %v861, %v1011
        %v1044 = vadd.f32 %v862, %v1012
        %v1045 = vadd.f32 %v863, %v1013
        %v1046 = vadd.f32 %v864, %v1014
        %v1047 = vld [vmem:[%s623 + $0x1] sm:$0x1]
        %v1048 = vperm.slane %v1047, 0
        %1050 = vrot.lane.b32.xlu0 %v1048, 4
        %v1051 = vpop.permute.xlu0 %1050
        %v1053 = vmul.f32 %v538, %v1051
        %v1054 = vmul.f32 %v666, %v1051
        %v1055 = vmul.f32 %v539, %v1051
        %v1056 = vmul.f32 %v667, %v1051
        %v1057 = vmul.f32 %v540, %v1051
        %v1058 = vmul.f32 %v668, %v1051
        %v1059 = vmul.f32 %v541, %v1051
        %v1060 = vmul.f32 %v669, %v1051
        %v1061 = vmul.f32 %v542, %v1051
        %v1062 = vmul.f32 %v670, %v1051
        %v1063 = vmul.f32 %v543, %v1051
        %v1064 = vmul.f32 %v671, %v1051
        %v1065 = vmul.f32 %v544, %v1051
        %v1066 = vmul.f32 %v672, %v1051
        %v1067 = vmul.f32 %v545, %v1051
        %v1068 = vmul.f32 %v673, %v1051
        %v1069 = vmul.f32 %v546, %v1051
        %v1070 = vmul.f32 %v674, %v1051
        %v1071 = vmul.f32 %v547, %v1051
        %v1072 = vmul.f32 %v675, %v1051
        %v1073 = vmul.f32 %v548, %v1051
        %v1074 = vmul.f32 %v676, %v1051
        %v1075 = vmul.f32 %v549, %v1051
        %v1076 = vmul.f32 %v677, %v1051
        %v1077 = vmul.f32 %v550, %v1051
        %v1078 = vmul.f32 %v678, %v1051
        %v1079 = vmul.f32 %v551, %v1051
        %v1080 = vmul.f32 %v679, %v1051
        %v1081 = vmul.f32 %v552, %v1051
        %v1082 = vmul.f32 %v680, %v1051
        %v1083 = vmul.f32 %v553, %v1051
        %v1084 = vmul.f32 %v681, %v1051
        %1117 = vrot.lane.b32.xlu0 %v1053, 124
        %v1118 = vpop.permute.xlu0 %1117
        %1119 = vrot.lane.b32.xlu0 %v1054, 124
        %v1120 = vpop.permute.xlu0 %1119
        %1121 = vrot.lane.b32.xlu0 %v1055, 124
        %v1122 = vpop.permute.xlu0 %1121
        %1123 = vrot.lane.b32.xlu0 %v1056, 124
        %v1124 = vpop.permute.xlu0 %1123
        %1125 = vrot.lane.b32.xlu0 %v1057, 124
        %v1126 = vpop.permute.xlu0 %1125
        %1127 = vrot.lane.b32.xlu0 %v1058, 124
        %v1128 = vpop.permute.xlu0 %1127
        %1129 = vrot.lane.b32.xlu0 %v1059, 124
        %v1130 = vpop.permute.xlu0 %1129
        %1131 = vrot.lane.b32.xlu0 %v1060, 124
        %v1132 = vpop.permute.xlu0 %1131
        %1133 = vrot.lane.b32.xlu0 %v1061, 124
        %v1134 = vpop.permute.xlu0 %1133
        %1135 = vrot.lane.b32.xlu0 %v1062, 124
        %v1136 = vpop.permute.xlu0 %1135
        %1137 = vrot.lane.b32.xlu0 %v1063, 124
        %v1138 = vpop.permute.xlu0 %1137
        %1139 = vrot.lane.b32.xlu0 %v1064, 124
        %v1140 = vpop.permute.xlu0 %1139
        %1141 = vrot.lane.b32.xlu0 %v1065, 124
        %v1142 = vpop.permute.xlu0 %1141
        %1143 = vrot.lane.b32.xlu0 %v1066, 124
        %v1144 = vpop.permute.xlu0 %1143
        %1145 = vrot.lane.b32.xlu0 %v1067, 124
        %v1146 = vpop.permute.xlu0 %1145
        %1147 = vrot.lane.b32.xlu0 %v1068, 124
        %v1148 = vpop.permute.xlu0 %1147
        %1149 = vrot.lane.b32.xlu0 %v1069, 124
        %v1150 = vpop.permute.xlu0 %1149
        %1151 = vrot.lane.b32.xlu0 %v1070, 124
        %v1152 = vpop.permute.xlu0 %1151
        %1153 = vrot.lane.b32.xlu0 %v1071, 124
        %v1154 = vpop.permute.xlu0 %1153
        %1155 = vrot.lane.b32.xlu0 %v1072, 124
        %v1156 = vpop.permute.xlu0 %1155
        %1157 = vrot.lane.b32.xlu0 %v1073, 124
        %v1158 = vpop.permute.xlu0 %1157
        %1159 = vrot.lane.b32.xlu0 %v1074, 124
        %v1160 = vpop.permute.xlu0 %1159
        %1161 = vrot.lane.b32.xlu0 %v1075, 124
        %v1162 = vpop.permute.xlu0 %1161
        %1163 = vrot.lane.b32.xlu0 %v1076, 124
        %v1164 = vpop.permute.xlu0 %1163
        %1165 = vrot.lane.b32.xlu0 %v1077, 124
        %v1166 = vpop.permute.xlu0 %1165
        %1167 = vrot.lane.b32.xlu0 %v1078, 124
        %v1168 = vpop.permute.xlu0 %1167
        %1169 = vrot.lane.b32.xlu0 %v1079, 124
        %v1170 = vpop.permute.xlu0 %1169
        %1171 = vrot.lane.b32.xlu0 %v1080, 124
        %v1172 = vpop.permute.xlu0 %1171
        %1173 = vrot.lane.b32.xlu0 %v1081, 124
        %v1174 = vpop.permute.xlu0 %1173
        %1175 = vrot.lane.b32.xlu0 %v1082, 124
        %v1176 = vpop.permute.xlu0 %1175
        %1177 = vrot.lane.b32.xlu0 %v1083, 124
        %v1178 = vpop.permute.xlu0 %1177
        %1179 = vrot.lane.b32.xlu0 %v1084, 124
        %v1180 = vpop.permute.xlu0 %1179
        %v1181 = vsel %vm816, %v1118, %v1120
        %v1182 = vsel %vm816, %v1122, %v1124
        %v1183 = vsel %vm816, %v1126, %v1128
        %v1184 = vsel %vm816, %v1130, %v1132
        %v1185 = vsel %vm816, %v1134, %v1136
        %v1186 = vsel %vm816, %v1138, %v1140
        %v1187 = vsel %vm816, %v1142, %v1144
        %v1188 = vsel %vm816, %v1146, %v1148
        %v1189 = vsel %vm816, %v1150, %v1152
        %v1190 = vsel %vm816, %v1154, %v1156
        %v1191 = vsel %vm816, %v1158, %v1160
        %v1192 = vsel %vm816, %v1162, %v1164
        %v1193 = vsel %vm816, %v1166, %v1168
        %v1194 = vsel %vm816, %v1170, %v1172
        %v1195 = vsel %vm816, %v1174, %v1176
        %v1196 = vsel %vm816, %v1178, %v1180
        %v1213 = vadd.f32 %v1031, %v1181
        %v1214 = vadd.f32 %v1032, %v1182
        %v1215 = vadd.f32 %v1033, %v1183
        %v1216 = vadd.f32 %v1034, %v1184
        %v1217 = vadd.f32 %v1035, %v1185
        %v1218 = vadd.f32 %v1036, %v1186
        %v1219 = vadd.f32 %v1037, %v1187
        %v1220 = vadd.f32 %v1038, %v1188
        %v1221 = vadd.f32 %v1039, %v1189
        %v1222 = vadd.f32 %v1040, %v1190
        %v1223 = vadd.f32 %v1041, %v1191
        %v1224 = vadd.f32 %v1042, %v1192
        %v1225 = vadd.f32 %v1043, %v1193
        %v1226 = vadd.f32 %v1044, %v1194
        %v1227 = vadd.f32 %v1045, %v1195
        %v1228 = vadd.f32 %v1046, %v1196
        %v1229 = vld [vmem:[%s1 + $0x2] sm:$0x1]
        %v1230 = vperm.slane %v1229, 0
        %1232 = vrot.lane.b32.xlu0 %v1230, 8
        %v1233 = vpop.permute.xlu0 %1232
        %v1235 = vmul.f32 %v530, %v1233
        %v1236 = vmul.f32 %v658, %v1233
        %v1237 = vmul.f32 %v531, %v1233
        %v1238 = vmul.f32 %v659, %v1233
        %v1239 = vmul.f32 %v532, %v1233
        %v1240 = vmul.f32 %v660, %v1233
        %v1241 = vmul.f32 %v533, %v1233
        %v1242 = vmul.f32 %v661, %v1233
        %v1243 = vmul.f32 %v534, %v1233
        %v1244 = vmul.f32 %v662, %v1233
        %v1245 = vmul.f32 %v535, %v1233
        %v1246 = vmul.f32 %v663, %v1233
        %v1247 = vmul.f32 %v536, %v1233
        %v1248 = vmul.f32 %v664, %v1233
        %v1249 = vmul.f32 %v537, %v1233
        %v1250 = vmul.f32 %v665, %v1233
        %v1251 = vmul.f32 %v538, %v1233
        %v1252 = vmul.f32 %v666, %v1233
        %v1253 = vmul.f32 %v539, %v1233
        %v1254 = vmul.f32 %v667, %v1233
        %v1255 = vmul.f32 %v540, %v1233
        %v1256 = vmul.f32 %v668, %v1233
        %v1257 = vmul.f32 %v541, %v1233
        %v1258 = vmul.f32 %v669, %v1233
        %v1259 = vmul.f32 %v542, %v1233
        %v1260 = vmul.f32 %v670, %v1233
        %v1261 = vmul.f32 %v543, %v1233
        %v1262 = vmul.f32 %v671, %v1233
        %v1263 = vmul.f32 %v544, %v1233
        %v1264 = vmul.f32 %v672, %v1233
        %v1265 = vmul.f32 %v545, %v1233
        %v1266 = vmul.f32 %v673, %v1233
        %1299 = vrot.lane.b32.xlu0 %v1235, 120
        %v1300 = vpop.permute.xlu0 %1299
        %1301 = vrot.lane.b32.xlu0 %v1236, 120
        %v1302 = vpop.permute.xlu0 %1301
        %1303 = vrot.lane.b32.xlu0 %v1237, 120
        %v1304 = vpop.permute.xlu0 %1303
        %1305 = vrot.lane.b32.xlu0 %v1238, 120
        %v1306 = vpop.permute.xlu0 %1305
        %1307 = vrot.lane.b32.xlu0 %v1239, 120
        %v1308 = vpop.permute.xlu0 %1307
        %1309 = vrot.lane.b32.xlu0 %v1240, 120
        %v1310 = vpop.permute.xlu0 %1309
        %1311 = vrot.lane.b32.xlu0 %v1241, 120
        %v1312 = vpop.permute.xlu0 %1311
        %1313 = vrot.lane.b32.xlu0 %v1242, 120
        %v1314 = vpop.permute.xlu0 %1313
        %1315 = vrot.lane.b32.xlu0 %v1243, 120
        %v1316 = vpop.permute.xlu0 %1315
        %1317 = vrot.lane.b32.xlu0 %v1244, 120
        %v1318 = vpop.permute.xlu0 %1317
        %1319 = vrot.lane.b32.xlu0 %v1245, 120
        %v1320 = vpop.permute.xlu0 %1319
        %1321 = vrot.lane.b32.xlu0 %v1246, 120
        %v1322 = vpop.permute.xlu0 %1321
        %1323 = vrot.lane.b32.xlu0 %v1247, 120
        %v1324 = vpop.permute.xlu0 %1323
        %1325 = vrot.lane.b32.xlu0 %v1248, 120
        %v1326 = vpop.permute.xlu0 %1325
        %1327 = vrot.lane.b32.xlu0 %v1249, 120
        %v1328 = vpop.permute.xlu0 %1327
        %1329 = vrot.lane.b32.xlu0 %v1250, 120
        %v1330 = vpop.permute.xlu0 %1329
        %1331 = vrot.lane.b32.xlu0 %v1251, 120
        %v1332 = vpop.permute.xlu0 %1331
        %1333 = vrot.lane.b32.xlu0 %v1252, 120
        %v1334 = vpop.permute.xlu0 %1333
        %1335 = vrot.lane.b32.xlu0 %v1253, 120
        %v1336 = vpop.permute.xlu0 %1335
        %1337 = vrot.lane.b32.xlu0 %v1254, 120
        %v1338 = vpop.permute.xlu0 %1337
        %1339 = vrot.lane.b32.xlu0 %v1255, 120
        %v1340 = vpop.permute.xlu0 %1339
        %1341 = vrot.lane.b32.xlu0 %v1256, 120
        %v1342 = vpop.permute.xlu0 %1341
        %1343 = vrot.lane.b32.xlu0 %v1257, 120
        %v1344 = vpop.permute.xlu0 %1343
        %1345 = vrot.lane.b32.xlu0 %v1258, 120
        %v1346 = vpop.permute.xlu0 %1345
        %1347 = vrot.lane.b32.xlu0 %v1259, 120
        %v1348 = vpop.permute.xlu0 %1347
        %1349 = vrot.lane.b32.xlu0 %v1260, 120
        %v1350 = vpop.permute.xlu0 %1349
        %1351 = vrot.lane.b32.xlu0 %v1261, 120
        %v1352 = vpop.permute.xlu0 %1351
        %1353 = vrot.lane.b32.xlu0 %v1262, 120
        %v1354 = vpop.permute.xlu0 %1353
        %1355 = vrot.lane.b32.xlu0 %v1263, 120
        %v1356 = vpop.permute.xlu0 %1355
        %1357 = vrot.lane.b32.xlu0 %v1264, 120
        %v1358 = vpop.permute.xlu0 %1357
        %1359 = vrot.lane.b32.xlu0 %v1265, 120
        %v1360 = vpop.permute.xlu0 %1359
        %1361 = vrot.lane.b32.xlu0 %v1266, 120
        %v1362 = vpop.permute.xlu0 %1361
        %vm1363 = vcmask 982016
        %v1364 = vsel %vm1363, %v1300, %v1302
        %v1365 = vsel %vm1363, %v1304, %v1306
        %v1366 = vsel %vm1363, %v1308, %v1310
        %v1367 = vsel %vm1363, %v1312, %v1314
        %v1368 = vsel %vm1363, %v1316, %v1318
        %v1369 = vsel %vm1363, %v1320, %v1322
        %v1370 = vsel %vm1363, %v1324, %v1326
        %v1371 = vsel %vm1363, %v1328, %v1330
        %v1372 = vsel %vm1363, %v1332, %v1334
        %v1373 = vsel %vm1363, %v1336, %v1338
        %v1374 = vsel %vm1363, %v1340, %v1342
        %v1375 = vsel %vm1363, %v1344, %v1346
        %v1376 = vsel %vm1363, %v1348, %v1350
        %v1377 = vsel %vm1363, %v1352, %v1354
        %v1378 = vsel %vm1363, %v1356, %v1358
        %v1379 = vsel %vm1363, %v1360, %v1362
        %v1396 = vadd.f32 %v1213, %v1364
        %v1397 = vadd.f32 %v1214, %v1365
        %v1398 = vadd.f32 %v1215, %v1366
        %v1399 = vadd.f32 %v1216, %v1367
        %v1400 = vadd.f32 %v1217, %v1368
        %v1401 = vadd.f32 %v1218, %v1369
        %v1402 = vadd.f32 %v1219, %v1370
        %v1403 = vadd.f32 %v1220, %v1371
        %v1404 = vadd.f32 %v1221, %v1372
        %v1405 = vadd.f32 %v1222, %v1373
        %v1406 = vadd.f32 %v1223, %v1374
        %v1407 = vadd.f32 %v1224, %v1375
        %v1408 = vadd.f32 %v1225, %v1376
        %v1409 = vadd.f32 %v1226, %v1377
        %v1410 = vadd.f32 %v1227, %v1378
        %v1411 = vadd.f32 %v1228, %v1379
        %v1412 = vld [vmem:[%s588 + $0x2] sm:$0x1]
        %v1413 = vperm.slane %v1412, 0
        %1415 = vrot.lane.b32.xlu0 %v1413, 8
        %v1416 = vpop.permute.xlu0 %1415
        %v1418 = vmul.f32 %v534, %v1416
        %v1419 = vmul.f32 %v662, %v1416
        %v1420 = vmul.f32 %v535, %v1416
        %v1421 = vmul.f32 %v663, %v1416
        %v1422 = vmul.f32 %v536, %v1416
        %v1423 = vmul.f32 %v664, %v1416
        %v1424 = vmul.f32 %v537, %v1416
        %v1425 = vmul.f32 %v665, %v1416
        %v1426 = vmul.f32 %v538, %v1416
        %v1427 = vmul.f32 %v666, %v1416
        %v1428 = vmul.f32 %v539, %v1416
        %v1429 = vmul.f32 %v667, %v1416
        %v1430 = vmul.f32 %v540, %v1416
        %v1431 = vmul.f32 %v668, %v1416
        %v1432 = vmul.f32 %v541, %v1416
        %v1433 = vmul.f32 %v669, %v1416
        %v1434 = vmul.f32 %v542, %v1416
        %v1435 = vmul.f32 %v670, %v1416
        %v1436 = vmul.f32 %v543, %v1416
        %v1437 = vmul.f32 %v671, %v1416
        %v1438 = vmul.f32 %v544, %v1416
        %v1439 = vmul.f32 %v672, %v1416
        %v1440 = vmul.f32 %v545, %v1416
        %v1441 = vmul.f32 %v673, %v1416
        %v1442 = vmul.f32 %v546, %v1416
        %v1443 = vmul.f32 %v674, %v1416
        %v1444 = vmul.f32 %v547, %v1416
        %v1445 = vmul.f32 %v675, %v1416
        %v1446 = vmul.f32 %v548, %v1416
        %v1447 = vmul.f32 %v676, %v1416
        %v1448 = vmul.f32 %v549, %v1416
        %v1449 = vmul.f32 %v677, %v1416
        %1482 = vrot.lane.b32.xlu0 %v1418, 120
        %v1483 = vpop.permute.xlu0 %1482
        %1484 = vrot.lane.b32.xlu0 %v1419, 120
        %v1485 = vpop.permute.xlu0 %1484
        %1486 = vrot.lane.b32.xlu0 %v1420, 120
        %v1487 = vpop.permute.xlu0 %1486
        %1488 = vrot.lane.b32.xlu0 %v1421, 120
        %v1489 = vpop.permute.xlu0 %1488
        %1490 = vrot.lane.b32.xlu0 %v1422, 120
        %v1491 = vpop.permute.xlu0 %1490
        %1492 = vrot.lane.b32.xlu0 %v1423, 120
        %v1493 = vpop.permute.xlu0 %1492
        %1494 = vrot.lane.b32.xlu0 %v1424, 120
        %v1495 = vpop.permute.xlu0 %1494
        %1496 = vrot.lane.b32.xlu0 %v1425, 120
        %v1497 = vpop.permute.xlu0 %1496
        %1498 = vrot.lane.b32.xlu0 %v1426, 120
        %v1499 = vpop.permute.xlu0 %1498
        %1500 = vrot.lane.b32.xlu0 %v1427, 120
        %v1501 = vpop.permute.xlu0 %1500
        %1502 = vrot.lane.b32.xlu0 %v1428, 120
        %v1503 = vpop.permute.xlu0 %1502
        %1504 = vrot.lane.b32.xlu0 %v1429, 120
        %v1505 = vpop.permute.xlu0 %1504
        %1506 = vrot.lane.b32.xlu0 %v1430, 120
        %v1507 = vpop.permute.xlu0 %1506
        %1508 = vrot.lane.b32.xlu0 %v1431, 120
        %v1509 = vpop.permute.xlu0 %1508
        %1510 = vrot.lane.b32.xlu0 %v1432, 120
        %v1511 = vpop.permute.xlu0 %1510
        %1512 = vrot.lane.b32.xlu0 %v1433, 120
        %v1513 = vpop.permute.xlu0 %1512
        %1514 = vrot.lane.b32.xlu0 %v1434, 120
        %v1515 = vpop.permute.xlu0 %1514
        %1516 = vrot.lane.b32.xlu0 %v1435, 120
        %v1517 = vpop.permute.xlu0 %1516
        %1518 = vrot.lane.b32.xlu0 %v1436, 120
        %v1519 = vpop.permute.xlu0 %1518
        %1520 = vrot.lane.b32.xlu0 %v1437, 120
        %v1521 = vpop.permute.xlu0 %1520
        %1522 = vrot.lane.b32.xlu0 %v1438, 120
        %v1523 = vpop.permute.xlu0 %1522
        %1524 = vrot.lane.b32.xlu0 %v1439, 120
        %v1525 = vpop.permute.xlu0 %1524
        %1526 = vrot.lane.b32.xlu0 %v1440, 120
        %v1527 = vpop.permute.xlu0 %1526
        %1528 = vrot.lane.b32.xlu0 %v1441, 120
        %v1529 = vpop.permute.xlu0 %1528
        %1530 = vrot.lane.b32.xlu0 %v1442, 120
        %v1531 = vpop.permute.xlu0 %1530
        %1532 = vrot.lane.b32.xlu0 %v1443, 120
        %v1533 = vpop.permute.xlu0 %1532
        %1534 = vrot.lane.b32.xlu0 %v1444, 120
        %v1535 = vpop.permute.xlu0 %1534
        %1536 = vrot.lane.b32.xlu0 %v1445, 120
        %v1537 = vpop.permute.xlu0 %1536
        %1538 = vrot.lane.b32.xlu0 %v1446, 120
        %v1539 = vpop.permute.xlu0 %1538
        %1540 = vrot.lane.b32.xlu0 %v1447, 120
        %v1541 = vpop.permute.xlu0 %1540
        %1542 = vrot.lane.b32.xlu0 %v1448, 120
        %v1543 = vpop.permute.xlu0 %1542
        %1544 = vrot.lane.b32.xlu0 %v1449, 120
        %v1545 = vpop.permute.xlu0 %1544
        %v1546 = vsel %vm1363, %v1483, %v1485
        %v1547 = vsel %vm1363, %v1487, %v1489
        %v1548 = vsel %vm1363, %v1491, %v1493
        %v1549 = vsel %vm1363, %v1495, %v1497
        %v1550 = vsel %vm1363, %v1499, %v1501
        %v1551 = vsel %vm1363, %v1503, %v1505
        %v1552 = vsel %vm1363, %v1507, %v1509
        %v1553 = vsel %vm1363, %v1511, %v1513
        %v1554 = vsel %vm1363, %v1515, %v1517
        %v1555 = vsel %vm1363, %v1519, %v1521
        %v1556 = vsel %vm1363, %v1523, %v1525
        %v1557 = vsel %vm1363, %v1527, %v1529
        %v1558 = vsel %vm1363, %v1531, %v1533
        %v1559 = vsel %vm1363, %v1535, %v1537
        %v1560 = vsel %vm1363, %v1539, %v1541
        %v1561 = vsel %vm1363, %v1543, %v1545
        %v1578 = vadd.f32 %v1396, %v1546
        %v1579 = vadd.f32 %v1397, %v1547
        %v1580 = vadd.f32 %v1398, %v1548
        %v1581 = vadd.f32 %v1399, %v1549
        %v1582 = vadd.f32 %v1400, %v1550
        %v1583 = vadd.f32 %v1401, %v1551
        %v1584 = vadd.f32 %v1402, %v1552
        %v1585 = vadd.f32 %v1403, %v1553
        %v1586 = vadd.f32 %v1404, %v1554
        %v1587 = vadd.f32 %v1405, %v1555
        %v1588 = vadd.f32 %v1406, %v1556
        %v1589 = vadd.f32 %v1407, %v1557
        %v1590 = vadd.f32 %v1408, %v1558
        %v1591 = vadd.f32 %v1409, %v1559
        %v1592 = vadd.f32 %v1410, %v1560
        %v1593 = vadd.f32 %v1411, %v1561
        %v1594 = vld [vmem:[%s623 + $0x2] sm:$0x1]
        %v1595 = vperm.slane %v1594, 0
        %1597 = vrot.lane.b32.xlu0 %v1595, 8
        %v1598 = vpop.permute.xlu0 %1597
        %v1600 = vmul.f32 %v538, %v1598
        %v1601 = vmul.f32 %v666, %v1598
        %v1602 = vmul.f32 %v539, %v1598
        %v1603 = vmul.f32 %v667, %v1598
        %v1604 = vmul.f32 %v540, %v1598
        %v1605 = vmul.f32 %v668, %v1598
        %v1606 = vmul.f32 %v541, %v1598
        %v1607 = vmul.f32 %v669, %v1598
        %v1608 = vmul.f32 %v542, %v1598
        %v1609 = vmul.f32 %v670, %v1598
        %v1610 = vmul.f32 %v543, %v1598
        %v1611 = vmul.f32 %v671, %v1598
        %v1612 = vmul.f32 %v544, %v1598
        %v1613 = vmul.f32 %v672, %v1598
        %v1614 = vmul.f32 %v545, %v1598
        %v1615 = vmul.f32 %v673, %v1598
        %v1616 = vmul.f32 %v546, %v1598
        %v1617 = vmul.f32 %v674, %v1598
        %v1618 = vmul.f32 %v547, %v1598
        %v1619 = vmul.f32 %v675, %v1598
        %v1620 = vmul.f32 %v548, %v1598
        %v1621 = vmul.f32 %v676, %v1598
        %v1622 = vmul.f32 %v549, %v1598
        %v1623 = vmul.f32 %v677, %v1598
        %v1624 = vmul.f32 %v550, %v1598
        %v1625 = vmul.f32 %v678, %v1598
        %v1626 = vmul.f32 %v551, %v1598
        %v1627 = vmul.f32 %v679, %v1598
        %v1628 = vmul.f32 %v552, %v1598
        %v1629 = vmul.f32 %v680, %v1598
        %v1630 = vmul.f32 %v553, %v1598
        %v1631 = vmul.f32 %v681, %v1598
        %1664 = vrot.lane.b32.xlu0 %v1600, 120
        %v1665 = vpop.permute.xlu0 %1664
        %1666 = vrot.lane.b32.xlu0 %v1601, 120
        %v1667 = vpop.permute.xlu0 %1666
        %1668 = vrot.lane.b32.xlu0 %v1602, 120
        %v1669 = vpop.permute.xlu0 %1668
        %1670 = vrot.lane.b32.xlu0 %v1603, 120
        %v1671 = vpop.permute.xlu0 %1670
        %1672 = vrot.lane.b32.xlu0 %v1604, 120
        %v1673 = vpop.permute.xlu0 %1672
        %1674 = vrot.lane.b32.xlu0 %v1605, 120
        %v1675 = vpop.permute.xlu0 %1674
        %1676 = vrot.lane.b32.xlu0 %v1606, 120
        %v1677 = vpop.permute.xlu0 %1676
        %1678 = vrot.lane.b32.xlu0 %v1607, 120
        %v1679 = vpop.permute.xlu0 %1678
        %1680 = vrot.lane.b32.xlu0 %v1608, 120
        %v1681 = vpop.permute.xlu0 %1680
        %1682 = vrot.lane.b32.xlu0 %v1609, 120
        %v1683 = vpop.permute.xlu0 %1682
        %1684 = vrot.lane.b32.xlu0 %v1610, 120
        %v1685 = vpop.permute.xlu0 %1684
        %1686 = vrot.lane.b32.xlu0 %v1611, 120
        %v1687 = vpop.permute.xlu0 %1686
        %1688 = vrot.lane.b32.xlu0 %v1612, 120
        %v1689 = vpop.permute.xlu0 %1688
        %1690 = vrot.lane.b32.xlu0 %v1613, 120
        %v1691 = vpop.permute.xlu0 %1690
        %1692 = vrot.lane.b32.xlu0 %v1614, 120
        %v1693 = vpop.permute.xlu0 %1692
        %1694 = vrot.lane.b32.xlu0 %v1615, 120
        %v1695 = vpop.permute.xlu0 %1694
        %1696 = vrot.lane.b32.xlu0 %v1616, 120
        %v1697 = vpop.permute.xlu0 %1696
        %1698 = vrot.lane.b32.xlu0 %v1617, 120
        %v1699 = vpop.permute.xlu0 %1698
        %1700 = vrot.lane.b32.xlu0 %v1618, 120
        %v1701 = vpop.permute.xlu0 %1700
        %1702 = vrot.lane.b32.xlu0 %v1619, 120
        %v1703 = vpop.permute.xlu0 %1702
        %1704 = vrot.lane.b32.xlu0 %v1620, 120
        %v1705 = vpop.permute.xlu0 %1704
        %1706 = vrot.lane.b32.xlu0 %v1621, 120
        %v1707 = vpop.permute.xlu0 %1706
        %1708 = vrot.lane.b32.xlu0 %v1622, 120
        %v1709 = vpop.permute.xlu0 %1708
        %1710 = vrot.lane.b32.xlu0 %v1623, 120
        %v1711 = vpop.permute.xlu0 %1710
        %1712 = vrot.lane.b32.xlu0 %v1624, 120
        %v1713 = vpop.permute.xlu0 %1712
        %1714 = vrot.lane.b32.xlu0 %v1625, 120
        %v1715 = vpop.permute.xlu0 %1714
        %1716 = vrot.lane.b32.xlu0 %v1626, 120
        %v1717 = vpop.permute.xlu0 %1716
        %1718 = vrot.lane.b32.xlu0 %v1627, 120
        %v1719 = vpop.permute.xlu0 %1718
        %1720 = vrot.lane.b32.xlu0 %v1628, 120
        %v1721 = vpop.permute.xlu0 %1720
        %1722 = vrot.lane.b32.xlu0 %v1629, 120
        %v1723 = vpop.permute.xlu0 %1722
        %1724 = vrot.lane.b32.xlu0 %v1630, 120
        %v1725 = vpop.permute.xlu0 %1724
        %1726 = vrot.lane.b32.xlu0 %v1631, 120
        %v1727 = vpop.permute.xlu0 %1726
        %v1728 = vsel %vm1363, %v1665, %v1667
        %v1729 = vsel %vm1363, %v1669, %v1671
        %v1730 = vsel %vm1363, %v1673, %v1675
        %v1731 = vsel %vm1363, %v1677, %v1679
        %v1732 = vsel %vm1363, %v1681, %v1683
        %v1733 = vsel %vm1363, %v1685, %v1687
        %v1734 = vsel %vm1363, %v1689, %v1691
        %v1735 = vsel %vm1363, %v1693, %v1695
        %v1736 = vsel %vm1363, %v1697, %v1699
        %v1737 = vsel %vm1363, %v1701, %v1703
        %v1738 = vsel %vm1363, %v1705, %v1707
        %v1739 = vsel %vm1363, %v1709, %v1711
        %v1740 = vsel %vm1363, %v1713, %v1715
        %v1741 = vsel %vm1363, %v1717, %v1719
        %v1742 = vsel %vm1363, %v1721, %v1723
        %v1743 = vsel %vm1363, %v1725, %v1727
        %v1760 = vadd.f32 %v1578, %v1728
        %v1761 = vadd.f32 %v1579, %v1729
        %v1762 = vadd.f32 %v1580, %v1730
        %v1763 = vadd.f32 %v1581, %v1731
        %v1764 = vadd.f32 %v1582, %v1732
        %v1765 = vadd.f32 %v1583, %v1733
        %v1766 = vadd.f32 %v1584, %v1734
        %v1767 = vadd.f32 %v1585, %v1735
        %v1768 = vadd.f32 %v1586, %v1736
        %v1769 = vadd.f32 %v1587, %v1737
        %v1770 = vadd.f32 %v1588, %v1738
        %v1771 = vadd.f32 %v1589, %v1739
        %v1772 = vadd.f32 %v1590, %v1740
        %v1773 = vadd.f32 %v1591, %v1741
        %v1774 = vadd.f32 %v1592, %v1742
        %v1775 = vadd.f32 %v1593, %v1743
        %v1776 = vld [vmem:[#allocation2] sm:$0xfe]
        %v1777 = vld [vmem:[#allocation2 + $0x20] sm:$0x1]
        %v1778 = vld [vmem:[#allocation2 + $0x30] sm:$0xfe]
        %v1779 = vld [vmem:[#allocation2 + $0x50] sm:$0x1]
        %v1780 = vld [vmem:[#allocation2 + $0x60] sm:$0xfe]
        %v1781 = vld [vmem:[#allocation2 + $0x80] sm:$0x1]
        %v1782 = vld [vmem:[#allocation2 + $0x90] sm:$0xfe]
        %v1783 = vld [vmem:[#allocation2 + $0xb0] sm:$0x1]
        %v1784 = vld [vmem:[#allocation2 + $0xc0] sm:$0xfe]
        %v1785 = vld [vmem:[#allocation2 + $0xe0] sm:$0x1]
        %v1786 = vld [vmem:[#allocation2 + $0xf0] sm:$0xfe]
        %v1787 = vld [vmem:[#allocation2 + $0x110] sm:$0x1]
        %v1788 = vld [vmem:[#allocation2 + $0x120] sm:$0xfe]
        %v1789 = vld [vmem:[#allocation2 + $0x140] sm:$0x1]
        %v1790 = vld [vmem:[#allocation2 + $0x150] sm:$0xfe]
        %v1791 = vld [vmem:[#allocation2 + $0x170] sm:$0x1]
        %v1792 = vld [vmem:[#allocation2 + $0x180] sm:$0xfe]
        %v1793 = vld [vmem:[#allocation2 + $0x1a0] sm:$0x1]
        %v1794 = vld [vmem:[#allocation2 + $0x1b0] sm:$0xfe]
        %v1795 = vld [vmem:[#allocation2 + $0x1d0] sm:$0x1]
        %v1796 = vld [vmem:[#allocation2 + $0x1e0] sm:$0xfe]
        %v1797 = vld [vmem:[#allocation2 + $0x200] sm:$0x1]
        %v1798 = vld [vmem:[#allocation2 + $0x210] sm:$0xfe]
        %v1799 = vld [vmem:[#allocation2 + $0x230] sm:$0x1]
        %s1800 = scalar_lea.vmem %s1, 4
        %v1801 = vld [vmem:[%s1800] sm:$0x1]
        %v1802 = vperm.slane %v1801, 0
        %v1803 = vmul.f32 %v1776, %v1802
        %v1804 = vmul.f32 %v531, %v1802
        %v1805 = vmul.f32 %v1777, %v1802
        %v1806 = vmul.f32 %v1778, %v1802
        %v1807 = vmul.f32 %v533, %v1802
        %v1808 = vmul.f32 %v1779, %v1802
        %v1809 = vmul.f32 %v1780, %v1802
        %v1810 = vmul.f32 %v535, %v1802
        %v1811 = vmul.f32 %v1781, %v1802
        %v1812 = vmul.f32 %v1782, %v1802
        %v1813 = vmul.f32 %v537, %v1802
        %v1814 = vmul.f32 %v1783, %v1802
        %v1815 = vmul.f32 %v1784, %v1802
        %v1816 = vmul.f32 %v539, %v1802
        %v1817 = vmul.f32 %v1785, %v1802
        %v1818 = vmul.f32 %v1786, %v1802
        %v1819 = vmul.f32 %v541, %v1802
        %v1820 = vmul.f32 %v1787, %v1802
        %v1821 = vmul.f32 %v1788, %v1802
        %v1822 = vmul.f32 %v543, %v1802
        %v1823 = vmul.f32 %v1789, %v1802
        %v1824 = vmul.f32 %v1790, %v1802
        %v1825 = vmul.f32 %v545, %v1802
        %v1826 = vmul.f32 %v1791, %v1802
        %vm1851 = vcmask 1046528
        %v1852 = vrot.slane %v1803, 1
        %v1853 = vrot.slane %v1804, 1
        %v1854 = vsel %vm1851, %v1852, %v1853
        %v1855 = vrot.slane %v1805, 1
        %v1856 = vsel %vm1851, %v1853, %v1855
        %v1857 = vrot.slane %v1806, 1
        %v1858 = vrot.slane %v1807, 1
        %v1859 = vsel %vm1851, %v1857, %v1858
        %v1860 = vrot.slane %v1808, 1
        %v1861 = vsel %vm1851, %v1858, %v1860
        %v1862 = vrot.slane %v1809, 1
        %v1863 = vrot.slane %v1810, 1
        %v1864 = vsel %vm1851, %v1862, %v1863
        %v1865 = vrot.slane %v1811, 1
        %v1866 = vsel %vm1851, %v1863, %v1865
        %v1867 = vrot.slane %v1812, 1
        %v1868 = vrot.slane %v1813, 1
        %v1869 = vsel %vm1851, %v1867, %v1868
        %v1870 = vrot.slane %v1814, 1
        %v1871 = vsel %vm1851, %v1868, %v1870
        %v1872 = vrot.slane %v1815, 1
        %v1873 = vrot.slane %v1816, 1
        %v1874 = vsel %vm1851, %v1872, %v1873
        %v1875 = vrot.slane %v1817, 1
        %v1876 = vsel %vm1851, %v1873, %v1875
        %v1877 = vrot.slane %v1818, 1
        %v1878 = vrot.slane %v1819, 1
        %v1879 = vsel %vm1851, %v1877, %v1878
        %v1880 = vrot.slane %v1820, 1
        %v1881 = vsel %vm1851, %v1878, %v1880
        %v1882 = vrot.slane %v1821, 1
        %v1883 = vrot.slane %v1822, 1
        %v1884 = vsel %vm1851, %v1882, %v1883
        %v1885 = vrot.slane %v1823, 1
        %v1886 = vsel %vm1851, %v1883, %v1885
        %v1887 = vrot.slane %v1824, 1
        %v1888 = vrot.slane %v1825, 1
        %v1889 = vsel %vm1851, %v1887, %v1888
        %v1890 = vrot.slane %v1826, 1
        %v1891 = vsel %vm1851, %v1888, %v1890
        %v1908 = vadd.f32 %v1760, %v1854
        %v1909 = vadd.f32 %v1761, %v1856
        %v1910 = vadd.f32 %v1762, %v1859
        %v1911 = vadd.f32 %v1763, %v1861
        %v1912 = vadd.f32 %v1764, %v1864
        %v1913 = vadd.f32 %v1765, %v1866
        %v1914 = vadd.f32 %v1766, %v1869
        %v1915 = vadd.f32 %v1767, %v1871
        %v1916 = vadd.f32 %v1768, %v1874
        %v1917 = vadd.f32 %v1769, %v1876
        %v1918 = vadd.f32 %v1770, %v1879
        %v1919 = vadd.f32 %v1771, %v1881
        %v1920 = vadd.f32 %v1772, %v1884
        %v1921 = vadd.f32 %v1773, %v1886
        %v1922 = vadd.f32 %v1774, %v1889
        %v1923 = vadd.f32 %v1775, %v1891
        %s1924 = scalar_lea.vmem %s1, 16
        %v1925 = vld [vmem:[%s1924] sm:$0x1]
        %v1926 = vperm.slane %v1925, 0
        %v1927 = vmul.f32 %v1780, %v1926
        %v1928 = vmul.f32 %v535, %v1926
        %v1929 = vmul.f32 %v1781, %v1926
        %v1930 = vmul.f32 %v1782, %v1926
        %v1931 = vmul.f32 %v537, %v1926
        %v1932 = vmul.f32 %v1783, %v1926
        %v1933 = vmul.f32 %v1784, %v1926
        %v1934 = vmul.f32 %v539, %v1926
        %v1935 = vmul.f32 %v1785, %v1926
        %v1936 = vmul.f32 %v1786, %v1926
        %v1937 = vmul.f32 %v541, %v1926
        %v1938 = vmul.f32 %v1787, %v1926
        %v1939 = vmul.f32 %v1788, %v1926
        %v1940 = vmul.f32 %v543, %v1926
        %v1941 = vmul.f32 %v1789, %v1926
        %v1942 = vmul.f32 %v1790, %v1926
        %v1943 = vmul.f32 %v545, %v1926
        %v1944 = vmul.f32 %v1791, %v1926
        %v1945 = vmul.f32 %v1792, %v1926
        %v1946 = vmul.f32 %v547, %v1926
        %v1947 = vmul.f32 %v1793, %v1926
        %v1948 = vmul.f32 %v1794, %v1926
        %v1949 = vmul.f32 %v549, %v1926
        %v1950 = vmul.f32 %v1795, %v1926
        %v1975 = vrot.slane %v1927, 1
        %v1976 = vrot.slane %v1928, 1
        %v1977 = vsel %vm1851, %v1975, %v1976
        %v1978 = vrot.slane %v1929, 1
        %v1979 = vsel %vm1851, %v1976, %v1978
        %v1980 = vrot.slane %v1930, 1
        %v1981 = vrot.slane %v1931, 1
        %v1982 = vsel %vm1851, %v1980, %v1981
        %v1983 = vrot.slane %v1932, 1
        %v1984 = vsel %vm1851, %v1981, %v1983
        %v1985 = vrot.slane %v1933, 1
        %v1986 = vrot.slane %v1934, 1
        %v1987 = vsel %vm1851, %v1985, %v1986
        %v1988 = vrot.slane %v1935, 1
        %v1989 = vsel %vm1851, %v1986, %v1988
        %v1990 = vrot.slane %v1936, 1
        %v1991 = vrot.slane %v1937, 1
        %v1992 = vsel %vm1851, %v1990, %v1991
        %v1993 = vrot.slane %v1938, 1
        %v1994 = vsel %vm1851, %v1991, %v1993
        %v1995 = vrot.slane %v1939, 1
        %v1996 = vrot.slane %v1940, 1
        %v1997 = vsel %vm1851, %v1995, %v1996
        %v1998 = vrot.slane %v1941, 1
        %v1999 = vsel %vm1851, %v1996, %v1998
        %v2000 = vrot.slane %v1942, 1
        %v2001 = vrot.slane %v1943, 1
        %v2002 = vsel %vm1851, %v2000, %v2001
        %v2003 = vrot.slane %v1944, 1
        %v2004 = vsel %vm1851, %v2001, %v2003
        %v2005 = vrot.slane %v1945, 1
        %v2006 = vrot.slane %v1946, 1
        %v2007 = vsel %vm1851, %v2005, %v2006
        %v2008 = vrot.slane %v1947, 1
        %v2009 = vsel %vm1851, %v2006, %v2008
        %v2010 = vrot.slane %v1948, 1
        %v2011 = vrot.slane %v1949, 1
        %v2012 = vsel %vm1851, %v2010, %v2011
        %v2013 = vrot.slane %v1950, 1
        %v2014 = vsel %vm1851, %v2011, %v2013
        %v2031 = vadd.f32 %v1908, %v1977
        %v2032 = vadd.f32 %v1909, %v1979
        %v2033 = vadd.f32 %v1910, %v1982
        %v2034 = vadd.f32 %v1911, %v1984
        %v2035 = vadd.f32 %v1912, %v1987
        %v2036 = vadd.f32 %v1913, %v1989
        %v2037 = vadd.f32 %v1914, %v1992
        %v2038 = vadd.f32 %v1915, %v1994
        %v2039 = vadd.f32 %v1916, %v1997
        %v2040 = vadd.f32 %v1917, %v1999
        %v2041 = vadd.f32 %v1918, %v2002
        %v2042 = vadd.f32 %v1919, %v2004
        %v2043 = vadd.f32 %v1920, %v2007
        %v2044 = vadd.f32 %v1921, %v2009
        %v2045 = vadd.f32 %v1922, %v2012
        %v2046 = vadd.f32 %v1923, %v2014
        %s2047 = scalar_lea.vmem %s1, 28
        %v2048 = vld [vmem:[%s2047] sm:$0x1]
        %v2049 = vperm.slane %v2048, 0
        %v2050 = vmul.f32 %v1784, %v2049
        %v2051 = vmul.f32 %v539, %v2049
        %v2052 = vmul.f32 %v1785, %v2049
        %v2053 = vmul.f32 %v1786, %v2049
        %v2054 = vmul.f32 %v541, %v2049
        %v2055 = vmul.f32 %v1787, %v2049
        %v2056 = vmul.f32 %v1788, %v2049
        %v2057 = vmul.f32 %v543, %v2049
        %v2058 = vmul.f32 %v1789, %v2049
        %v2059 = vmul.f32 %v1790, %v2049
        %v2060 = vmul.f32 %v545, %v2049
        %v2061 = vmul.f32 %v1791, %v2049
        %v2062 = vmul.f32 %v1792, %v2049
        %v2063 = vmul.f32 %v547, %v2049
        %v2064 = vmul.f32 %v1793, %v2049
        %v2065 = vmul.f32 %v1794, %v2049
        %v2066 = vmul.f32 %v549, %v2049
        %v2067 = vmul.f32 %v1795, %v2049
        %v2068 = vmul.f32 %v1796, %v2049
        %v2069 = vmul.f32 %v551, %v2049
        %v2070 = vmul.f32 %v1797, %v2049
        %v2071 = vmul.f32 %v1798, %v2049
        %v2072 = vmul.f32 %v553, %v2049
        %v2073 = vmul.f32 %v1799, %v2049
        %v2098 = vrot.slane %v2050, 1
        %v2099 = vrot.slane %v2051, 1
        %v2100 = vsel %vm1851, %v2098, %v2099
        %v2101 = vrot.slane %v2052, 1
        %v2102 = vsel %vm1851, %v2099, %v2101
        %v2103 = vrot.slane %v2053, 1
        %v2104 = vrot.slane %v2054, 1
        %v2105 = vsel %vm1851, %v2103, %v2104
        %v2106 = vrot.slane %v2055, 1
        %v2107 = vsel %vm1851, %v2104, %v2106
        %v2108 = vrot.slane %v2056, 1
        %v2109 = vrot.slane %v2057, 1
        %v2110 = vsel %vm1851, %v2108, %v2109
        %v2111 = vrot.slane %v2058, 1
        %v2112 = vsel %vm1851, %v2109, %v2111
        %v2113 = vrot.slane %v2059, 1
        %v2114 = vrot.slane %v2060, 1
        %v2115 = vsel %vm1851, %v2113, %v2114
        %v2116 = vrot.slane %v2061, 1
        %v2117 = vsel %vm1851, %v2114, %v2116
        %v2118 = vrot.slane %v2062, 1
        %v2119 = vrot.slane %v2063, 1
        %v2120 = vsel %vm1851, %v2118, %v2119
        %v2121 = vrot.slane %v2064, 1
        %v2122 = vsel %vm1851, %v2119, %v2121
        %v2123 = vrot.slane %v2065, 1
        %v2124 = vrot.slane %v2066, 1
        %v2125 = vsel %vm1851, %v2123, %v2124
        %v2126 = vrot.slane %v2067, 1
        %v2127 = vsel %vm1851, %v2124, %v2126
        %v2128 = vrot.slane %v2068, 1
        %v2129 = vrot.slane %v2069, 1
        %v2130 = vsel %vm1851, %v2128, %v2129
        %v2131 = vrot.slane %v2070, 1
        %v2132 = vsel %vm1851, %v2129, %v2131
        %v2133 = vrot.slane %v2071, 1
        %v2134 = vrot.slane %v2072, 1
        %v2135 = vsel %vm1851, %v2133, %v2134
        %v2136 = vrot.slane %v2073, 1
        %v2137 = vsel %vm1851, %v2134, %v2136
        %v2154 = vadd.f32 %v2031, %v2100
        %v2155 = vadd.f32 %v2032, %v2102
        %v2156 = vadd.f32 %v2033, %v2105
        %v2157 = vadd.f32 %v2034, %v2107
        %v2158 = vadd.f32 %v2035, %v2110
        %v2159 = vadd.f32 %v2036, %v2112
        %v2160 = vadd.f32 %v2037, %v2115
        %v2161 = vadd.f32 %v2038, %v2117
        %v2162 = vadd.f32 %v2039, %v2120
        %v2163 = vadd.f32 %v2040, %v2122
        %v2164 = vadd.f32 %v2041, %v2125
        %v2165 = vadd.f32 %v2042, %v2127
        %v2166 = vadd.f32 %v2043, %v2130
        %v2167 = vadd.f32 %v2044, %v2132
        %v2168 = vadd.f32 %v2045, %v2135
        %v2169 = vadd.f32 %v2046, %v2137
        %v2170 = vld [vmem:[#allocation2 + $0x8] sm:$0xfe]
        %v2171 = vld [vmem:[#allocation2 + $0x28] sm:$0x1]
        %v2172 = vld [vmem:[#allocation2 + $0x38] sm:$0xfe]
        %v2173 = vld [vmem:[#allocation2 + $0x58] sm:$0x1]
        %v2174 = vld [vmem:[#allocation2 + $0x68] sm:$0xfe]
        %v2175 = vld [vmem:[#allocation2 + $0x88] sm:$0x1]
        %v2176 = vld [vmem:[#allocation2 + $0x98] sm:$0xfe]
        %v2177 = vld [vmem:[#allocation2 + $0xb8] sm:$0x1]
        %v2178 = vld [vmem:[#allocation2 + $0xc8] sm:$0xfe]
        %v2179 = vld [vmem:[#allocation2 + $0xe8] sm:$0x1]
        %v2180 = vld [vmem:[#allocation2 + $0xf8] sm:$0xfe]
        %v2181 = vld [vmem:[#allocation2 + $0x118] sm:$0x1]
        %v2182 = vld [vmem:[#allocation2 + $0x128] sm:$0xfe]
        %v2183 = vld [vmem:[#allocation2 + $0x148] sm:$0x1]
        %v2184 = vld [vmem:[#allocation2 + $0x158] sm:$0xfe]
        %v2185 = vld [vmem:[#allocation2 + $0x178] sm:$0x1]
        %v2186 = vld [vmem:[#allocation2 + $0x188] sm:$0xfe]
        %v2187 = vld [vmem:[#allocation2 + $0x1a8] sm:$0x1]
        %v2188 = vld [vmem:[#allocation2 + $0x1b8] sm:$0xfe]
        %v2189 = vld [vmem:[#allocation2 + $0x1d8] sm:$0x1]
        %v2190 = vld [vmem:[#allocation2 + $0x1e8] sm:$0xfe]
        %v2191 = vld [vmem:[#allocation2 + $0x208] sm:$0x1]
        %v2192 = vld [vmem:[#allocation2 + $0x218] sm:$0xfe]
        %v2193 = vld [vmem:[#allocation2 + $0x238] sm:$0x1]
        %v2194 = vld [vmem:[%s1800 + $0x1] sm:$0x1]
        %v2195 = vperm.slane %v2194, 0
        %2197 = vrot.lane.b32.xlu0 %v2195, 4
        %v2198 = vpop.permute.xlu0 %2197
        %v2200 = vmul.f32 %v1776, %v2198
        %v2201 = vmul.f32 %v2170, %v2198
        %v2202 = vmul.f32 %v531, %v2198
        %v2203 = vmul.f32 %v659, %v2198
        %v2204 = vmul.f32 %v1777, %v2198
        %v2205 = vmul.f32 %v2171, %v2198
        %v2206 = vmul.f32 %v1778, %v2198
        %v2207 = vmul.f32 %v2172, %v2198
        %v2208 = vmul.f32 %v533, %v2198
        %v2209 = vmul.f32 %v661, %v2198
        %v2210 = vmul.f32 %v1779, %v2198
        %v2211 = vmul.f32 %v2173, %v2198
        %v2212 = vmul.f32 %v1780, %v2198
        %v2213 = vmul.f32 %v2174, %v2198
        %v2214 = vmul.f32 %v535, %v2198
        %v2215 = vmul.f32 %v663, %v2198
        %v2216 = vmul.f32 %v1781, %v2198
        %v2217 = vmul.f32 %v2175, %v2198
        %v2218 = vmul.f32 %v1782, %v2198
        %v2219 = vmul.f32 %v2176, %v2198
        %v2220 = vmul.f32 %v537, %v2198
        %v2221 = vmul.f32 %v665, %v2198
        %v2222 = vmul.f32 %v1783, %v2198
        %v2223 = vmul.f32 %v2177, %v2198
        %v2224 = vmul.f32 %v1784, %v2198
        %v2225 = vmul.f32 %v2178, %v2198
        %v2226 = vmul.f32 %v539, %v2198
        %v2227 = vmul.f32 %v667, %v2198
        %v2228 = vmul.f32 %v1785, %v2198
        %v2229 = vmul.f32 %v2179, %v2198
        %v2230 = vmul.f32 %v1786, %v2198
        %v2231 = vmul.f32 %v2180, %v2198
        %v2232 = vmul.f32 %v541, %v2198
        %v2233 = vmul.f32 %v669, %v2198
        %v2234 = vmul.f32 %v1787, %v2198
        %v2235 = vmul.f32 %v2181, %v2198
        %v2236 = vmul.f32 %v1788, %v2198
        %v2237 = vmul.f32 %v2182, %v2198
        %v2238 = vmul.f32 %v543, %v2198
        %v2239 = vmul.f32 %v671, %v2198
        %v2240 = vmul.f32 %v1789, %v2198
        %v2241 = vmul.f32 %v2183, %v2198
        %v2242 = vmul.f32 %v1790, %v2198
        %v2243 = vmul.f32 %v2184, %v2198
        %v2244 = vmul.f32 %v545, %v2198
        %v2245 = vmul.f32 %v673, %v2198
        %v2246 = vmul.f32 %v1791, %v2198
        %v2247 = vmul.f32 %v2185, %v2198
        %v2296 = vrot.slane %v2200, 1
        %v2297 = vrot.slane %v2202, 1
        %v2298 = vsel %vm1851, %v2296, %v2297
        %v2299 = vrot.slane %v2201, 1
        %v2300 = vrot.slane %v2203, 1
        %v2301 = vsel %vm1851, %v2299, %v2300
        %v2302 = vrot.slane %v2204, 1
        %v2303 = vsel %vm1851, %v2297, %v2302
        %v2304 = vrot.slane %v2205, 1
        %v2305 = vsel %vm1851, %v2300, %v2304
        %v2306 = vrot.slane %v2206, 1
        %v2307 = vrot.slane %v2208, 1
        %v2308 = vsel %vm1851, %v2306, %v2307
        %v2309 = vrot.slane %v2207, 1
        %v2310 = vrot.slane %v2209, 1
        %v2311 = vsel %vm1851, %v2309, %v2310
        %v2312 = vrot.slane %v2210, 1
        %v2313 = vsel %vm1851, %v2307, %v2312
        %v2314 = vrot.slane %v2211, 1
        %v2315 = vsel %vm1851, %v2310, %v2314
        %v2316 = vrot.slane %v2212, 1
        %v2317 = vrot.slane %v2214, 1
        %v2318 = vsel %vm1851, %v2316, %v2317
        %v2319 = vrot.slane %v2213, 1
        %v2320 = vrot.slane %v2215, 1
        %v2321 = vsel %vm1851, %v2319, %v2320
        %v2322 = vrot.slane %v2216, 1
        %v2323 = vsel %vm1851, %v2317, %v2322
        %v2324 = vrot.slane %v2217, 1
        %v2325 = vsel %vm1851, %v2320, %v2324
        %v2326 = vrot.slane %v2218, 1
        %v2327 = vrot.slane %v2220, 1
        %v2328 = vsel %vm1851, %v2326, %v2327
        %v2329 = vrot.slane %v2219, 1
        %v2330 = vrot.slane %v2221, 1
        %v2331 = vsel %vm1851, %v2329, %v2330
        %v2332 = vrot.slane %v2222, 1
        %v2333 = vsel %vm1851, %v2327, %v2332
        %v2334 = vrot.slane %v2223, 1
        %v2335 = vsel %vm1851, %v2330, %v2334
        %v2336 = vrot.slane %v2224, 1
        %v2337 = vrot.slane %v2226, 1
        %v2338 = vsel %vm1851, %v2336, %v2337
        %v2339 = vrot.slane %v2225, 1
        %v2340 = vrot.slane %v2227, 1
        %v2341 = vsel %vm1851, %v2339, %v2340
        %v2342 = vrot.slane %v2228, 1
        %v2343 = vsel %vm1851, %v2337, %v2342
        %v2344 = vrot.slane %v2229, 1
        %v2345 = vsel %vm1851, %v2340, %v2344
        %v2346 = vrot.slane %v2230, 1
        %v2347 = vrot.slane %v2232, 1
        %v2348 = vsel %vm1851, %v2346, %v2347
        %v2349 = vrot.slane %v2231, 1
        %v2350 = vrot.slane %v2233, 1
        %v2351 = vsel %vm1851, %v2349, %v2350
        %v2352 = vrot.slane %v2234, 1
        %v2353 = vsel %vm1851, %v2347, %v2352
        %v2354 = vrot.slane %v2235, 1
        %v2355 = vsel %vm1851, %v2350, %v2354
        %v2356 = vrot.slane %v2236, 1
        %v2357 = vrot.slane %v2238, 1
        %v2358 = vsel %vm1851, %v2356, %v2357
        %v2359 = vrot.slane %v2237, 1
        %v2360 = vrot.slane %v2239, 1
        %v2361 = vsel %vm1851, %v2359, %v2360
        %v2362 = vrot.slane %v2240, 1
        %v2363 = vsel %vm1851, %v2357, %v2362
        %v2364 = vrot.slane %v2241, 1
        %v2365 = vsel %vm1851, %v2360, %v2364
        %v2366 = vrot.slane %v2242, 1
        %v2367 = vrot.slane %v2244, 1
        %v2368 = vsel %vm1851, %v2366, %v2367
        %v2369 = vrot.slane %v2243, 1
        %v2370 = vrot.slane %v2245, 1
        %v2371 = vsel %vm1851, %v2369, %v2370
        %v2372 = vrot.slane %v2246, 1
        %v2373 = vsel %vm1851, %v2367, %v2372
        %v2374 = vrot.slane %v2247, 1
        %v2375 = vsel %vm1851, %v2370, %v2374
        %2376 = vrot.lane.b32.xlu0 %v2298, 124
        %v2377 = vpop.permute.xlu0 %2376
        %2378 = vrot.lane.b32.xlu0 %v2301, 124
        %v2379 = vpop.permute.xlu0 %2378
        %2380 = vrot.lane.b32.xlu0 %v2303, 124
        %v2381 = vpop.permute.xlu0 %2380
        %2382 = vrot.lane.b32.xlu0 %v2305, 124
        %v2383 = vpop.permute.xlu0 %2382
        %2384 = vrot.lane.b32.xlu0 %v2308, 124
        %v2385 = vpop.permute.xlu0 %2384
        %2386 = vrot.lane.b32.xlu0 %v2311, 124
        %v2387 = vpop.permute.xlu0 %2386
        %2388 = vrot.lane.b32.xlu0 %v2313, 124
        %v2389 = vpop.permute.xlu0 %2388
        %2390 = vrot.lane.b32.xlu0 %v2315, 124
        %v2391 = vpop.permute.xlu0 %2390
        %2392 = vrot.lane.b32.xlu0 %v2318, 124
        %v2393 = vpop.permute.xlu0 %2392
        %2394 = vrot.lane.b32.xlu0 %v2321, 124
        %v2395 = vpop.permute.xlu0 %2394
        %2396 = vrot.lane.b32.xlu0 %v2323, 124
        %v2397 = vpop.permute.xlu0 %2396
        %2398 = vrot.lane.b32.xlu0 %v2325, 124
        %v2399 = vpop.permute.xlu0 %2398
        %2400 = vrot.lane.b32.xlu0 %v2328, 124
        %v2401 = vpop.permute.xlu0 %2400
        %2402 = vrot.lane.b32.xlu0 %v2331, 124
        %v2403 = vpop.permute.xlu0 %2402
        %2404 = vrot.lane.b32.xlu0 %v2333, 124
        %v2405 = vpop.permute.xlu0 %2404
        %2406 = vrot.lane.b32.xlu0 %v2335, 124
        %v2407 = vpop.permute.xlu0 %2406
        %2408 = vrot.lane.b32.xlu0 %v2338, 124
        %v2409 = vpop.permute.xlu0 %2408
        %2410 = vrot.lane.b32.xlu0 %v2341, 124
        %v2411 = vpop.permute.xlu0 %2410
        %2412 = vrot.lane.b32.xlu0 %v2343, 124
        %v2413 = vpop.permute.xlu0 %2412
        %2414 = vrot.lane.b32.xlu0 %v2345, 124
        %v2415 = vpop.permute.xlu0 %2414
        %2416 = vrot.lane.b32.xlu0 %v2348, 124
        %v2417 = vpop.permute.xlu0 %2416
        %2418 = vrot.lane.b32.xlu0 %v2351, 124
        %v2419 = vpop.permute.xlu0 %2418
        %2420 = vrot.lane.b32.xlu0 %v2353, 124
        %v2421 = vpop.permute.xlu0 %2420
        %2422 = vrot.lane.b32.xlu0 %v2355, 124
        %v2423 = vpop.permute.xlu0 %2422
        %2424 = vrot.lane.b32.xlu0 %v2358, 124
        %v2425 = vpop.permute.xlu0 %2424
        %2426 = vrot.lane.b32.xlu0 %v2361, 124
        %v2427 = vpop.permute.xlu0 %2426
        %2428 = vrot.lane.b32.xlu0 %v2363, 124
        %v2429 = vpop.permute.xlu0 %2428
        %2430 = vrot.lane.b32.xlu0 %v2365, 124
        %v2431 = vpop.permute.xlu0 %2430
        %2432 = vrot.lane.b32.xlu0 %v2368, 124
        %v2433 = vpop.permute.xlu0 %2432
        %2434 = vrot.lane.b32.xlu0 %v2371, 124
        %v2435 = vpop.permute.xlu0 %2434
        %2436 = vrot.lane.b32.xlu0 %v2373, 124
        %v2437 = vpop.permute.xlu0 %2436
        %2438 = vrot.lane.b32.xlu0 %v2375, 124
        %v2439 = vpop.permute.xlu0 %2438
        %v2440 = vsel %vm816, %v2377, %v2379
        %v2441 = vsel %vm816, %v2381, %v2383
        %v2442 = vsel %vm816, %v2385, %v2387
        %v2443 = vsel %vm816, %v2389, %v2391
        %v2444 = vsel %vm816, %v2393, %v2395
        %v2445 = vsel %vm816, %v2397, %v2399
        %v2446 = vsel %vm816, %v2401, %v2403
        %v2447 = vsel %vm816, %v2405, %v2407
        %v2448 = vsel %vm816, %v2409, %v2411
        %v2449 = vsel %vm816, %v2413, %v2415
        %v2450 = vsel %vm816, %v2417, %v2419
        %v2451 = vsel %vm816, %v2421, %v2423
        %v2452 = vsel %vm816, %v2425, %v2427
        %v2453 = vsel %vm816, %v2429, %v2431
        %v2454 = vsel %vm816, %v2433, %v2435
        %v2455 = vsel %vm816, %v2437, %v2439
        %v2472 = vadd.f32 %v2154, %v2440
        %v2473 = vadd.f32 %v2155, %v2441
        %v2474 = vadd.f32 %v2156, %v2442
        %v2475 = vadd.f32 %v2157, %v2443
        %v2476 = vadd.f32 %v2158, %v2444
        %v2477 = vadd.f32 %v2159, %v2445
        %v2478 = vadd.f32 %v2160, %v2446
        %v2479 = vadd.f32 %v2161, %v2447
        %v2480 = vadd.f32 %v2162, %v2448
        %v2481 = vadd.f32 %v2163, %v2449
        %v2482 = vadd.f32 %v2164, %v2450
        %v2483 = vadd.f32 %v2165, %v2451
        %v2484 = vadd.f32 %v2166, %v2452
        %v2485 = vadd.f32 %v2167, %v2453
        %v2486 = vadd.f32 %v2168, %v2454
        %v2487 = vadd.f32 %v2169, %v2455
        %v2488 = vld [vmem:[%s1924 + $0x1] sm:$0x1]
        %v2489 = vperm.slane %v2488, 0
        %2491 = vrot.lane.b32.xlu0 %v2489, 4
        %v2492 = vpop.permute.xlu0 %2491
        %v2494 = vmul.f32 %v1780, %v2492
        %v2495 = vmul.f32 %v2174, %v2492
        %v2496 = vmul.f32 %v535, %v2492
        %v2497 = vmul.f32 %v663, %v2492
        %v2498 = vmul.f32 %v1781, %v2492
        %v2499 = vmul.f32 %v2175, %v2492
        %v2500 = vmul.f32 %v1782, %v2492
        %v2501 = vmul.f32 %v2176, %v2492
        %v2502 = vmul.f32 %v537, %v2492
        %v2503 = vmul.f32 %v665, %v2492
        %v2504 = vmul.f32 %v1783, %v2492
        %v2505 = vmul.f32 %v2177, %v2492
        %v2506 = vmul.f32 %v1784, %v2492
        %v2507 = vmul.f32 %v2178, %v2492
        %v2508 = vmul.f32 %v539, %v2492
        %v2509 = vmul.f32 %v667, %v2492
        %v2510 = vmul.f32 %v1785, %v2492
        %v2511 = vmul.f32 %v2179, %v2492
        %v2512 = vmul.f32 %v1786, %v2492
        %v2513 = vmul.f32 %v2180, %v2492
        %v2514 = vmul.f32 %v541, %v2492
        %v2515 = vmul.f32 %v669, %v2492
        %v2516 = vmul.f32 %v1787, %v2492
        %v2517 = vmul.f32 %v2181, %v2492
        %v2518 = vmul.f32 %v1788, %v2492
        %v2519 = vmul.f32 %v2182, %v2492
        %v2520 = vmul.f32 %v543, %v2492
        %v2521 = vmul.f32 %v671, %v2492
        %v2522 = vmul.f32 %v1789, %v2492
        %v2523 = vmul.f32 %v2183, %v2492
        %v2524 = vmul.f32 %v1790, %v2492
        %v2525 = vmul.f32 %v2184, %v2492
        %v2526 = vmul.f32 %v545, %v2492
        %v2527 = vmul.f32 %v673, %v2492
        %v2528 = vmul.f32 %v1791, %v2492
        %v2529 = vmul.f32 %v2185, %v2492
        %v2530 = vmul.f32 %v1792, %v2492
        %v2531 = vmul.f32 %v2186, %v2492
        %v2532 = vmul.f32 %v547, %v2492
        %v2533 = vmul.f32 %v675, %v2492
        %v2534 = vmul.f32 %v1793, %v2492
        %v2535 = vmul.f32 %v2187, %v2492
        %v2536 = vmul.f32 %v1794, %v2492
        %v2537 = vmul.f32 %v2188, %v2492
        %v2538 = vmul.f32 %v549, %v2492
        %v2539 = vmul.f32 %v677, %v2492
        %v2540 = vmul.f32 %v1795, %v2492
        %v2541 = vmul.f32 %v2189, %v2492
        %v2590 = vrot.slane %v2494, 1
        %v2591 = vrot.slane %v2496, 1
        %v2592 = vsel %vm1851, %v2590, %v2591
        %v2593 = vrot.slane %v2495, 1
        %v2594 = vrot.slane %v2497, 1
        %v2595 = vsel %vm1851, %v2593, %v2594
        %v2596 = vrot.slane %v2498, 1
        %v2597 = vsel %vm1851, %v2591, %v2596
        %v2598 = vrot.slane %v2499, 1
        %v2599 = vsel %vm1851, %v2594, %v2598
        %v2600 = vrot.slane %v2500, 1
        %v2601 = vrot.slane %v2502, 1
        %v2602 = vsel %vm1851, %v2600, %v2601
        %v2603 = vrot.slane %v2501, 1
        %v2604 = vrot.slane %v2503, 1
        %v2605 = vsel %vm1851, %v2603, %v2604
        %v2606 = vrot.slane %v2504, 1
        %v2607 = vsel %vm1851, %v2601, %v2606
        %v2608 = vrot.slane %v2505, 1
        %v2609 = vsel %vm1851, %v2604, %v2608
        %v2610 = vrot.slane %v2506, 1
        %v2611 = vrot.slane %v2508, 1
        %v2612 = vsel %vm1851, %v2610, %v2611
        %v2613 = vrot.slane %v2507, 1
        %v2614 = vrot.slane %v2509, 1
        %v2615 = vsel %vm1851, %v2613, %v2614
        %v2616 = vrot.slane %v2510, 1
        %v2617 = vsel %vm1851, %v2611, %v2616
        %v2618 = vrot.slane %v2511, 1
        %v2619 = vsel %vm1851, %v2614, %v2618
        %v2620 = vrot.slane %v2512, 1
        %v2621 = vrot.slane %v2514, 1
        %v2622 = vsel %vm1851, %v2620, %v2621
        %v2623 = vrot.slane %v2513, 1
        %v2624 = vrot.slane %v2515, 1
        %v2625 = vsel %vm1851, %v2623, %v2624
        %v2626 = vrot.slane %v2516, 1
        %v2627 = vsel %vm1851, %v2621, %v2626
        %v2628 = vrot.slane %v2517, 1
        %v2629 = vsel %vm1851, %v2624, %v2628
        %v2630 = vrot.slane %v2518, 1
        %v2631 = vrot.slane %v2520, 1
        %v2632 = vsel %vm1851, %v2630, %v2631
        %v2633 = vrot.slane %v2519, 1
        %v2634 = vrot.slane %v2521, 1
        %v2635 = vsel %vm1851, %v2633, %v2634
        %v2636 = vrot.slane %v2522, 1
        %v2637 = vsel %vm1851, %v2631, %v2636
        %v2638 = vrot.slane %v2523, 1
        %v2639 = vsel %vm1851, %v2634, %v2638
        %v2640 = vrot.slane %v2524, 1
        %v2641 = vrot.slane %v2526, 1
        %v2642 = vsel %vm1851, %v2640, %v2641
        %v2643 = vrot.slane %v2525, 1
        %v2644 = vrot.slane %v2527, 1
        %v2645 = vsel %vm1851, %v2643, %v2644
        %v2646 = vrot.slane %v2528, 1
        %v2647 = vsel %vm1851, %v2641, %v2646
        %v2648 = vrot.slane %v2529, 1
        %v2649 = vsel %vm1851, %v2644, %v2648
        %v2650 = vrot.slane %v2530, 1
        %v2651 = vrot.slane %v2532, 1
        %v2652 = vsel %vm1851, %v2650, %v2651
        %v2653 = vrot.slane %v2531, 1
        %v2654 = vrot.slane %v2533, 1
        %v2655 = vsel %vm1851, %v2653, %v2654
        %v2656 = vrot.slane %v2534, 1
        %v2657 = vsel %vm1851, %v2651, %v2656
        %v2658 = vrot.slane %v2535, 1
        %v2659 = vsel %vm1851, %v2654, %v2658
        %v2660 = vrot.slane %v2536, 1
        %v2661 = vrot.slane %v2538, 1
        %v2662 = vsel %vm1851, %v2660, %v2661
        %v2663 = vrot.slane %v2537, 1
        %v2664 = vrot.slane %v2539, 1
        %v2665 = vsel %vm1851, %v2663, %v2664
        %v2666 = vrot.slane %v2540, 1
        %v2667 = vsel %vm1851, %v2661, %v2666
        %v2668 = vrot.slane %v2541, 1
        %v2669 = vsel %vm1851, %v2664, %v2668
        %2670 = vrot.lane.b32.xlu0 %v2592, 124
        %v2671 = vpop.permute.xlu0 %2670
        %2672 = vrot.lane.b32.xlu0 %v2595, 124
        %v2673 = vpop.permute.xlu0 %2672
        %2674 = vrot.lane.b32.xlu0 %v2597, 124
        %v2675 = vpop.permute.xlu0 %2674
        %2676 = vrot.lane.b32.xlu0 %v2599, 124
        %v2677 = vpop.permute.xlu0 %2676
        %2678 = vrot.lane.b32.xlu0 %v2602, 124
        %v2679 = vpop.permute.xlu0 %2678
        %2680 = vrot.lane.b32.xlu0 %v2605, 124
        %v2681 = vpop.permute.xlu0 %2680
        %2682 = vrot.lane.b32.xlu0 %v2607, 124
        %v2683 = vpop.permute.xlu0 %2682
        %2684 = vrot.lane.b32.xlu0 %v2609, 124
        %v2685 = vpop.permute.xlu0 %2684
        %2686 = vrot.lane.b32.xlu0 %v2612, 124
        %v2687 = vpop.permute.xlu0 %2686
        %2688 = vrot.lane.b32.xlu0 %v2615, 124
        %v2689 = vpop.permute.xlu0 %2688
        %2690 = vrot.lane.b32.xlu0 %v2617, 124
        %v2691 = vpop.permute.xlu0 %2690
        %2692 = vrot.lane.b32.xlu0 %v2619, 124
        %v2693 = vpop.permute.xlu0 %2692
        %2694 = vrot.lane.b32.xlu0 %v2622, 124
        %v2695 = vpop.permute.xlu0 %2694
        %2696 = vrot.lane.b32.xlu0 %v2625, 124
        %v2697 = vpop.permute.xlu0 %2696
        %2698 = vrot.lane.b32.xlu0 %v2627, 124
        %v2699 = vpop.permute.xlu0 %2698
        %2700 = vrot.lane.b32.xlu0 %v2629, 124
        %v2701 = vpop.permute.xlu0 %2700
        %2702 = vrot.lane.b32.xlu0 %v2632, 124
        %v2703 = vpop.permute.xlu0 %2702
        %2704 = vrot.lane.b32.xlu0 %v2635, 124
        %v2705 = vpop.permute.xlu0 %2704
        %2706 = vrot.lane.b32.xlu0 %v2637, 124
        %v2707 = vpop.permute.xlu0 %2706
        %2708 = vrot.lane.b32.xlu0 %v2639, 124
        %v2709 = vpop.permute.xlu0 %2708
        %2710 = vrot.lane.b32.xlu0 %v2642, 124
        %v2711 = vpop.permute.xlu0 %2710
        %2712 = vrot.lane.b32.xlu0 %v2645, 124
        %v2713 = vpop.permute.xlu0 %2712
        %2714 = vrot.lane.b32.xlu0 %v2647, 124
        %v2715 = vpop.permute.xlu0 %2714
        %2716 = vrot.lane.b32.xlu0 %v2649, 124
        %v2717 = vpop.permute.xlu0 %2716
        %2718 = vrot.lane.b32.xlu0 %v2652, 124
        %v2719 = vpop.permute.xlu0 %2718
        %2720 = vrot.lane.b32.xlu0 %v2655, 124
        %v2721 = vpop.permute.xlu0 %2720
        %2722 = vrot.lane.b32.xlu0 %v2657, 124
        %v2723 = vpop.permute.xlu0 %2722
        %2724 = vrot.lane.b32.xlu0 %v2659, 124
        %v2725 = vpop.permute.xlu0 %2724
        %2726 = vrot.lane.b32.xlu0 %v2662, 124
        %v2727 = vpop.permute.xlu0 %2726
        %2728 = vrot.lane.b32.xlu0 %v2665, 124
        %v2729 = vpop.permute.xlu0 %2728
        %2730 = vrot.lane.b32.xlu0 %v2667, 124
        %v2731 = vpop.permute.xlu0 %2730
        %2732 = vrot.lane.b32.xlu0 %v2669, 124
        %v2733 = vpop.permute.xlu0 %2732
        %v2734 = vsel %vm816, %v2671, %v2673
        %v2735 = vsel %vm816, %v2675, %v2677
        %v2736 = vsel %vm816, %v2679, %v2681
        %v2737 = vsel %vm816, %v2683, %v2685
        %v2738 = vsel %vm816, %v2687, %v2689
        %v2739 = vsel %vm816, %v2691, %v2693
        %v2740 = vsel %vm816, %v2695, %v2697
        %v2741 = vsel %vm816, %v2699, %v2701
        %v2742 = vsel %vm816, %v2703, %v2705
        %v2743 = vsel %vm816, %v2707, %v2709
        %v2744 = vsel %vm816, %v2711, %v2713
        %v2745 = vsel %vm816, %v2715, %v2717
        %v2746 = vsel %vm816, %v2719, %v2721
        %v2747 = vsel %vm816, %v2723, %v2725
        %v2748 = vsel %vm816, %v2727, %v2729
        %v2749 = vsel %vm816, %v2731, %v2733
        %v2766 = vadd.f32 %v2472, %v2734
        %v2767 = vadd.f32 %v2473, %v2735
        %v2768 = vadd.f32 %v2474, %v2736
        %v2769 = vadd.f32 %v2475, %v2737
        %v2770 = vadd.f32 %v2476, %v2738
        %v2771 = vadd.f32 %v2477, %v2739
        %v2772 = vadd.f32 %v2478, %v2740
        %v2773 = vadd.f32 %v2479, %v2741
        %v2774 = vadd.f32 %v2480, %v2742
        %v2775 = vadd.f32 %v2481, %v2743
        %v2776 = vadd.f32 %v2482, %v2744
        %v2777 = vadd.f32 %v2483, %v2745
        %v2778 = vadd.f32 %v2484, %v2746
        %v2779 = vadd.f32 %v2485, %v2747
        %v2780 = vadd.f32 %v2486, %v2748
        %v2781 = vadd.f32 %v2487, %v2749
        %v2782 = vld [vmem:[%s2047 + $0x1] sm:$0x1]
        %v2783 = vperm.slane %v2782, 0
        %2785 = vrot.lane.b32.xlu0 %v2783, 4
        %v2786 = vpop.permute.xlu0 %2785
        %v2788 = vmul.f32 %v1784, %v2786
        %v2789 = vmul.f32 %v2178, %v2786
        %v2790 = vmul.f32 %v539, %v2786
        %v2791 = vmul.f32 %v667, %v2786
        %v2792 = vmul.f32 %v1785, %v2786
        %v2793 = vmul.f32 %v2179, %v2786
        %v2794 = vmul.f32 %v1786, %v2786
        %v2795 = vmul.f32 %v2180, %v2786
        %v2796 = vmul.f32 %v541, %v2786
        %v2797 = vmul.f32 %v669, %v2786
        %v2798 = vmul.f32 %v1787, %v2786
        %v2799 = vmul.f32 %v2181, %v2786
        %v2800 = vmul.f32 %v1788, %v2786
        %v2801 = vmul.f32 %v2182, %v2786
        %v2802 = vmul.f32 %v543, %v2786
        %v2803 = vmul.f32 %v671, %v2786
        %v2804 = vmul.f32 %v1789, %v2786
        %v2805 = vmul.f32 %v2183, %v2786
        %v2806 = vmul.f32 %v1790, %v2786
        %v2807 = vmul.f32 %v2184, %v2786
        %v2808 = vmul.f32 %v545, %v2786
        %v2809 = vmul.f32 %v673, %v2786
        %v2810 = vmul.f32 %v1791, %v2786
        %v2811 = vmul.f32 %v2185, %v2786
        %v2812 = vmul.f32 %v1792, %v2786
        %v2813 = vmul.f32 %v2186, %v2786
        %v2814 = vmul.f32 %v547, %v2786
        %v2815 = vmul.f32 %v675, %v2786
        %v2816 = vmul.f32 %v1793, %v2786
        %v2817 = vmul.f32 %v2187, %v2786
        %v2818 = vmul.f32 %v1794, %v2786
        %v2819 = vmul.f32 %v2188, %v2786
        %v2820 = vmul.f32 %v549, %v2786
        %v2821 = vmul.f32 %v677, %v2786
        %v2822 = vmul.f32 %v1795, %v2786
        %v2823 = vmul.f32 %v2189, %v2786
        %v2824 = vmul.f32 %v1796, %v2786
        %v2825 = vmul.f32 %v2190, %v2786
        %v2826 = vmul.f32 %v551, %v2786
        %v2827 = vmul.f32 %v679, %v2786
        %v2828 = vmul.f32 %v1797, %v2786
        %v2829 = vmul.f32 %v2191, %v2786
        %v2830 = vmul.f32 %v1798, %v2786
        %v2831 = vmul.f32 %v2192, %v2786
        %v2832 = vmul.f32 %v553, %v2786
        %v2833 = vmul.f32 %v681, %v2786
        %v2834 = vmul.f32 %v1799, %v2786
        %v2835 = vmul.f32 %v2193, %v2786
        %v2884 = vrot.slane %v2788, 1
        %v2885 = vrot.slane %v2790, 1
        %v2886 = vsel %vm1851, %v2884, %v2885
        %v2887 = vrot.slane %v2789, 1
        %v2888 = vrot.slane %v2791, 1
        %v2889 = vsel %vm1851, %v2887, %v2888
        %v2890 = vrot.slane %v2792, 1
        %v2891 = vsel %vm1851, %v2885, %v2890
        %v2892 = vrot.slane %v2793, 1
        %v2893 = vsel %vm1851, %v2888, %v2892
        %v2894 = vrot.slane %v2794, 1
        %v2895 = vrot.slane %v2796, 1
        %v2896 = vsel %vm1851, %v2894, %v2895
        %v2897 = vrot.slane %v2795, 1
        %v2898 = vrot.slane %v2797, 1
        %v2899 = vsel %vm1851, %v2897, %v2898
        %v2900 = vrot.slane %v2798, 1
        %v2901 = vsel %vm1851, %v2895, %v2900
        %v2902 = vrot.slane %v2799, 1
        %v2903 = vsel %vm1851, %v2898, %v2902
        %v2904 = vrot.slane %v2800, 1
        %v2905 = vrot.slane %v2802, 1
        %v2906 = vsel %vm1851, %v2904, %v2905
        %v2907 = vrot.slane %v2801, 1
        %v2908 = vrot.slane %v2803, 1
        %v2909 = vsel %vm1851, %v2907, %v2908
        %v2910 = vrot.slane %v2804, 1
        %v2911 = vsel %vm1851, %v2905, %v2910
        %v2912 = vrot.slane %v2805, 1
        %v2913 = vsel %vm1851, %v2908, %v2912
        %v2914 = vrot.slane %v2806, 1
        %v2915 = vrot.slane %v2808, 1
        %v2916 = vsel %vm1851, %v2914, %v2915
        %v2917 = vrot.slane %v2807, 1
        %v2918 = vrot.slane %v2809, 1
        %v2919 = vsel %vm1851, %v2917, %v2918
        %v2920 = vrot.slane %v2810, 1
        %v2921 = vsel %vm1851, %v2915, %v2920
        %v2922 = vrot.slane %v2811, 1
        %v2923 = vsel %vm1851, %v2918, %v2922
        %v2924 = vrot.slane %v2812, 1
        %v2925 = vrot.slane %v2814, 1
        %v2926 = vsel %vm1851, %v2924, %v2925
        %v2927 = vrot.slane %v2813, 1
        %v2928 = vrot.slane %v2815, 1
        %v2929 = vsel %vm1851, %v2927, %v2928
        %v2930 = vrot.slane %v2816, 1
        %v2931 = vsel %vm1851, %v2925, %v2930
        %v2932 = vrot.slane %v2817, 1
        %v2933 = vsel %vm1851, %v2928, %v2932
        %v2934 = vrot.slane %v2818, 1
        %v2935 = vrot.slane %v2820, 1
        %v2936 = vsel %vm1851, %v2934, %v2935
        %v2937 = vrot.slane %v2819, 1
        %v2938 = vrot.slane %v2821, 1
        %v2939 = vsel %vm1851, %v2937, %v2938
        %v2940 = vrot.slane %v2822, 1
        %v2941 = vsel %vm1851, %v2935, %v2940
        %v2942 = vrot.slane %v2823, 1
        %v2943 = vsel %vm1851, %v2938, %v2942
        %v2944 = vrot.slane %v2824, 1
        %v2945 = vrot.slane %v2826, 1
        %v2946 = vsel %vm1851, %v2944, %v2945
        %v2947 = vrot.slane %v2825, 1
        %v2948 = vrot.slane %v2827, 1
        %v2949 = vsel %vm1851, %v2947, %v2948
        %v2950 = vrot.slane %v2828, 1
        %v2951 = vsel %vm1851, %v2945, %v2950
        %v2952 = vrot.slane %v2829, 1
        %v2953 = vsel %vm1851, %v2948, %v2952
        %v2954 = vrot.slane %v2830, 1
        %v2955 = vrot.slane %v2832, 1
        %v2956 = vsel %vm1851, %v2954, %v2955
        %v2957 = vrot.slane %v2831, 1
        %v2958 = vrot.slane %v2833, 1
        %v2959 = vsel %vm1851, %v2957, %v2958
        %v2960 = vrot.slane %v2834, 1
        %v2961 = vsel %vm1851, %v2955, %v2960
        %v2962 = vrot.slane %v2835, 1
        %v2963 = vsel %vm1851, %v2958, %v2962
        %2964 = vrot.lane.b32.xlu0 %v2886, 124
        %v2965 = vpop.permute.xlu0 %2964
        %2966 = vrot.lane.b32.xlu0 %v2889, 124
        %v2967 = vpop.permute.xlu0 %2966
        %2968 = vrot.lane.b32.xlu0 %v2891, 124
        %v2969 = vpop.permute.xlu0 %2968
        %2970 = vrot.lane.b32.xlu0 %v2893, 124
        %v2971 = vpop.permute.xlu0 %2970
        %2972 = vrot.lane.b32.xlu0 %v2896, 124
        %v2973 = vpop.permute.xlu0 %2972
        %2974 = vrot.lane.b32.xlu0 %v2899, 124
        %v2975 = vpop.permute.xlu0 %2974
        %2976 = vrot.lane.b32.xlu0 %v2901, 124
        %v2977 = vpop.permute.xlu0 %2976
        %2978 = vrot.lane.b32.xlu0 %v2903, 124
        %v2979 = vpop.permute.xlu0 %2978
        %2980 = vrot.lane.b32.xlu0 %v2906, 124
        %v2981 = vpop.permute.xlu0 %2980
        %2982 = vrot.lane.b32.xlu0 %v2909, 124
        %v2983 = vpop.permute.xlu0 %2982
        %2984 = vrot.lane.b32.xlu0 %v2911, 124
        %v2985 = vpop.permute.xlu0 %2984
        %2986 = vrot.lane.b32.xlu0 %v2913, 124
        %v2987 = vpop.permute.xlu0 %2986
        %2988 = vrot.lane.b32.xlu0 %v2916, 124
        %v2989 = vpop.permute.xlu0 %2988
        %2990 = vrot.lane.b32.xlu0 %v2919, 124
        %v2991 = vpop.permute.xlu0 %2990
        %2992 = vrot.lane.b32.xlu0 %v2921, 124
        %v2993 = vpop.permute.xlu0 %2992
        %2994 = vrot.lane.b32.xlu0 %v2923, 124
        %v2995 = vpop.permute.xlu0 %2994
        %2996 = vrot.lane.b32.xlu0 %v2926, 124
        %v2997 = vpop.permute.xlu0 %2996
        %2998 = vrot.lane.b32.xlu0 %v2929, 124
        %v2999 = vpop.permute.xlu0 %2998
        %3000 = vrot.lane.b32.xlu0 %v2931, 124
        %v3001 = vpop.permute.xlu0 %3000
        %3002 = vrot.lane.b32.xlu0 %v2933, 124
        %v3003 = vpop.permute.xlu0 %3002
        %3004 = vrot.lane.b32.xlu0 %v2936, 124
        %v3005 = vpop.permute.xlu0 %3004
        %3006 = vrot.lane.b32.xlu0 %v2939, 124
        %v3007 = vpop.permute.xlu0 %3006
        %3008 = vrot.lane.b32.xlu0 %v2941, 124
        %v3009 = vpop.permute.xlu0 %3008
        %3010 = vrot.lane.b32.xlu0 %v2943, 124
        %v3011 = vpop.permute.xlu0 %3010
        %3012 = vrot.lane.b32.xlu0 %v2946, 124
        %v3013 = vpop.permute.xlu0 %3012
        %3014 = vrot.lane.b32.xlu0 %v2949, 124
        %v3015 = vpop.permute.xlu0 %3014
        %3016 = vrot.lane.b32.xlu0 %v2951, 124
        %v3017 = vpop.permute.xlu0 %3016
        %3018 = vrot.lane.b32.xlu0 %v2953, 124
        %v3019 = vpop.permute.xlu0 %3018
        %3020 = vrot.lane.b32.xlu0 %v2956, 124
        %v3021 = vpop.permute.xlu0 %3020
        %3022 = vrot.lane.b32.xlu0 %v2959, 124
        %v3023 = vpop.permute.xlu0 %3022
        %3024 = vrot.lane.b32.xlu0 %v2961, 124
        %v3025 = vpop.permute.xlu0 %3024
        %3026 = vrot.lane.b32.xlu0 %v2963, 124
        %v3027 = vpop.permute.xlu0 %3026
        %v3028 = vsel %vm816, %v2965, %v2967
        %v3029 = vsel %vm816, %v2969, %v2971
        %v3030 = vsel %vm816, %v2973, %v2975
        %v3031 = vsel %vm816, %v2977, %v2979
        %v3032 = vsel %vm816, %v2981, %v2983
        %v3033 = vsel %vm816, %v2985, %v2987
        %v3034 = vsel %vm816, %v2989, %v2991
        %v3035 = vsel %vm816, %v2993, %v2995
        %v3036 = vsel %vm816, %v2997, %v2999
        %v3037 = vsel %vm816, %v3001, %v3003
        %v3038 = vsel %vm816, %v3005, %v3007
        %v3039 = vsel %vm816, %v3009, %v3011
        %v3040 = vsel %vm816, %v3013, %v3015
        %v3041 = vsel %vm816, %v3017, %v3019
        %v3042 = vsel %vm816, %v3021, %v3023
        %v3043 = vsel %vm816, %v3025, %v3027
        %v3060 = vadd.f32 %v2766, %v3028
        %v3061 = vadd.f32 %v2767, %v3029
        %v3062 = vadd.f32 %v2768, %v3030
        %v3063 = vadd.f32 %v2769, %v3031
        %v3064 = vadd.f32 %v2770, %v3032
        %v3065 = vadd.f32 %v2771, %v3033
        %v3066 = vadd.f32 %v2772, %v3034
        %v3067 = vadd.f32 %v2773, %v3035
        %v3068 = vadd.f32 %v2774, %v3036
        %v3069 = vadd.f32 %v2775, %v3037
        %v3070 = vadd.f32 %v2776, %v3038
        %v3071 = vadd.f32 %v2777, %v3039
        %v3072 = vadd.f32 %v2778, %v3040
        %v3073 = vadd.f32 %v2779, %v3041
        %v3074 = vadd.f32 %v2780, %v3042
        %v3075 = vadd.f32 %v2781, %v3043
        %v3076 = vld [vmem:[%s1800 + $0x2] sm:$0x1]
        %v3077 = vperm.slane %v3076, 0
        %3079 = vrot.lane.b32.xlu0 %v3077, 8
        %v3080 = vpop.permute.xlu0 %3079
        %v3082 = vmul.f32 %v1776, %v3080
        %v3083 = vmul.f32 %v2170, %v3080
        %v3084 = vmul.f32 %v531, %v3080
        %v3085 = vmul.f32 %v659, %v3080
        %v3086 = vmul.f32 %v1777, %v3080
        %v3087 = vmul.f32 %v2171, %v3080
        %v3088 = vmul.f32 %v1778, %v3080
        %v3089 = vmul.f32 %v2172, %v3080
        %v3090 = vmul.f32 %v533, %v3080
        %v3091 = vmul.f32 %v661, %v3080
        %v3092 = vmul.f32 %v1779, %v3080
        %v3093 = vmul.f32 %v2173, %v3080
        %v3094 = vmul.f32 %v1780, %v3080
        %v3095 = vmul.f32 %v2174, %v3080
        %v3096 = vmul.f32 %v535, %v3080
        %v3097 = vmul.f32 %v663, %v3080
        %v3098 = vmul.f32 %v1781, %v3080
        %v3099 = vmul.f32 %v2175, %v3080
        %v3100 = vmul.f32 %v1782, %v3080
        %v3101 = vmul.f32 %v2176, %v3080
        %v3102 = vmul.f32 %v537, %v3080
        %v3103 = vmul.f32 %v665, %v3080
        %v3104 = vmul.f32 %v1783, %v3080
        %v3105 = vmul.f32 %v2177, %v3080
        %v3106 = vmul.f32 %v1784, %v3080
        %v3107 = vmul.f32 %v2178, %v3080
        %v3108 = vmul.f32 %v539, %v3080
        %v3109 = vmul.f32 %v667, %v3080
        %v3110 = vmul.f32 %v1785, %v3080
        %v3111 = vmul.f32 %v2179, %v3080
        %v3112 = vmul.f32 %v1786, %v3080
        %v3113 = vmul.f32 %v2180, %v3080
        %v3114 = vmul.f32 %v541, %v3080
        %v3115 = vmul.f32 %v669, %v3080
        %v3116 = vmul.f32 %v1787, %v3080
        %v3117 = vmul.f32 %v2181, %v3080
        %v3118 = vmul.f32 %v1788, %v3080
        %v3119 = vmul.f32 %v2182, %v3080
        %v3120 = vmul.f32 %v543, %v3080
        %v3121 = vmul.f32 %v671, %v3080
        %v3122 = vmul.f32 %v1789, %v3080
        %v3123 = vmul.f32 %v2183, %v3080
        %v3124 = vmul.f32 %v1790, %v3080
        %v3125 = vmul.f32 %v2184, %v3080
        %v3126 = vmul.f32 %v545, %v3080
        %v3127 = vmul.f32 %v673, %v3080
        %v3128 = vmul.f32 %v1791, %v3080
        %v3129 = vmul.f32 %v2185, %v3080
        %v3178 = vrot.slane %v3082, 1
        %v3179 = vrot.slane %v3084, 1
        %v3180 = vsel %vm1851, %v3178, %v3179
        %v3181 = vrot.slane %v3083, 1
        %v3182 = vrot.slane %v3085, 1
        %v3183 = vsel %vm1851, %v3181, %v3182
        %v3184 = vrot.slane %v3086, 1
        %v3185 = vsel %vm1851, %v3179, %v3184
        %v3186 = vrot.slane %v3087, 1
        %v3187 = vsel %vm1851, %v3182, %v3186
        %v3188 = vrot.slane %v3088, 1
        %v3189 = vrot.slane %v3090, 1
        %v3190 = vsel %vm1851, %v3188, %v3189
        %v3191 = vrot.slane %v3089, 1
        %v3192 = vrot.slane %v3091, 1
        %v3193 = vsel %vm1851, %v3191, %v3192
        %v3194 = vrot.slane %v3092, 1
        %v3195 = vsel %vm1851, %v3189, %v3194
        %v3196 = vrot.slane %v3093, 1
        %v3197 = vsel %vm1851, %v3192, %v3196
        %v3198 = vrot.slane %v3094, 1
        %v3199 = vrot.slane %v3096, 1
        %v3200 = vsel %vm1851, %v3198, %v3199
        %v3201 = vrot.slane %v3095, 1
        %v3202 = vrot.slane %v3097, 1
        %v3203 = vsel %vm1851, %v3201, %v3202
        %v3204 = vrot.slane %v3098, 1
        %v3205 = vsel %vm1851, %v3199, %v3204
        %v3206 = vrot.slane %v3099, 1
        %v3207 = vsel %vm1851, %v3202, %v3206
        %v3208 = vrot.slane %v3100, 1
        %v3209 = vrot.slane %v3102, 1
        %v3210 = vsel %vm1851, %v3208, %v3209
        %v3211 = vrot.slane %v3101, 1
        %v3212 = vrot.slane %v3103, 1
        %v3213 = vsel %vm1851, %v3211, %v3212
        %v3214 = vrot.slane %v3104, 1
        %v3215 = vsel %vm1851, %v3209, %v3214
        %v3216 = vrot.slane %v3105, 1
        %v3217 = vsel %vm1851, %v3212, %v3216
        %v3218 = vrot.slane %v3106, 1
        %v3219 = vrot.slane %v3108, 1
        %v3220 = vsel %vm1851, %v3218, %v3219
        %v3221 = vrot.slane %v3107, 1
        %v3222 = vrot.slane %v3109, 1
        %v3223 = vsel %vm1851, %v3221, %v3222
        %v3224 = vrot.slane %v3110, 1
        %v3225 = vsel %vm1851, %v3219, %v3224
        %v3226 = vrot.slane %v3111, 1
        %v3227 = vsel %vm1851, %v3222, %v3226
        %v3228 = vrot.slane %v3112, 1
        %v3229 = vrot.slane %v3114, 1
        %v3230 = vsel %vm1851, %v3228, %v3229
        %v3231 = vrot.slane %v3113, 1
        %v3232 = vrot.slane %v3115, 1
        %v3233 = vsel %vm1851, %v3231, %v3232
        %v3234 = vrot.slane %v3116, 1
        %v3235 = vsel %vm1851, %v3229, %v3234
        %v3236 = vrot.slane %v3117, 1
        %v3237 = vsel %vm1851, %v3232, %v3236
        %v3238 = vrot.slane %v3118, 1
        %v3239 = vrot.slane %v3120, 1
        %v3240 = vsel %vm1851, %v3238, %v3239
        %v3241 = vrot.slane %v3119, 1
        %v3242 = vrot.slane %v3121, 1
        %v3243 = vsel %vm1851, %v3241, %v3242
        %v3244 = vrot.slane %v3122, 1
        %v3245 = vsel %vm1851, %v3239, %v3244
        %v3246 = vrot.slane %v3123, 1
        %v3247 = vsel %vm1851, %v3242, %v3246
        %v3248 = vrot.slane %v3124, 1
        %v3249 = vrot.slane %v3126, 1
        %v3250 = vsel %vm1851, %v3248, %v3249
        %v3251 = vrot.slane %v3125, 1
        %v3252 = vrot.slane %v3127, 1
        %v3253 = vsel %vm1851, %v3251, %v3252
        %v3254 = vrot.slane %v3128, 1
        %v3255 = vsel %vm1851, %v3249, %v3254
        %v3256 = vrot.slane %v3129, 1
        %v3257 = vsel %vm1851, %v3252, %v3256
        %3258 = vrot.lane.b32.xlu0 %v3180, 120
        %v3259 = vpop.permute.xlu0 %3258
        %3260 = vrot.lane.b32.xlu0 %v3183, 120
        %v3261 = vpop.permute.xlu0 %3260
        %3262 = vrot.lane.b32.xlu0 %v3185, 120
        %v3263 = vpop.permute.xlu0 %3262
        %3264 = vrot.lane.b32.xlu0 %v3187, 120
        %v3265 = vpop.permute.xlu0 %3264
        %3266 = vrot.lane.b32.xlu0 %v3190, 120
        %v3267 = vpop.permute.xlu0 %3266
        %3268 = vrot.lane.b32.xlu0 %v3193, 120
        %v3269 = vpop.permute.xlu0 %3268
        %3270 = vrot.lane.b32.xlu0 %v3195, 120
        %v3271 = vpop.permute.xlu0 %3270
        %3272 = vrot.lane.b32.xlu0 %v3197, 120
        %v3273 = vpop.permute.xlu0 %3272
        %3274 = vrot.lane.b32.xlu0 %v3200, 120
        %v3275 = vpop.permute.xlu0 %3274
        %3276 = vrot.lane.b32.xlu0 %v3203, 120
        %v3277 = vpop.permute.xlu0 %3276
        %3278 = vrot.lane.b32.xlu0 %v3205, 120
        %v3279 = vpop.permute.xlu0 %3278
        %3280 = vrot.lane.b32.xlu0 %v3207, 120
        %v3281 = vpop.permute.xlu0 %3280
        %3282 = vrot.lane.b32.xlu0 %v3210, 120
        %v3283 = vpop.permute.xlu0 %3282
        %3284 = vrot.lane.b32.xlu0 %v3213, 120
        %v3285 = vpop.permute.xlu0 %3284
        %3286 = vrot.lane.b32.xlu0 %v3215, 120
        %v3287 = vpop.permute.xlu0 %3286
        %3288 = vrot.lane.b32.xlu0 %v3217, 120
        %v3289 = vpop.permute.xlu0 %3288
        %3290 = vrot.lane.b32.xlu0 %v3220, 120
        %v3291 = vpop.permute.xlu0 %3290
        %3292 = vrot.lane.b32.xlu0 %v3223, 120
        %v3293 = vpop.permute.xlu0 %3292
        %3294 = vrot.lane.b32.xlu0 %v3225, 120
        %v3295 = vpop.permute.xlu0 %3294
        %3296 = vrot.lane.b32.xlu0 %v3227, 120
        %v3297 = vpop.permute.xlu0 %3296
        %3298 = vrot.lane.b32.xlu0 %v3230, 120
        %v3299 = vpop.permute.xlu0 %3298
        %3300 = vrot.lane.b32.xlu0 %v3233, 120
        %v3301 = vpop.permute.xlu0 %3300
        %3302 = vrot.lane.b32.xlu0 %v3235, 120
        %v3303 = vpop.permute.xlu0 %3302
        %3304 = vrot.lane.b32.xlu0 %v3237, 120
        %v3305 = vpop.permute.xlu0 %3304
        %3306 = vrot.lane.b32.xlu0 %v3240, 120
        %v3307 = vpop.permute.xlu0 %3306
        %3308 = vrot.lane.b32.xlu0 %v3243, 120
        %v3309 = vpop.permute.xlu0 %3308
        %3310 = vrot.lane.b32.xlu0 %v3245, 120
        %v3311 = vpop.permute.xlu0 %3310
        %3312 = vrot.lane.b32.xlu0 %v3247, 120
        %v3313 = vpop.permute.xlu0 %3312
        %3314 = vrot.lane.b32.xlu0 %v3250, 120
        %v3315 = vpop.permute.xlu0 %3314
        %3316 = vrot.lane.b32.xlu0 %v3253, 120
        %v3317 = vpop.permute.xlu0 %3316
        %3318 = vrot.lane.b32.xlu0 %v3255, 120
        %v3319 = vpop.permute.xlu0 %3318
        %3320 = vrot.lane.b32.xlu0 %v3257, 120
        %v3321 = vpop.permute.xlu0 %3320
        %v3322 = vsel %vm1363, %v3259, %v3261
        %v3323 = vsel %vm1363, %v3263, %v3265
        %v3324 = vsel %vm1363, %v3267, %v3269
        %v3325 = vsel %vm1363, %v3271, %v3273
        %v3326 = vsel %vm1363, %v3275, %v3277
        %v3327 = vsel %vm1363, %v3279, %v3281
        %v3328 = vsel %vm1363, %v3283, %v3285
        %v3329 = vsel %vm1363, %v3287, %v3289
        %v3330 = vsel %vm1363, %v3291, %v3293
        %v3331 = vsel %vm1363, %v3295, %v3297
        %v3332 = vsel %vm1363, %v3299, %v3301
        %v3333 = vsel %vm1363, %v3303, %v3305
        %v3334 = vsel %vm1363, %v3307, %v3309
        %v3335 = vsel %vm1363, %v3311, %v3313
        %v3336 = vsel %vm1363, %v3315, %v3317
        %v3337 = vsel %vm1363, %v3319, %v3321
        %v3354 = vadd.f32 %v3060, %v3322
        %v3355 = vadd.f32 %v3061, %v3323
        %v3356 = vadd.f32 %v3062, %v3324
        %v3357 = vadd.f32 %v3063, %v3325
        %v3358 = vadd.f32 %v3064, %v3326
        %v3359 = vadd.f32 %v3065, %v3327
        %v3360 = vadd.f32 %v3066, %v3328
        %v3361 = vadd.f32 %v3067, %v3329
        %v3362 = vadd.f32 %v3068, %v3330
        %v3363 = vadd.f32 %v3069, %v3331
        %v3364 = vadd.f32 %v3070, %v3332
        %v3365 = vadd.f32 %v3071, %v3333
        %v3366 = vadd.f32 %v3072, %v3334
        %v3367 = vadd.f32 %v3073, %v3335
        %v3368 = vadd.f32 %v3074, %v3336
        %v3369 = vadd.f32 %v3075, %v3337
        %v3370 = vld [vmem:[%s1924 + $0x2] sm:$0x1]
        %v3371 = vperm.slane %v3370, 0
        %3373 = vrot.lane.b32.xlu0 %v3371, 8
        %v3374 = vpop.permute.xlu0 %3373
        %v3376 = vmul.f32 %v1780, %v3374
        %v3377 = vmul.f32 %v2174, %v3374
        %v3378 = vmul.f32 %v535, %v3374
        %v3379 = vmul.f32 %v663, %v3374
        %v3380 = vmul.f32 %v1781, %v3374
        %v3381 = vmul.f32 %v2175, %v3374
        %v3382 = vmul.f32 %v1782, %v3374
        %v3383 = vmul.f32 %v2176, %v3374
        %v3384 = vmul.f32 %v537, %v3374
        %v3385 = vmul.f32 %v665, %v3374
        %v3386 = vmul.f32 %v1783, %v3374
        %v3387 = vmul.f32 %v2177, %v3374
        %v3388 = vmul.f32 %v1784, %v3374
        %v3389 = vmul.f32 %v2178, %v3374
        %v3390 = vmul.f32 %v539, %v3374
        %v3391 = vmul.f32 %v667, %v3374
        %v3392 = vmul.f32 %v1785, %v3374
        %v3393 = vmul.f32 %v2179, %v3374
        %v3394 = vmul.f32 %v1786, %v3374
        %v3395 = vmul.f32 %v2180, %v3374
        %v3396 = vmul.f32 %v541, %v3374
        %v3397 = vmul.f32 %v669, %v3374
        %v3398 = vmul.f32 %v1787, %v3374
        %v3399 = vmul.f32 %v2181, %v3374
        %v3400 = vmul.f32 %v1788, %v3374
        %v3401 = vmul.f32 %v2182, %v3374
        %v3402 = vmul.f32 %v543, %v3374
        %v3403 = vmul.f32 %v671, %v3374
        %v3404 = vmul.f32 %v1789, %v3374
        %v3405 = vmul.f32 %v2183, %v3374
        %v3406 = vmul.f32 %v1790, %v3374
        %v3407 = vmul.f32 %v2184, %v3374
        %v3408 = vmul.f32 %v545, %v3374
        %v3409 = vmul.f32 %v673, %v3374
        %v3410 = vmul.f32 %v1791, %v3374
        %v3411 = vmul.f32 %v2185, %v3374
        %v3412 = vmul.f32 %v1792, %v3374
        %v3413 = vmul.f32 %v2186, %v3374
        %v3414 = vmul.f32 %v547, %v3374
        %v3415 = vmul.f32 %v675, %v3374
        %v3416 = vmul.f32 %v1793, %v3374
        %v3417 = vmul.f32 %v2187, %v3374
        %v3418 = vmul.f32 %v1794, %v3374
        %v3419 = vmul.f32 %v2188, %v3374
        %v3420 = vmul.f32 %v549, %v3374
        %v3421 = vmul.f32 %v677, %v3374
        %v3422 = vmul.f32 %v1795, %v3374
        %v3423 = vmul.f32 %v2189, %v3374
        %v3472 = vrot.slane %v3376, 1
        %v3473 = vrot.slane %v3378, 1
        %v3474 = vsel %vm1851, %v3472, %v3473
        %v3475 = vrot.slane %v3377, 1
        %v3476 = vrot.slane %v3379, 1
        %v3477 = vsel %vm1851, %v3475, %v3476
        %v3478 = vrot.slane %v3380, 1
        %v3479 = vsel %vm1851, %v3473, %v3478
        %v3480 = vrot.slane %v3381, 1
        %v3481 = vsel %vm1851, %v3476, %v3480
        %v3482 = vrot.slane %v3382, 1
        %v3483 = vrot.slane %v3384, 1
        %v3484 = vsel %vm1851, %v3482, %v3483
        %v3485 = vrot.slane %v3383, 1
        %v3486 = vrot.slane %v3385, 1
        %v3487 = vsel %vm1851, %v3485, %v3486
        %v3488 = vrot.slane %v3386, 1
        %v3489 = vsel %vm1851, %v3483, %v3488
        %v3490 = vrot.slane %v3387, 1
        %v3491 = vsel %vm1851, %v3486, %v3490
        %v3492 = vrot.slane %v3388, 1
        %v3493 = vrot.slane %v3390, 1
        %v3494 = vsel %vm1851, %v3492, %v3493
        %v3495 = vrot.slane %v3389, 1
        %v3496 = vrot.slane %v3391, 1
        %v3497 = vsel %vm1851, %v3495, %v3496
        %v3498 = vrot.slane %v3392, 1
        %v3499 = vsel %vm1851, %v3493, %v3498
        %v3500 = vrot.slane %v3393, 1
        %v3501 = vsel %vm1851, %v3496, %v3500
        %v3502 = vrot.slane %v3394, 1
        %v3503 = vrot.slane %v3396, 1
        %v3504 = vsel %vm1851, %v3502, %v3503
        %v3505 = vrot.slane %v3395, 1
        %v3506 = vrot.slane %v3397, 1
        %v3507 = vsel %vm1851, %v3505, %v3506
        %v3508 = vrot.slane %v3398, 1
        %v3509 = vsel %vm1851, %v3503, %v3508
        %v3510 = vrot.slane %v3399, 1
        %v3511 = vsel %vm1851, %v3506, %v3510
        %v3512 = vrot.slane %v3400, 1
        %v3513 = vrot.slane %v3402, 1
        %v3514 = vsel %vm1851, %v3512, %v3513
        %v3515 = vrot.slane %v3401, 1
        %v3516 = vrot.slane %v3403, 1
        %v3517 = vsel %vm1851, %v3515, %v3516
        %v3518 = vrot.slane %v3404, 1
        %v3519 = vsel %vm1851, %v3513, %v3518
        %v3520 = vrot.slane %v3405, 1
        %v3521 = vsel %vm1851, %v3516, %v3520
        %v3522 = vrot.slane %v3406, 1
        %v3523 = vrot.slane %v3408, 1
        %v3524 = vsel %vm1851, %v3522, %v3523
        %v3525 = vrot.slane %v3407, 1
        %v3526 = vrot.slane %v3409, 1
        %v3527 = vsel %vm1851, %v3525, %v3526
        %v3528 = vrot.slane %v3410, 1
        %v3529 = vsel %vm1851, %v3523, %v3528
        %v3530 = vrot.slane %v3411, 1
        %v3531 = vsel %vm1851, %v3526, %v3530
        %v3532 = vrot.slane %v3412, 1
        %v3533 = vrot.slane %v3414, 1
        %v3534 = vsel %vm1851, %v3532, %v3533
        %v3535 = vrot.slane %v3413, 1
        %v3536 = vrot.slane %v3415, 1
        %v3537 = vsel %vm1851, %v3535, %v3536
        %v3538 = vrot.slane %v3416, 1
        %v3539 = vsel %vm1851, %v3533, %v3538
        %v3540 = vrot.slane %v3417, 1
        %v3541 = vsel %vm1851, %v3536, %v3540
        %v3542 = vrot.slane %v3418, 1
        %v3543 = vrot.slane %v3420, 1
        %v3544 = vsel %vm1851, %v3542, %v3543
        %v3545 = vrot.slane %v3419, 1
        %v3546 = vrot.slane %v3421, 1
        %v3547 = vsel %vm1851, %v3545, %v3546
        %v3548 = vrot.slane %v3422, 1
        %v3549 = vsel %vm1851, %v3543, %v3548
        %v3550 = vrot.slane %v3423, 1
        %v3551 = vsel %vm1851, %v3546, %v3550
        %3552 = vrot.lane.b32.xlu0 %v3474, 120
        %v3553 = vpop.permute.xlu0 %3552
        %3554 = vrot.lane.b32.xlu0 %v3477, 120
        %v3555 = vpop.permute.xlu0 %3554
        %3556 = vrot.lane.b32.xlu0 %v3479, 120
        %v3557 = vpop.permute.xlu0 %3556
        %3558 = vrot.lane.b32.xlu0 %v3481, 120
        %v3559 = vpop.permute.xlu0 %3558
        %3560 = vrot.lane.b32.xlu0 %v3484, 120
        %v3561 = vpop.permute.xlu0 %3560
        %3562 = vrot.lane.b32.xlu0 %v3487, 120
        %v3563 = vpop.permute.xlu0 %3562
        %3564 = vrot.lane.b32.xlu0 %v3489, 120
        %v3565 = vpop.permute.xlu0 %3564
        %3566 = vrot.lane.b32.xlu0 %v3491, 120
        %v3567 = vpop.permute.xlu0 %3566
        %3568 = vrot.lane.b32.xlu0 %v3494, 120
        %v3569 = vpop.permute.xlu0 %3568
        %3570 = vrot.lane.b32.xlu0 %v3497, 120
        %v3571 = vpop.permute.xlu0 %3570
        %3572 = vrot.lane.b32.xlu0 %v3499, 120
        %v3573 = vpop.permute.xlu0 %3572
        %3574 = vrot.lane.b32.xlu0 %v3501, 120
        %v3575 = vpop.permute.xlu0 %3574
        %3576 = vrot.lane.b32.xlu0 %v3504, 120
        %v3577 = vpop.permute.xlu0 %3576
        %3578 = vrot.lane.b32.xlu0 %v3507, 120
        %v3579 = vpop.permute.xlu0 %3578
        %3580 = vrot.lane.b32.xlu0 %v3509, 120
        %v3581 = vpop.permute.xlu0 %3580
        %3582 = vrot.lane.b32.xlu0 %v3511, 120
        %v3583 = vpop.permute.xlu0 %3582
        %3584 = vrot.lane.b32.xlu0 %v3514, 120
        %v3585 = vpop.permute.xlu0 %3584
        %3586 = vrot.lane.b32.xlu0 %v3517, 120
        %v3587 = vpop.permute.xlu0 %3586
        %3588 = vrot.lane.b32.xlu0 %v3519, 120
        %v3589 = vpop.permute.xlu0 %3588
        %3590 = vrot.lane.b32.xlu0 %v3521, 120
        %v3591 = vpop.permute.xlu0 %3590
        %3592 = vrot.lane.b32.xlu0 %v3524, 120
        %v3593 = vpop.permute.xlu0 %3592
        %3594 = vrot.lane.b32.xlu0 %v3527, 120
        %v3595 = vpop.permute.xlu0 %3594
        %3596 = vrot.lane.b32.xlu0 %v3529, 120
        %v3597 = vpop.permute.xlu0 %3596
        %3598 = vrot.lane.b32.xlu0 %v3531, 120
        %v3599 = vpop.permute.xlu0 %3598
        %3600 = vrot.lane.b32.xlu0 %v3534, 120
        %v3601 = vpop.permute.xlu0 %3600
        %3602 = vrot.lane.b32.xlu0 %v3537, 120
        %v3603 = vpop.permute.xlu0 %3602
        %3604 = vrot.lane.b32.xlu0 %v3539, 120
        %v3605 = vpop.permute.xlu0 %3604
        %3606 = vrot.lane.b32.xlu0 %v3541, 120
        %v3607 = vpop.permute.xlu0 %3606
        %3608 = vrot.lane.b32.xlu0 %v3544, 120
        %v3609 = vpop.permute.xlu0 %3608
        %3610 = vrot.lane.b32.xlu0 %v3547, 120
        %v3611 = vpop.permute.xlu0 %3610
        %3612 = vrot.lane.b32.xlu0 %v3549, 120
        %v3613 = vpop.permute.xlu0 %3612
        %3614 = vrot.lane.b32.xlu0 %v3551, 120
        %v3615 = vpop.permute.xlu0 %3614
        %v3616 = vsel %vm1363, %v3553, %v3555
        %v3617 = vsel %vm1363, %v3557, %v3559
        %v3618 = vsel %vm1363, %v3561, %v3563
        %v3619 = vsel %vm1363, %v3565, %v3567
        %v3620 = vsel %vm1363, %v3569, %v3571
        %v3621 = vsel %vm1363, %v3573, %v3575
        %v3622 = vsel %vm1363, %v3577, %v3579
        %v3623 = vsel %vm1363, %v3581, %v3583
        %v3624 = vsel %vm1363, %v3585, %v3587
        %v3625 = vsel %vm1363, %v3589, %v3591
        %v3626 = vsel %vm1363, %v3593, %v3595
        %v3627 = vsel %vm1363, %v3597, %v3599
        %v3628 = vsel %vm1363, %v3601, %v3603
        %v3629 = vsel %vm1363, %v3605, %v3607
        %v3630 = vsel %vm1363, %v3609, %v3611
        %v3631 = vsel %vm1363, %v3613, %v3615
        %v3648 = vadd.f32 %v3354, %v3616
        %v3649 = vadd.f32 %v3355, %v3617
        %v3650 = vadd.f32 %v3356, %v3618
        %v3651 = vadd.f32 %v3357, %v3619
        %v3652 = vadd.f32 %v3358, %v3620
        %v3653 = vadd.f32 %v3359, %v3621
        %v3654 = vadd.f32 %v3360, %v3622
        %v3655 = vadd.f32 %v3361, %v3623
        %v3656 = vadd.f32 %v3362, %v3624
        %v3657 = vadd.f32 %v3363, %v3625
        %v3658 = vadd.f32 %v3364, %v3626
        %v3659 = vadd.f32 %v3365, %v3627
        %v3660 = vadd.f32 %v3366, %v3628
        %v3661 = vadd.f32 %v3367, %v3629
        %v3662 = vadd.f32 %v3368, %v3630
        %v3663 = vadd.f32 %v3369, %v3631
        %v3664 = vld [vmem:[%s2047 + $0x2] sm:$0x1]
        %v3665 = vperm.slane %v3664, 0
        %3667 = vrot.lane.b32.xlu0 %v3665, 8
        %v3668 = vpop.permute.xlu0 %3667
        %v3670 = vmul.f32 %v1784, %v3668
        %v3671 = vmul.f32 %v2178, %v3668
        %v3672 = vmul.f32 %v539, %v3668
        %v3673 = vmul.f32 %v667, %v3668
        %v3674 = vmul.f32 %v1785, %v3668
        %v3675 = vmul.f32 %v2179, %v3668
        %v3676 = vmul.f32 %v1786, %v3668
        %v3677 = vmul.f32 %v2180, %v3668
        %v3678 = vmul.f32 %v541, %v3668
        %v3679 = vmul.f32 %v669, %v3668
        %v3680 = vmul.f32 %v1787, %v3668
        %v3681 = vmul.f32 %v2181, %v3668
        %v3682 = vmul.f32 %v1788, %v3668
        %v3683 = vmul.f32 %v2182, %v3668
        %v3684 = vmul.f32 %v543, %v3668
        %v3685 = vmul.f32 %v671, %v3668
        %v3686 = vmul.f32 %v1789, %v3668
        %v3687 = vmul.f32 %v2183, %v3668
        %v3688 = vmul.f32 %v1790, %v3668
        %v3689 = vmul.f32 %v2184, %v3668
        %v3690 = vmul.f32 %v545, %v3668
        %v3691 = vmul.f32 %v673, %v3668
        %v3692 = vmul.f32 %v1791, %v3668
        %v3693 = vmul.f32 %v2185, %v3668
        %v3694 = vmul.f32 %v1792, %v3668
        %v3695 = vmul.f32 %v2186, %v3668
        %v3696 = vmul.f32 %v547, %v3668
        %v3697 = vmul.f32 %v675, %v3668
        %v3698 = vmul.f32 %v1793, %v3668
        %v3699 = vmul.f32 %v2187, %v3668
        %v3700 = vmul.f32 %v1794, %v3668
        %v3701 = vmul.f32 %v2188, %v3668
        %v3702 = vmul.f32 %v549, %v3668
        %v3703 = vmul.f32 %v677, %v3668
        %v3704 = vmul.f32 %v1795, %v3668
        %v3705 = vmul.f32 %v2189, %v3668
        %v3706 = vmul.f32 %v1796, %v3668
        %v3707 = vmul.f32 %v2190, %v3668
        %v3708 = vmul.f32 %v551, %v3668
        %v3709 = vmul.f32 %v679, %v3668
        %v3710 = vmul.f32 %v1797, %v3668
        %v3711 = vmul.f32 %v2191, %v3668
        %v3712 = vmul.f32 %v1798, %v3668
        %v3713 = vmul.f32 %v2192, %v3668
        %v3714 = vmul.f32 %v553, %v3668
        %v3715 = vmul.f32 %v681, %v3668
        %v3716 = vmul.f32 %v1799, %v3668
        %v3717 = vmul.f32 %v2193, %v3668
        %v3766 = vrot.slane %v3670, 1
        %v3767 = vrot.slane %v3672, 1
        %v3768 = vsel %vm1851, %v3766, %v3767
        %v3769 = vrot.slane %v3671, 1
        %v3770 = vrot.slane %v3673, 1
        %v3771 = vsel %vm1851, %v3769, %v3770
        %v3772 = vrot.slane %v3674, 1
        %v3773 = vsel %vm1851, %v3767, %v3772
        %v3774 = vrot.slane %v3675, 1
        %v3775 = vsel %vm1851, %v3770, %v3774
        %v3776 = vrot.slane %v3676, 1
        %v3777 = vrot.slane %v3678, 1
        %v3778 = vsel %vm1851, %v3776, %v3777
        %v3779 = vrot.slane %v3677, 1
        %v3780 = vrot.slane %v3679, 1
        %v3781 = vsel %vm1851, %v3779, %v3780
        %v3782 = vrot.slane %v3680, 1
        %v3783 = vsel %vm1851, %v3777, %v3782
        %v3784 = vrot.slane %v3681, 1
        %v3785 = vsel %vm1851, %v3780, %v3784
        %v3786 = vrot.slane %v3682, 1
        %v3787 = vrot.slane %v3684, 1
        %v3788 = vsel %vm1851, %v3786, %v3787
        %v3789 = vrot.slane %v3683, 1
        %v3790 = vrot.slane %v3685, 1
        %v3791 = vsel %vm1851, %v3789, %v3790
        %v3792 = vrot.slane %v3686, 1
        %v3793 = vsel %vm1851, %v3787, %v3792
        %v3794 = vrot.slane %v3687, 1
        %v3795 = vsel %vm1851, %v3790, %v3794
        %v3796 = vrot.slane %v3688, 1
        %v3797 = vrot.slane %v3690, 1
        %v3798 = vsel %vm1851, %v3796, %v3797
        %v3799 = vrot.slane %v3689, 1
        %v3800 = vrot.slane %v3691, 1
        %v3801 = vsel %vm1851, %v3799, %v3800
        %v3802 = vrot.slane %v3692, 1
        %v3803 = vsel %vm1851, %v3797, %v3802
        %v3804 = vrot.slane %v3693, 1
        %v3805 = vsel %vm1851, %v3800, %v3804
        %v3806 = vrot.slane %v3694, 1
        %v3807 = vrot.slane %v3696, 1
        %v3808 = vsel %vm1851, %v3806, %v3807
        %v3809 = vrot.slane %v3695, 1
        %v3810 = vrot.slane %v3697, 1
        %v3811 = vsel %vm1851, %v3809, %v3810
        %v3812 = vrot.slane %v3698, 1
        %v3813 = vsel %vm1851, %v3807, %v3812
        %v3814 = vrot.slane %v3699, 1
        %v3815 = vsel %vm1851, %v3810, %v3814
        %v3816 = vrot.slane %v3700, 1
        %v3817 = vrot.slane %v3702, 1
        %v3818 = vsel %vm1851, %v3816, %v3817
        %v3819 = vrot.slane %v3701, 1
        %v3820 = vrot.slane %v3703, 1
        %v3821 = vsel %vm1851, %v3819, %v3820
        %v3822 = vrot.slane %v3704, 1
        %v3823 = vsel %vm1851, %v3817, %v3822
        %v3824 = vrot.slane %v3705, 1
        %v3825 = vsel %vm1851, %v3820, %v3824
        %v3826 = vrot.slane %v3706, 1
        %v3827 = vrot.slane %v3708, 1
        %v3828 = vsel %vm1851, %v3826, %v3827
        %v3829 = vrot.slane %v3707, 1
        %v3830 = vrot.slane %v3709, 1
        %v3831 = vsel %vm1851, %v3829, %v3830
        %v3832 = vrot.slane %v3710, 1
        %v3833 = vsel %vm1851, %v3827, %v3832
        %v3834 = vrot.slane %v3711, 1
        %v3835 = vsel %vm1851, %v3830, %v3834
        %v3836 = vrot.slane %v3712, 1
        %v3837 = vrot.slane %v3714, 1
        %v3838 = vsel %vm1851, %v3836, %v3837
        %v3839 = vrot.slane %v3713, 1
        %v3840 = vrot.slane %v3715, 1
        %v3841 = vsel %vm1851, %v3839, %v3840
        %v3842 = vrot.slane %v3716, 1
        %v3843 = vsel %vm1851, %v3837, %v3842
        %v3844 = vrot.slane %v3717, 1
        %v3845 = vsel %vm1851, %v3840, %v3844
        %3846 = vrot.lane.b32.xlu0 %v3768, 120
        %v3847 = vpop.permute.xlu0 %3846
        %3848 = vrot.lane.b32.xlu0 %v3771, 120
        %v3849 = vpop.permute.xlu0 %3848
        %3850 = vrot.lane.b32.xlu0 %v3773, 120
        %v3851 = vpop.permute.xlu0 %3850
        %3852 = vrot.lane.b32.xlu0 %v3775, 120
        %v3853 = vpop.permute.xlu0 %3852
        %3854 = vrot.lane.b32.xlu0 %v3778, 120
        %v3855 = vpop.permute.xlu0 %3854
        %3856 = vrot.lane.b32.xlu0 %v3781, 120
        %v3857 = vpop.permute.xlu0 %3856
        %3858 = vrot.lane.b32.xlu0 %v3783, 120
        %v3859 = vpop.permute.xlu0 %3858
        %3860 = vrot.lane.b32.xlu0 %v3785, 120
        %v3861 = vpop.permute.xlu0 %3860
        %3862 = vrot.lane.b32.xlu0 %v3788, 120
        %v3863 = vpop.permute.xlu0 %3862
        %3864 = vrot.lane.b32.xlu0 %v3791, 120
        %v3865 = vpop.permute.xlu0 %3864
        %3866 = vrot.lane.b32.xlu0 %v3793, 120
        %v3867 = vpop.permute.xlu0 %3866
        %3868 = vrot.lane.b32.xlu0 %v3795, 120
        %v3869 = vpop.permute.xlu0 %3868
        %3870 = vrot.lane.b32.xlu0 %v3798, 120
        %v3871 = vpop.permute.xlu0 %3870
        %3872 = vrot.lane.b32.xlu0 %v3801, 120
        %v3873 = vpop.permute.xlu0 %3872
        %3874 = vrot.lane.b32.xlu0 %v3803, 120
        %v3875 = vpop.permute.xlu0 %3874
        %3876 = vrot.lane.b32.xlu0 %v3805, 120
        %v3877 = vpop.permute.xlu0 %3876
        %3878 = vrot.lane.b32.xlu0 %v3808, 120
        %v3879 = vpop.permute.xlu0 %3878
        %3880 = vrot.lane.b32.xlu0 %v3811, 120
        %v3881 = vpop.permute.xlu0 %3880
        %3882 = vrot.lane.b32.xlu0 %v3813, 120
        %v3883 = vpop.permute.xlu0 %3882
        %3884 = vrot.lane.b32.xlu0 %v3815, 120
        %v3885 = vpop.permute.xlu0 %3884
        %3886 = vrot.lane.b32.xlu0 %v3818, 120
        %v3887 = vpop.permute.xlu0 %3886
        %3888 = vrot.lane.b32.xlu0 %v3821, 120
        %v3889 = vpop.permute.xlu0 %3888
        %3890 = vrot.lane.b32.xlu0 %v3823, 120
        %v3891 = vpop.permute.xlu0 %3890
        %3892 = vrot.lane.b32.xlu0 %v3825, 120
        %v3893 = vpop.permute.xlu0 %3892
        %3894 = vrot.lane.b32.xlu0 %v3828, 120
        %v3895 = vpop.permute.xlu0 %3894
        %3896 = vrot.lane.b32.xlu0 %v3831, 120
        %v3897 = vpop.permute.xlu0 %3896
        %3898 = vrot.lane.b32.xlu0 %v3833, 120
        %v3899 = vpop.permute.xlu0 %3898
        %3900 = vrot.lane.b32.xlu0 %v3835, 120
        %v3901 = vpop.permute.xlu0 %3900
        %3902 = vrot.lane.b32.xlu0 %v3838, 120
        %v3903 = vpop.permute.xlu0 %3902
        %3904 = vrot.lane.b32.xlu0 %v3841, 120
        %v3905 = vpop.permute.xlu0 %3904
        %3906 = vrot.lane.b32.xlu0 %v3843, 120
        %v3907 = vpop.permute.xlu0 %3906
        %3908 = vrot.lane.b32.xlu0 %v3845, 120
        %v3909 = vpop.permute.xlu0 %3908
        %v3910 = vsel %vm1363, %v3847, %v3849
        %v3911 = vsel %vm1363, %v3851, %v3853
        %v3912 = vsel %vm1363, %v3855, %v3857
        %v3913 = vsel %vm1363, %v3859, %v3861
        %v3914 = vsel %vm1363, %v3863, %v3865
        %v3915 = vsel %vm1363, %v3867, %v3869
        %v3916 = vsel %vm1363, %v3871, %v3873
        %v3917 = vsel %vm1363, %v3875, %v3877
        %v3918 = vsel %vm1363, %v3879, %v3881
        %v3919 = vsel %vm1363, %v3883, %v3885
        %v3920 = vsel %vm1363, %v3887, %v3889
        %v3921 = vsel %vm1363, %v3891, %v3893
        %v3922 = vsel %vm1363, %v3895, %v3897
        %v3923 = vsel %vm1363, %v3899, %v3901
        %v3924 = vsel %vm1363, %v3903, %v3905
        %v3925 = vsel %vm1363, %v3907, %v3909
        %v3942 = vadd.f32 %v3648, %v3910
        %v3943 = vadd.f32 %v3649, %v3911
        %v3944 = vadd.f32 %v3650, %v3912
        %v3945 = vadd.f32 %v3651, %v3913
        %v3946 = vadd.f32 %v3652, %v3914
        %v3947 = vadd.f32 %v3653, %v3915
        %v3948 = vadd.f32 %v3654, %v3916
        %v3949 = vadd.f32 %v3655, %v3917
        %v3950 = vadd.f32 %v3656, %v3918
        %v3951 = vadd.f32 %v3657, %v3919
        %v3952 = vadd.f32 %v3658, %v3920
        %v3953 = vadd.f32 %v3659, %v3921
        %v3954 = vadd.f32 %v3660, %v3922
        %v3955 = vadd.f32 %v3661, %v3923
        %v3956 = vadd.f32 %v3662, %v3924
        %v3957 = vadd.f32 %v3663, %v3925
        %v3958 = vld [vmem:[#allocation2] sm:$0xfc]
        %v3959 = vld [vmem:[#allocation2 + $0x20] sm:$0x3]
        %v3960 = vld [vmem:[#allocation2 + $0x30] sm:$0xfc]
        %v3961 = vld [vmem:[#allocation2 + $0x50] sm:$0x3]
        %v3962 = vld [vmem:[#allocation2 + $0x60] sm:$0xfc]
        %v3963 = vld [vmem:[#allocation2 + $0x80] sm:$0x3]
        %v3964 = vld [vmem:[#allocation2 + $0x90] sm:$0xfc]
        %v3965 = vld [vmem:[#allocation2 + $0xb0] sm:$0x3]
        %v3966 = vld [vmem:[#allocation2 + $0xc0] sm:$0xfc]
        %v3967 = vld [vmem:[#allocation2 + $0xe0] sm:$0x3]
        %v3968 = vld [vmem:[#allocation2 + $0xf0] sm:$0xfc]
        %v3969 = vld [vmem:[#allocation2 + $0x110] sm:$0x3]
        %v3970 = vld [vmem:[#allocation2 + $0x120] sm:$0xfc]
        %v3971 = vld [vmem:[#allocation2 + $0x140] sm:$0x3]
        %v3972 = vld [vmem:[#allocation2 + $0x150] sm:$0xfc]
        %v3973 = vld [vmem:[#allocation2 + $0x170] sm:$0x3]
        %v3974 = vld [vmem:[#allocation2 + $0x180] sm:$0xfc]
        %v3975 = vld [vmem:[#allocation2 + $0x1a0] sm:$0x3]
        %v3976 = vld [vmem:[#allocation2 + $0x1b0] sm:$0xfc]
        %v3977 = vld [vmem:[#allocation2 + $0x1d0] sm:$0x3]
        %v3978 = vld [vmem:[#allocation2 + $0x1e0] sm:$0xfc]
        %v3979 = vld [vmem:[#allocation2 + $0x200] sm:$0x3]
        %v3980 = vld [vmem:[#allocation2 + $0x210] sm:$0xfc]
        %v3981 = vld [vmem:[#allocation2 + $0x230] sm:$0x3]
        %s3982 = scalar_lea.vmem %s1, 8
        %v3983 = vld [vmem:[%s3982] sm:$0x1]
        %v3984 = vperm.slane %v3983, 0
        %v3985 = vmul.f32 %v3958, %v3984
        %v3986 = vmul.f32 %v531, %v3984
        %v3987 = vmul.f32 %v3959, %v3984
        %v3988 = vmul.f32 %v3960, %v3984
        %v3989 = vmul.f32 %v533, %v3984
        %v3990 = vmul.f32 %v3961, %v3984
        %v3991 = vmul.f32 %v3962, %v3984
        %v3992 = vmul.f32 %v535, %v3984
        %v3993 = vmul.f32 %v3963, %v3984
        %v3994 = vmul.f32 %v3964, %v3984
        %v3995 = vmul.f32 %v537, %v3984
        %v3996 = vmul.f32 %v3965, %v3984
        %v3997 = vmul.f32 %v3966, %v3984
        %v3998 = vmul.f32 %v539, %v3984
        %v3999 = vmul.f32 %v3967, %v3984
        %v4000 = vmul.f32 %v3968, %v3984
        %v4001 = vmul.f32 %v541, %v3984
        %v4002 = vmul.f32 %v3969, %v3984
        %v4003 = vmul.f32 %v3970, %v3984
        %v4004 = vmul.f32 %v543, %v3984
        %v4005 = vmul.f32 %v3971, %v3984
        %v4006 = vmul.f32 %v3972, %v3984
        %v4007 = vmul.f32 %v545, %v3984
        %v4008 = vmul.f32 %v3973, %v3984
        %vm4033 = vcmask 1045504
        %v4034 = vrot.slane %v3985, 2
        %v4035 = vrot.slane %v3986, 2
        %v4036 = vsel %vm4033, %v4034, %v4035
        %v4037 = vrot.slane %v3987, 2
        %v4038 = vsel %vm4033, %v4035, %v4037
        %v4039 = vrot.slane %v3988, 2
        %v4040 = vrot.slane %v3989, 2
        %v4041 = vsel %vm4033, %v4039, %v4040
        %v4042 = vrot.slane %v3990, 2
        %v4043 = vsel %vm4033, %v4040, %v4042
        %v4044 = vrot.slane %v3991, 2
        %v4045 = vrot.slane %v3992, 2
        %v4046 = vsel %vm4033, %v4044, %v4045
        %v4047 = vrot.slane %v3993, 2
        %v4048 = vsel %vm4033, %v4045, %v4047
        %v4049 = vrot.slane %v3994, 2
        %v4050 = vrot.slane %v3995, 2
        %v4051 = vsel %vm4033, %v4049, %v4050
        %v4052 = vrot.slane %v3996, 2
        %v4053 = vsel %vm4033, %v4050, %v4052
        %v4054 = vrot.slane %v3997, 2
        %v4055 = vrot.slane %v3998, 2
        %v4056 = vsel %vm4033, %v4054, %v4055
        %v4057 = vrot.slane %v3999, 2
        %v4058 = vsel %vm4033, %v4055, %v4057
        %v4059 = vrot.slane %v4000, 2
        %v4060 = vrot.slane %v4001, 2
        %v4061 = vsel %vm4033, %v4059, %v4060
        %v4062 = vrot.slane %v4002, 2
        %v4063 = vsel %vm4033, %v4060, %v4062
        %v4064 = vrot.slane %v4003, 2
        %v4065 = vrot.slane %v4004, 2
        %v4066 = vsel %vm4033, %v4064, %v4065
        %v4067 = vrot.slane %v4005, 2
        %v4068 = vsel %vm4033, %v4065, %v4067
        %v4069 = vrot.slane %v4006, 2
        %v4070 = vrot.slane %v4007, 2
        %v4071 = vsel %vm4033, %v4069, %v4070
        %v4072 = vrot.slane %v4008, 2
        %v4073 = vsel %vm4033, %v4070, %v4072
        %v4090 = vadd.f32 %v3942, %v4036
        %v4091 = vadd.f32 %v3943, %v4038
        %v4092 = vadd.f32 %v3944, %v4041
        %v4093 = vadd.f32 %v3945, %v4043
        %v4094 = vadd.f32 %v3946, %v4046
        %v4095 = vadd.f32 %v3947, %v4048
        %v4096 = vadd.f32 %v3948, %v4051
        %v4097 = vadd.f32 %v3949, %v4053
        %v4098 = vadd.f32 %v3950, %v4056
        %v4099 = vadd.f32 %v3951, %v4058
        %v4100 = vadd.f32 %v3952, %v4061
        %v4101 = vadd.f32 %v3953, %v4063
        %v4102 = vadd.f32 %v3954, %v4066
        %v4103 = vadd.f32 %v3955, %v4068
        %v4104 = vadd.f32 %v3956, %v4071
        %v4105 = vadd.f32 %v3957, %v4073
        %s4106 = scalar_lea.vmem %s1, 20
        %v4107 = vld [vmem:[%s4106] sm:$0x1]
        %v4108 = vperm.slane %v4107, 0
        %v4109 = vmul.f32 %v3962, %v4108
        %v4110 = vmul.f32 %v535, %v4108
        %v4111 = vmul.f32 %v3963, %v4108
        %v4112 = vmul.f32 %v3964, %v4108
        %v4113 = vmul.f32 %v537, %v4108
        %v4114 = vmul.f32 %v3965, %v4108
        %v4115 = vmul.f32 %v3966, %v4108
        %v4116 = vmul.f32 %v539, %v4108
        %v4117 = vmul.f32 %v3967, %v4108
        %v4118 = vmul.f32 %v3968, %v4108
        %v4119 = vmul.f32 %v541, %v4108
        %v4120 = vmul.f32 %v3969, %v4108
        %v4121 = vmul.f32 %v3970, %v4108
        %v4122 = vmul.f32 %v543, %v4108
        %v4123 = vmul.f32 %v3971, %v4108
        %v4124 = vmul.f32 %v3972, %v4108
        %v4125 = vmul.f32 %v545, %v4108
        %v4126 = vmul.f32 %v3973, %v4108
        %v4127 = vmul.f32 %v3974, %v4108
        %v4128 = vmul.f32 %v547, %v4108
        %v4129 = vmul.f32 %v3975, %v4108
        %v4130 = vmul.f32 %v3976, %v4108
        %v4131 = vmul.f32 %v549, %v4108
        %v4132 = vmul.f32 %v3977, %v4108
        %v4157 = vrot.slane %v4109, 2
        %v4158 = vrot.slane %v4110, 2
        %v4159 = vsel %vm4033, %v4157, %v4158
        %v4160 = vrot.slane %v4111, 2
        %v4161 = vsel %vm4033, %v4158, %v4160
        %v4162 = vrot.slane %v4112, 2
        %v4163 = vrot.slane %v4113, 2
        %v4164 = vsel %vm4033, %v4162, %v4163
        %v4165 = vrot.slane %v4114, 2
        %v4166 = vsel %vm4033, %v4163, %v4165
        %v4167 = vrot.slane %v4115, 2
        %v4168 = vrot.slane %v4116, 2
        %v4169 = vsel %vm4033, %v4167, %v4168
        %v4170 = vrot.slane %v4117, 2
        %v4171 = vsel %vm4033, %v4168, %v4170
        %v4172 = vrot.slane %v4118, 2
        %v4173 = vrot.slane %v4119, 2
        %v4174 = vsel %vm4033, %v4172, %v4173
        %v4175 = vrot.slane %v4120, 2
        %v4176 = vsel %vm4033, %v4173, %v4175
        %v4177 = vrot.slane %v4121, 2
        %v4178 = vrot.slane %v4122, 2
        %v4179 = vsel %vm4033, %v4177, %v4178
        %v4180 = vrot.slane %v4123, 2
        %v4181 = vsel %vm4033, %v4178, %v4180
        %v4182 = vrot.slane %v4124, 2
        %v4183 = vrot.slane %v4125, 2
        %v4184 = vsel %vm4033, %v4182, %v4183
        %v4185 = vrot.slane %v4126, 2
        %v4186 = vsel %vm4033, %v4183, %v4185
        %v4187 = vrot.slane %v4127, 2
        %v4188 = vrot.slane %v4128, 2
        %v4189 = vsel %vm4033, %v4187, %v4188
        %v4190 = vrot.slane %v4129, 2
        %v4191 = vsel %vm4033, %v4188, %v4190
        %v4192 = vrot.slane %v4130, 2
        %v4193 = vrot.slane %v4131, 2
        %v4194 = vsel %vm4033, %v4192, %v4193
        %v4195 = vrot.slane %v4132, 2
        %v4196 = vsel %vm4033, %v4193, %v4195
        %v4213 = vadd.f32 %v4090, %v4159
        %v4214 = vadd.f32 %v4091, %v4161
        %v4215 = vadd.f32 %v4092, %v4164
        %v4216 = vadd.f32 %v4093, %v4166
        %v4217 = vadd.f32 %v4094, %v4169
        %v4218 = vadd.f32 %v4095, %v4171
        %v4219 = vadd.f32 %v4096, %v4174
        %v4220 = vadd.f32 %v4097, %v4176
        %v4221 = vadd.f32 %v4098, %v4179
        %v4222 = vadd.f32 %v4099, %v4181
        %v4223 = vadd.f32 %v4100, %v4184
        %v4224 = vadd.f32 %v4101, %v4186
        %v4225 = vadd.f32 %v4102, %v4189
        %v4226 = vadd.f32 %v4103, %v4191
        %v4227 = vadd.f32 %v4104, %v4194
        %v4228 = vadd.f32 %v4105, %v4196
        %s4229 = scalar_lea.vmem %s1, 32
        %v4230 = vld [vmem:[%s4229] sm:$0x1]
        %v4231 = vperm.slane %v4230, 0
        %v4232 = vmul.f32 %v3966, %v4231
        %v4233 = vmul.f32 %v539, %v4231
        %v4234 = vmul.f32 %v3967, %v4231
        %v4235 = vmul.f32 %v3968, %v4231
        %v4236 = vmul.f32 %v541, %v4231
        %v4237 = vmul.f32 %v3969, %v4231
        %v4238 = vmul.f32 %v3970, %v4231
        %v4239 = vmul.f32 %v543, %v4231
        %v4240 = vmul.f32 %v3971, %v4231
        %v4241 = vmul.f32 %v3972, %v4231
        %v4242 = vmul.f32 %v545, %v4231
        %v4243 = vmul.f32 %v3973, %v4231
        %v4244 = vmul.f32 %v3974, %v4231
        %v4245 = vmul.f32 %v547, %v4231
        %v4246 = vmul.f32 %v3975, %v4231
        %v4247 = vmul.f32 %v3976, %v4231
        %v4248 = vmul.f32 %v549, %v4231
        %v4249 = vmul.f32 %v3977, %v4231
        %v4250 = vmul.f32 %v3978, %v4231
        %v4251 = vmul.f32 %v551, %v4231
        %v4252 = vmul.f32 %v3979, %v4231
        %v4253 = vmul.f32 %v3980, %v4231
        %v4254 = vmul.f32 %v553, %v4231
        %v4255 = vmul.f32 %v3981, %v4231
        %v4280 = vrot.slane %v4232, 2
        %v4281 = vrot.slane %v4233, 2
        %v4282 = vsel %vm4033, %v4280, %v4281
        %v4283 = vrot.slane %v4234, 2
        %v4284 = vsel %vm4033, %v4281, %v4283
        %v4285 = vrot.slane %v4235, 2
        %v4286 = vrot.slane %v4236, 2
        %v4287 = vsel %vm4033, %v4285, %v4286
        %v4288 = vrot.slane %v4237, 2
        %v4289 = vsel %vm4033, %v4286, %v4288
        %v4290 = vrot.slane %v4238, 2
        %v4291 = vrot.slane %v4239, 2
        %v4292 = vsel %vm4033, %v4290, %v4291
        %v4293 = vrot.slane %v4240, 2
        %v4294 = vsel %vm4033, %v4291, %v4293
        %v4295 = vrot.slane %v4241, 2
        %v4296 = vrot.slane %v4242, 2
        %v4297 = vsel %vm4033, %v4295, %v4296
        %v4298 = vrot.slane %v4243, 2
        %v4299 = vsel %vm4033, %v4296, %v4298
        %v4300 = vrot.slane %v4244, 2
        %v4301 = vrot.slane %v4245, 2
        %v4302 = vsel %vm4033, %v4300, %v4301
        %v4303 = vrot.slane %v4246, 2
        %v4304 = vsel %vm4033, %v4301, %v4303
        %v4305 = vrot.slane %v4247, 2
        %v4306 = vrot.slane %v4248, 2
        %v4307 = vsel %vm4033, %v4305, %v4306
        %v4308 = vrot.slane %v4249, 2
        %v4309 = vsel %vm4033, %v4306, %v4308
        %v4310 = vrot.slane %v4250, 2
        %v4311 = vrot.slane %v4251, 2
        %v4312 = vsel %vm4033, %v4310, %v4311
        %v4313 = vrot.slane %v4252, 2
        %v4314 = vsel %vm4033, %v4311, %v4313
        %v4315 = vrot.slane %v4253, 2
        %v4316 = vrot.slane %v4254, 2
        %v4317 = vsel %vm4033, %v4315, %v4316
        %v4318 = vrot.slane %v4255, 2
        %v4319 = vsel %vm4033, %v4316, %v4318
        %v4336 = vadd.f32 %v4213, %v4282
        %v4337 = vadd.f32 %v4214, %v4284
        %v4338 = vadd.f32 %v4215, %v4287
        %v4339 = vadd.f32 %v4216, %v4289
        %v4340 = vadd.f32 %v4217, %v4292
        %v4341 = vadd.f32 %v4218, %v4294
        %v4342 = vadd.f32 %v4219, %v4297
        %v4343 = vadd.f32 %v4220, %v4299
        %v4344 = vadd.f32 %v4221, %v4302
        %v4345 = vadd.f32 %v4222, %v4304
        %v4346 = vadd.f32 %v4223, %v4307
        %v4347 = vadd.f32 %v4224, %v4309
        %v4348 = vadd.f32 %v4225, %v4312
        %v4349 = vadd.f32 %v4226, %v4314
        %v4350 = vadd.f32 %v4227, %v4317
        %v4351 = vadd.f32 %v4228, %v4319
        %v4352 = vld [vmem:[#allocation2 + $0x8] sm:$0xfc]
        %v4353 = vld [vmem:[#allocation2 + $0x28] sm:$0x3]
        %v4354 = vld [vmem:[#allocation2 + $0x38] sm:$0xfc]
        %v4355 = vld [vmem:[#allocation2 + $0x58] sm:$0x3]
        %v4356 = vld [vmem:[#allocation2 + $0x68] sm:$0xfc]
        %v4357 = vld [vmem:[#allocation2 + $0x88] sm:$0x3]
        %v4358 = vld [vmem:[#allocation2 + $0x98] sm:$0xfc]
        %v4359 = vld [vmem:[#allocation2 + $0xb8] sm:$0x3]
        %v4360 = vld [vmem:[#allocation2 + $0xc8] sm:$0xfc]
        %v4361 = vld [vmem:[#allocation2 + $0xe8] sm:$0x3]
        %v4362 = vld [vmem:[#allocation2 + $0xf8] sm:$0xfc]
        %v4363 = vld [vmem:[#allocation2 + $0x118] sm:$0x3]
        %v4364 = vld [vmem:[#allocation2 + $0x128] sm:$0xfc]
        %v4365 = vld [vmem:[#allocation2 + $0x148] sm:$0x3]
        %v4366 = vld [vmem:[#allocation2 + $0x158] sm:$0xfc]
        %v4367 = vld [vmem:[#allocation2 + $0x178] sm:$0x3]
        %v4368 = vld [vmem:[#allocation2 + $0x188] sm:$0xfc]
        %v4369 = vld [vmem:[#allocation2 + $0x1a8] sm:$0x3]
        %v4370 = vld [vmem:[#allocation2 + $0x1b8] sm:$0xfc]
        %v4371 = vld [vmem:[#allocation2 + $0x1d8] sm:$0x3]
        %v4372 = vld [vmem:[#allocation2 + $0x1e8] sm:$0xfc]
        %v4373 = vld [vmem:[#allocation2 + $0x208] sm:$0x3]
        %v4374 = vld [vmem:[#allocation2 + $0x218] sm:$0xfc]
        %v4375 = vld [vmem:[#allocation2 + $0x238] sm:$0x3]
        %v4376 = vld [vmem:[%s3982 + $0x1] sm:$0x1]
        %v4377 = vperm.slane %v4376, 0
        %4379 = vrot.lane.b32.xlu0 %v4377, 4
        %v4380 = vpop.permute.xlu0 %4379
        %v4382 = vmul.f32 %v3958, %v4380
        %v4383 = vmul.f32 %v4352, %v4380
        %v4384 = vmul.f32 %v531, %v4380
        %v4385 = vmul.f32 %v659, %v4380
        %v4386 = vmul.f32 %v3959, %v4380
        %v4387 = vmul.f32 %v4353, %v4380
        %v4388 = vmul.f32 %v3960, %v4380
        %v4389 = vmul.f32 %v4354, %v4380
        %v4390 = vmul.f32 %v533, %v4380
        %v4391 = vmul.f32 %v661, %v4380
        %v4392 = vmul.f32 %v3961, %v4380
        %v4393 = vmul.f32 %v4355, %v4380
        %v4394 = vmul.f32 %v3962, %v4380
        %v4395 = vmul.f32 %v4356, %v4380
        %v4396 = vmul.f32 %v535, %v4380
        %v4397 = vmul.f32 %v663, %v4380
        %v4398 = vmul.f32 %v3963, %v4380
        %v4399 = vmul.f32 %v4357, %v4380
        %v4400 = vmul.f32 %v3964, %v4380
        %v4401 = vmul.f32 %v4358, %v4380
        %v4402 = vmul.f32 %v537, %v4380
        %v4403 = vmul.f32 %v665, %v4380
        %v4404 = vmul.f32 %v3965, %v4380
        %v4405 = vmul.f32 %v4359, %v4380
        %v4406 = vmul.f32 %v3966, %v4380
        %v4407 = vmul.f32 %v4360, %v4380
        %v4408 = vmul.f32 %v539, %v4380
        %v4409 = vmul.f32 %v667, %v4380
        %v4410 = vmul.f32 %v3967, %v4380
        %v4411 = vmul.f32 %v4361, %v4380
        %v4412 = vmul.f32 %v3968, %v4380
        %v4413 = vmul.f32 %v4362, %v4380
        %v4414 = vmul.f32 %v541, %v4380
        %v4415 = vmul.f32 %v669, %v4380
        %v4416 = vmul.f32 %v3969, %v4380
        %v4417 = vmul.f32 %v4363, %v4380
        %v4418 = vmul.f32 %v3970, %v4380
        %v4419 = vmul.f32 %v4364, %v4380
        %v4420 = vmul.f32 %v543, %v4380
        %v4421 = vmul.f32 %v671, %v4380
        %v4422 = vmul.f32 %v3971, %v4380
        %v4423 = vmul.f32 %v4365, %v4380
        %v4424 = vmul.f32 %v3972, %v4380
        %v4425 = vmul.f32 %v4366, %v4380
        %v4426 = vmul.f32 %v545, %v4380
        %v4427 = vmul.f32 %v673, %v4380
        %v4428 = vmul.f32 %v3973, %v4380
        %v4429 = vmul.f32 %v4367, %v4380
        %v4478 = vrot.slane %v4382, 2
        %v4479 = vrot.slane %v4384, 2
        %v4480 = vsel %vm4033, %v4478, %v4479
        %v4481 = vrot.slane %v4383, 2
        %v4482 = vrot.slane %v4385, 2
        %v4483 = vsel %vm4033, %v4481, %v4482
        %v4484 = vrot.slane %v4386, 2
        %v4485 = vsel %vm4033, %v4479, %v4484
        %v4486 = vrot.slane %v4387, 2
        %v4487 = vsel %vm4033, %v4482, %v4486
        %v4488 = vrot.slane %v4388, 2
        %v4489 = vrot.slane %v4390, 2
        %v4490 = vsel %vm4033, %v4488, %v4489
        %v4491 = vrot.slane %v4389, 2
        %v4492 = vrot.slane %v4391, 2
        %v4493 = vsel %vm4033, %v4491, %v4492
        %v4494 = vrot.slane %v4392, 2
        %v4495 = vsel %vm4033, %v4489, %v4494
        %v4496 = vrot.slane %v4393, 2
        %v4497 = vsel %vm4033, %v4492, %v4496
        %v4498 = vrot.slane %v4394, 2
        %v4499 = vrot.slane %v4396, 2
        %v4500 = vsel %vm4033, %v4498, %v4499
        %v4501 = vrot.slane %v4395, 2
        %v4502 = vrot.slane %v4397, 2
        %v4503 = vsel %vm4033, %v4501, %v4502
        %v4504 = vrot.slane %v4398, 2
        %v4505 = vsel %vm4033, %v4499, %v4504
        %v4506 = vrot.slane %v4399, 2
        %v4507 = vsel %vm4033, %v4502, %v4506
        %v4508 = vrot.slane %v4400, 2
        %v4509 = vrot.slane %v4402, 2
        %v4510 = vsel %vm4033, %v4508, %v4509
        %v4511 = vrot.slane %v4401, 2
        %v4512 = vrot.slane %v4403, 2
        %v4513 = vsel %vm4033, %v4511, %v4512
        %v4514 = vrot.slane %v4404, 2
        %v4515 = vsel %vm4033, %v4509, %v4514
        %v4516 = vrot.slane %v4405, 2
        %v4517 = vsel %vm4033, %v4512, %v4516
        %v4518 = vrot.slane %v4406, 2
        %v4519 = vrot.slane %v4408, 2
        %v4520 = vsel %vm4033, %v4518, %v4519
        %v4521 = vrot.slane %v4407, 2
        %v4522 = vrot.slane %v4409, 2
        %v4523 = vsel %vm4033, %v4521, %v4522
        %v4524 = vrot.slane %v4410, 2
        %v4525 = vsel %vm4033, %v4519, %v4524
        %v4526 = vrot.slane %v4411, 2
        %v4527 = vsel %vm4033, %v4522, %v4526
        %v4528 = vrot.slane %v4412, 2
        %v4529 = vrot.slane %v4414, 2
        %v4530 = vsel %vm4033, %v4528, %v4529
        %v4531 = vrot.slane %v4413, 2
        %v4532 = vrot.slane %v4415, 2
        %v4533 = vsel %vm4033, %v4531, %v4532
        %v4534 = vrot.slane %v4416, 2
        %v4535 = vsel %vm4033, %v4529, %v4534
        %v4536 = vrot.slane %v4417, 2
        %v4537 = vsel %vm4033, %v4532, %v4536
        %v4538 = vrot.slane %v4418, 2
        %v4539 = vrot.slane %v4420, 2
        %v4540 = vsel %vm4033, %v4538, %v4539
        %v4541 = vrot.slane %v4419, 2
        %v4542 = vrot.slane %v4421, 2
        %v4543 = vsel %vm4033, %v4541, %v4542
        %v4544 = vrot.slane %v4422, 2
        %v4545 = vsel %vm4033, %v4539, %v4544
        %v4546 = vrot.slane %v4423, 2
        %v4547 = vsel %vm4033, %v4542, %v4546
        %v4548 = vrot.slane %v4424, 2
        %v4549 = vrot.slane %v4426, 2
        %v4550 = vsel %vm4033, %v4548, %v4549
        %v4551 = vrot.slane %v4425, 2
        %v4552 = vrot.slane %v4427, 2
        %v4553 = vsel %vm4033, %v4551, %v4552
        %v4554 = vrot.slane %v4428, 2
        %v4555 = vsel %vm4033, %v4549, %v4554
        %v4556 = vrot.slane %v4429, 2
        %v4557 = vsel %vm4033, %v4552, %v4556
        %4558 = vrot.lane.b32.xlu0 %v4480, 124
        %v4559 = vpop.permute.xlu0 %4558
        %4560 = vrot.lane.b32.xlu0 %v4483, 124
        %v4561 = vpop.permute.xlu0 %4560
        %4562 = vrot.lane.b32.xlu0 %v4485, 124
        %v4563 = vpop.permute.xlu0 %4562
        %4564 = vrot.lane.b32.xlu0 %v4487, 124
        %v4565 = vpop.permute.xlu0 %4564
        %4566 = vrot.lane.b32.xlu0 %v4490, 124
        %v4567 = vpop.permute.xlu0 %4566
        %4568 = vrot.lane.b32.xlu0 %v4493, 124
        %v4569 = vpop.permute.xlu0 %4568
        %4570 = vrot.lane.b32.xlu0 %v4495, 124
        %v4571 = vpop.permute.xlu0 %4570
        %4572 = vrot.lane.b32.xlu0 %v4497, 124
        %v4573 = vpop.permute.xlu0 %4572
        %4574 = vrot.lane.b32.xlu0 %v4500, 124
        %v4575 = vpop.permute.xlu0 %4574
        %4576 = vrot.lane.b32.xlu0 %v4503, 124
        %v4577 = vpop.permute.xlu0 %4576
        %4578 = vrot.lane.b32.xlu0 %v4505, 124
        %v4579 = vpop.permute.xlu0 %4578
        %4580 = vrot.lane.b32.xlu0 %v4507, 124
        %v4581 = vpop.permute.xlu0 %4580
        %4582 = vrot.lane.b32.xlu0 %v4510, 124
        %v4583 = vpop.permute.xlu0 %4582
        %4584 = vrot.lane.b32.xlu0 %v4513, 124
        %v4585 = vpop.permute.xlu0 %4584
        %4586 = vrot.lane.b32.xlu0 %v4515, 124
        %v4587 = vpop.permute.xlu0 %4586
        %4588 = vrot.lane.b32.xlu0 %v4517, 124
        %v4589 = vpop.permute.xlu0 %4588
        %4590 = vrot.lane.b32.xlu0 %v4520, 124
        %v4591 = vpop.permute.xlu0 %4590
        %4592 = vrot.lane.b32.xlu0 %v4523, 124
        %v4593 = vpop.permute.xlu0 %4592
        %4594 = vrot.lane.b32.xlu0 %v4525, 124
        %v4595 = vpop.permute.xlu0 %4594
        %4596 = vrot.lane.b32.xlu0 %v4527, 124
        %v4597 = vpop.permute.xlu0 %4596
        %4598 = vrot.lane.b32.xlu0 %v4530, 124
        %v4599 = vpop.permute.xlu0 %4598
        %4600 = vrot.lane.b32.xlu0 %v4533, 124
        %v4601 = vpop.permute.xlu0 %4600
        %4602 = vrot.lane.b32.xlu0 %v4535, 124
        %v4603 = vpop.permute.xlu0 %4602
        %4604 = vrot.lane.b32.xlu0 %v4537, 124
        %v4605 = vpop.permute.xlu0 %4604
        %4606 = vrot.lane.b32.xlu0 %v4540, 124
        %v4607 = vpop.permute.xlu0 %4606
        %4608 = vrot.lane.b32.xlu0 %v4543, 124
        %v4609 = vpop.permute.xlu0 %4608
        %4610 = vrot.lane.b32.xlu0 %v4545, 124
        %v4611 = vpop.permute.xlu0 %4610
        %4612 = vrot.lane.b32.xlu0 %v4547, 124
        %v4613 = vpop.permute.xlu0 %4612
        %4614 = vrot.lane.b32.xlu0 %v4550, 124
        %v4615 = vpop.permute.xlu0 %4614
        %4616 = vrot.lane.b32.xlu0 %v4553, 124
        %v4617 = vpop.permute.xlu0 %4616
        %4618 = vrot.lane.b32.xlu0 %v4555, 124
        %v4619 = vpop.permute.xlu0 %4618
        %4620 = vrot.lane.b32.xlu0 %v4557, 124
        %v4621 = vpop.permute.xlu0 %4620
        %v4622 = vsel %vm816, %v4559, %v4561
        %v4623 = vsel %vm816, %v4563, %v4565
        %v4624 = vsel %vm816, %v4567, %v4569
        %v4625 = vsel %vm816, %v4571, %v4573
        %v4626 = vsel %vm816, %v4575, %v4577
        %v4627 = vsel %vm816, %v4579, %v4581
        %v4628 = vsel %vm816, %v4583, %v4585
        %v4629 = vsel %vm816, %v4587, %v4589
        %v4630 = vsel %vm816, %v4591, %v4593
        %v4631 = vsel %vm816, %v4595, %v4597
        %v4632 = vsel %vm816, %v4599, %v4601
        %v4633 = vsel %vm816, %v4603, %v4605
        %v4634 = vsel %vm816, %v4607, %v4609
        %v4635 = vsel %vm816, %v4611, %v4613
        %v4636 = vsel %vm816, %v4615, %v4617
        %v4637 = vsel %vm816, %v4619, %v4621
        %v4654 = vadd.f32 %v4336, %v4622
        %v4655 = vadd.f32 %v4337, %v4623
        %v4656 = vadd.f32 %v4338, %v4624
        %v4657 = vadd.f32 %v4339, %v4625
        %v4658 = vadd.f32 %v4340, %v4626
        %v4659 = vadd.f32 %v4341, %v4627
        %v4660 = vadd.f32 %v4342, %v4628
        %v4661 = vadd.f32 %v4343, %v4629
        %v4662 = vadd.f32 %v4344, %v4630
        %v4663 = vadd.f32 %v4345, %v4631
        %v4664 = vadd.f32 %v4346, %v4632
        %v4665 = vadd.f32 %v4347, %v4633
        %v4666 = vadd.f32 %v4348, %v4634
        %v4667 = vadd.f32 %v4349, %v4635
        %v4668 = vadd.f32 %v4350, %v4636
        %v4669 = vadd.f32 %v4351, %v4637
        %v4670 = vld [vmem:[%s4106 + $0x1] sm:$0x1]
        %v4671 = vperm.slane %v4670, 0
        %4673 = vrot.lane.b32.xlu0 %v4671, 4
        %v4674 = vpop.permute.xlu0 %4673
        %v4676 = vmul.f32 %v3962, %v4674
        %v4677 = vmul.f32 %v4356, %v4674
        %v4678 = vmul.f32 %v535, %v4674
        %v4679 = vmul.f32 %v663, %v4674
        %v4680 = vmul.f32 %v3963, %v4674
        %v4681 = vmul.f32 %v4357, %v4674
        %v4682 = vmul.f32 %v3964, %v4674
        %v4683 = vmul.f32 %v4358, %v4674
        %v4684 = vmul.f32 %v537, %v4674
        %v4685 = vmul.f32 %v665, %v4674
        %v4686 = vmul.f32 %v3965, %v4674
        %v4687 = vmul.f32 %v4359, %v4674
        %v4688 = vmul.f32 %v3966, %v4674
        %v4689 = vmul.f32 %v4360, %v4674
        %v4690 = vmul.f32 %v539, %v4674
        %v4691 = vmul.f32 %v667, %v4674
        %v4692 = vmul.f32 %v3967, %v4674
        %v4693 = vmul.f32 %v4361, %v4674
        %v4694 = vmul.f32 %v3968, %v4674
        %v4695 = vmul.f32 %v4362, %v4674
        %v4696 = vmul.f32 %v541, %v4674
        %v4697 = vmul.f32 %v669, %v4674
        %v4698 = vmul.f32 %v3969, %v4674
        %v4699 = vmul.f32 %v4363, %v4674
        %v4700 = vmul.f32 %v3970, %v4674
        %v4701 = vmul.f32 %v4364, %v4674
        %v4702 = vmul.f32 %v543, %v4674
        %v4703 = vmul.f32 %v671, %v4674
        %v4704 = vmul.f32 %v3971, %v4674
        %v4705 = vmul.f32 %v4365, %v4674
        %v4706 = vmul.f32 %v3972, %v4674
        %v4707 = vmul.f32 %v4366, %v4674
        %v4708 = vmul.f32 %v545, %v4674
        %v4709 = vmul.f32 %v673, %v4674
        %v4710 = vmul.f32 %v3973, %v4674
        %v4711 = vmul.f32 %v4367, %v4674
        %v4712 = vmul.f32 %v3974, %v4674
        %v4713 = vmul.f32 %v4368, %v4674
        %v4714 = vmul.f32 %v547, %v4674
        %v4715 = vmul.f32 %v675, %v4674
        %v4716 = vmul.f32 %v3975, %v4674
        %v4717 = vmul.f32 %v4369, %v4674
        %v4718 = vmul.f32 %v3976, %v4674
        %v4719 = vmul.f32 %v4370, %v4674
        %v4720 = vmul.f32 %v549, %v4674
        %v4721 = vmul.f32 %v677, %v4674
        %v4722 = vmul.f32 %v3977, %v4674
        %v4723 = vmul.f32 %v4371, %v4674
        %v4772 = vrot.slane %v4676, 2
        %v4773 = vrot.slane %v4678, 2
        %v4774 = vsel %vm4033, %v4772, %v4773
        %v4775 = vrot.slane %v4677, 2
        %v4776 = vrot.slane %v4679, 2
        %v4777 = vsel %vm4033, %v4775, %v4776
        %v4778 = vrot.slane %v4680, 2
        %v4779 = vsel %vm4033, %v4773, %v4778
        %v4780 = vrot.slane %v4681, 2
        %v4781 = vsel %vm4033, %v4776, %v4780
        %v4782 = vrot.slane %v4682, 2
        %v4783 = vrot.slane %v4684, 2
        %v4784 = vsel %vm4033, %v4782, %v4783
        %v4785 = vrot.slane %v4683, 2
        %v4786 = vrot.slane %v4685, 2
        %v4787 = vsel %vm4033, %v4785, %v4786
        %v4788 = vrot.slane %v4686, 2
        %v4789 = vsel %vm4033, %v4783, %v4788
        %v4790 = vrot.slane %v4687, 2
        %v4791 = vsel %vm4033, %v4786, %v4790
        %v4792 = vrot.slane %v4688, 2
        %v4793 = vrot.slane %v4690, 2
        %v4794 = vsel %vm4033, %v4792, %v4793
        %v4795 = vrot.slane %v4689, 2
        %v4796 = vrot.slane %v4691, 2
        %v4797 = vsel %vm4033, %v4795, %v4796
        %v4798 = vrot.slane %v4692, 2
        %v4799 = vsel %vm4033, %v4793, %v4798
        %v4800 = vrot.slane %v4693, 2
        %v4801 = vsel %vm4033, %v4796, %v4800
        %v4802 = vrot.slane %v4694, 2
        %v4803 = vrot.slane %v4696, 2
        %v4804 = vsel %vm4033, %v4802, %v4803
        %v4805 = vrot.slane %v4695, 2
        %v4806 = vrot.slane %v4697, 2
        %v4807 = vsel %vm4033, %v4805, %v4806
        %v4808 = vrot.slane %v4698, 2
        %v4809 = vsel %vm4033, %v4803, %v4808
        %v4810 = vrot.slane %v4699, 2
        %v4811 = vsel %vm4033, %v4806, %v4810
        %v4812 = vrot.slane %v4700, 2
        %v4813 = vrot.slane %v4702, 2
        %v4814 = vsel %vm4033, %v4812, %v4813
        %v4815 = vrot.slane %v4701, 2
        %v4816 = vrot.slane %v4703, 2
        %v4817 = vsel %vm4033, %v4815, %v4816
        %v4818 = vrot.slane %v4704, 2
        %v4819 = vsel %vm4033, %v4813, %v4818
        %v4820 = vrot.slane %v4705, 2
        %v4821 = vsel %vm4033, %v4816, %v4820
        %v4822 = vrot.slane %v4706, 2
        %v4823 = vrot.slane %v4708, 2
        %v4824 = vsel %vm4033, %v4822, %v4823
        %v4825 = vrot.slane %v4707, 2
        %v4826 = vrot.slane %v4709, 2
        %v4827 = vsel %vm4033, %v4825, %v4826
        %v4828 = vrot.slane %v4710, 2
        %v4829 = vsel %vm4033, %v4823, %v4828
        %v4830 = vrot.slane %v4711, 2
        %v4831 = vsel %vm4033, %v4826, %v4830
        %v4832 = vrot.slane %v4712, 2
        %v4833 = vrot.slane %v4714, 2
        %v4834 = vsel %vm4033, %v4832, %v4833
        %v4835 = vrot.slane %v4713, 2
        %v4836 = vrot.slane %v4715, 2
        %v4837 = vsel %vm4033, %v4835, %v4836
        %v4838 = vrot.slane %v4716, 2
        %v4839 = vsel %vm4033, %v4833, %v4838
        %v4840 = vrot.slane %v4717, 2
        %v4841 = vsel %vm4033, %v4836, %v4840
        %v4842 = vrot.slane %v4718, 2
        %v4843 = vrot.slane %v4720, 2
        %v4844 = vsel %vm4033, %v4842, %v4843
        %v4845 = vrot.slane %v4719, 2
        %v4846 = vrot.slane %v4721, 2
        %v4847 = vsel %vm4033, %v4845, %v4846
        %v4848 = vrot.slane %v4722, 2
        %v4849 = vsel %vm4033, %v4843, %v4848
        %v4850 = vrot.slane %v4723, 2
        %v4851 = vsel %vm4033, %v4846, %v4850
        %4852 = vrot.lane.b32.xlu0 %v4774, 124
        %v4853 = vpop.permute.xlu0 %4852
        %4854 = vrot.lane.b32.xlu0 %v4777, 124
        %v4855 = vpop.permute.xlu0 %4854
        %4856 = vrot.lane.b32.xlu0 %v4779, 124
        %v4857 = vpop.permute.xlu0 %4856
        %4858 = vrot.lane.b32.xlu0 %v4781, 124
        %v4859 = vpop.permute.xlu0 %4858
        %4860 = vrot.lane.b32.xlu0 %v4784, 124
        %v4861 = vpop.permute.xlu0 %4860
        %4862 = vrot.lane.b32.xlu0 %v4787, 124
        %v4863 = vpop.permute.xlu0 %4862
        %4864 = vrot.lane.b32.xlu0 %v4789, 124
        %v4865 = vpop.permute.xlu0 %4864
        %4866 = vrot.lane.b32.xlu0 %v4791, 124
        %v4867 = vpop.permute.xlu0 %4866
        %4868 = vrot.lane.b32.xlu0 %v4794, 124
        %v4869 = vpop.permute.xlu0 %4868
        %4870 = vrot.lane.b32.xlu0 %v4797, 124
        %v4871 = vpop.permute.xlu0 %4870
        %4872 = vrot.lane.b32.xlu0 %v4799, 124
        %v4873 = vpop.permute.xlu0 %4872
        %4874 = vrot.lane.b32.xlu0 %v4801, 124
        %v4875 = vpop.permute.xlu0 %4874
        %4876 = vrot.lane.b32.xlu0 %v4804, 124
        %v4877 = vpop.permute.xlu0 %4876
        %4878 = vrot.lane.b32.xlu0 %v4807, 124
        %v4879 = vpop.permute.xlu0 %4878
        %4880 = vrot.lane.b32.xlu0 %v4809, 124
        %v4881 = vpop.permute.xlu0 %4880
        %4882 = vrot.lane.b32.xlu0 %v4811, 124
        %v4883 = vpop.permute.xlu0 %4882
        %4884 = vrot.lane.b32.xlu0 %v4814, 124
        %v4885 = vpop.permute.xlu0 %4884
        %4886 = vrot.lane.b32.xlu0 %v4817, 124
        %v4887 = vpop.permute.xlu0 %4886
        %4888 = vrot.lane.b32.xlu0 %v4819, 124
        %v4889 = vpop.permute.xlu0 %4888
        %4890 = vrot.lane.b32.xlu0 %v4821, 124
        %v4891 = vpop.permute.xlu0 %4890
        %4892 = vrot.lane.b32.xlu0 %v4824, 124
        %v4893 = vpop.permute.xlu0 %4892
        %4894 = vrot.lane.b32.xlu0 %v4827, 124
        %v4895 = vpop.permute.xlu0 %4894
        %4896 = vrot.lane.b32.xlu0 %v4829, 124
        %v4897 = vpop.permute.xlu0 %4896
        %4898 = vrot.lane.b32.xlu0 %v4831, 124
        %v4899 = vpop.permute.xlu0 %4898
        %4900 = vrot.lane.b32.xlu0 %v4834, 124
        %v4901 = vpop.permute.xlu0 %4900
        %4902 = vrot.lane.b32.xlu0 %v4837, 124
        %v4903 = vpop.permute.xlu0 %4902
        %4904 = vrot.lane.b32.xlu0 %v4839, 124
        %v4905 = vpop.permute.xlu0 %4904
        %4906 = vrot.lane.b32.xlu0 %v4841, 124
        %v4907 = vpop.permute.xlu0 %4906
        %4908 = vrot.lane.b32.xlu0 %v4844, 124
        %v4909 = vpop.permute.xlu0 %4908
        %4910 = vrot.lane.b32.xlu0 %v4847, 124
        %v4911 = vpop.permute.xlu0 %4910
        %4912 = vrot.lane.b32.xlu0 %v4849, 124
        %v4913 = vpop.permute.xlu0 %4912
        %4914 = vrot.lane.b32.xlu0 %v4851, 124
        %v4915 = vpop.permute.xlu0 %4914
        %v4916 = vsel %vm816, %v4853, %v4855
        %v4917 = vsel %vm816, %v4857, %v4859
        %v4918 = vsel %vm816, %v4861, %v4863
        %v4919 = vsel %vm816, %v4865, %v4867
        %v4920 = vsel %vm816, %v4869, %v4871
        %v4921 = vsel %vm816, %v4873, %v4875
        %v4922 = vsel %vm816, %v4877, %v4879
        %v4923 = vsel %vm816, %v4881, %v4883
        %v4924 = vsel %vm816, %v4885, %v4887
        %v4925 = vsel %vm816, %v4889, %v4891
        %v4926 = vsel %vm816, %v4893, %v4895
        %v4927 = vsel %vm816, %v4897, %v4899
        %v4928 = vsel %vm816, %v4901, %v4903
        %v4929 = vsel %vm816, %v4905, %v4907
        %v4930 = vsel %vm816, %v4909, %v4911
        %v4931 = vsel %vm816, %v4913, %v4915
        %v4948 = vadd.f32 %v4654, %v4916
        %v4949 = vadd.f32 %v4655, %v4917
        %v4950 = vadd.f32 %v4656, %v4918
        %v4951 = vadd.f32 %v4657, %v4919
        %v4952 = vadd.f32 %v4658, %v4920
        %v4953 = vadd.f32 %v4659, %v4921
        %v4954 = vadd.f32 %v4660, %v4922
        %v4955 = vadd.f32 %v4661, %v4923
        %v4956 = vadd.f32 %v4662, %v4924
        %v4957 = vadd.f32 %v4663, %v4925
        %v4958 = vadd.f32 %v4664, %v4926
        %v4959 = vadd.f32 %v4665, %v4927
        %v4960 = vadd.f32 %v4666, %v4928
        %v4961 = vadd.f32 %v4667, %v4929
        %v4962 = vadd.f32 %v4668, %v4930
        %v4963 = vadd.f32 %v4669, %v4931
        %v4964 = vld [vmem:[%s4229 + $0x1] sm:$0x1]
        %v4965 = vperm.slane %v4964, 0
        %4967 = vrot.lane.b32.xlu0 %v4965, 4
        %v4968 = vpop.permute.xlu0 %4967
        %v4970 = vmul.f32 %v3966, %v4968
        %v4971 = vmul.f32 %v4360, %v4968
        %v4972 = vmul.f32 %v539, %v4968
        %v4973 = vmul.f32 %v667, %v4968
        %v4974 = vmul.f32 %v3967, %v4968
        %v4975 = vmul.f32 %v4361, %v4968
        %v4976 = vmul.f32 %v3968, %v4968
        %v4977 = vmul.f32 %v4362, %v4968
        %v4978 = vmul.f32 %v541, %v4968
        %v4979 = vmul.f32 %v669, %v4968
        %v4980 = vmul.f32 %v3969, %v4968
        %v4981 = vmul.f32 %v4363, %v4968
        %v4982 = vmul.f32 %v3970, %v4968
        %v4983 = vmul.f32 %v4364, %v4968
        %v4984 = vmul.f32 %v543, %v4968
        %v4985 = vmul.f32 %v671, %v4968
        %v4986 = vmul.f32 %v3971, %v4968
        %v4987 = vmul.f32 %v4365, %v4968
        %v4988 = vmul.f32 %v3972, %v4968
        %v4989 = vmul.f32 %v4366, %v4968
        %v4990 = vmul.f32 %v545, %v4968
        %v4991 = vmul.f32 %v673, %v4968
        %v4992 = vmul.f32 %v3973, %v4968
        %v4993 = vmul.f32 %v4367, %v4968
        %v4994 = vmul.f32 %v3974, %v4968
        %v4995 = vmul.f32 %v4368, %v4968
        %v4996 = vmul.f32 %v547, %v4968
        %v4997 = vmul.f32 %v675, %v4968
        %v4998 = vmul.f32 %v3975, %v4968
        %v4999 = vmul.f32 %v4369, %v4968
        %v5000 = vmul.f32 %v3976, %v4968
        %v5001 = vmul.f32 %v4370, %v4968
        %v5002 = vmul.f32 %v549, %v4968
        %v5003 = vmul.f32 %v677, %v4968
        %v5004 = vmul.f32 %v3977, %v4968
        %v5005 = vmul.f32 %v4371, %v4968
        %v5006 = vmul.f32 %v3978, %v4968
        %v5007 = vmul.f32 %v4372, %v4968
        %v5008 = vmul.f32 %v551, %v4968
        %v5009 = vmul.f32 %v679, %v4968
        %v5010 = vmul.f32 %v3979, %v4968
        %v5011 = vmul.f32 %v4373, %v4968
        %v5012 = vmul.f32 %v3980, %v4968
        %v5013 = vmul.f32 %v4374, %v4968
        %v5014 = vmul.f32 %v553, %v4968
        %v5015 = vmul.f32 %v681, %v4968
        %v5016 = vmul.f32 %v3981, %v4968
        %v5017 = vmul.f32 %v4375, %v4968
        %v5066 = vrot.slane %v4970, 2
        %v5067 = vrot.slane %v4972, 2
        %v5068 = vsel %vm4033, %v5066, %v5067
        %v5069 = vrot.slane %v4971, 2
        %v5070 = vrot.slane %v4973, 2
        %v5071 = vsel %vm4033, %v5069, %v5070
        %v5072 = vrot.slane %v4974, 2
        %v5073 = vsel %vm4033, %v5067, %v5072
        %v5074 = vrot.slane %v4975, 2
        %v5075 = vsel %vm4033, %v5070, %v5074
        %v5076 = vrot.slane %v4976, 2
        %v5077 = vrot.slane %v4978, 2
        %v5078 = vsel %vm4033, %v5076, %v5077
        %v5079 = vrot.slane %v4977, 2
        %v5080 = vrot.slane %v4979, 2
        %v5081 = vsel %vm4033, %v5079, %v5080
        %v5082 = vrot.slane %v4980, 2
        %v5083 = vsel %vm4033, %v5077, %v5082
        %v5084 = vrot.slane %v4981, 2
        %v5085 = vsel %vm4033, %v5080, %v5084
        %v5086 = vrot.slane %v4982, 2
        %v5087 = vrot.slane %v4984, 2
        %v5088 = vsel %vm4033, %v5086, %v5087
        %v5089 = vrot.slane %v4983, 2
        %v5090 = vrot.slane %v4985, 2
        %v5091 = vsel %vm4033, %v5089, %v5090
        %v5092 = vrot.slane %v4986, 2
        %v5093 = vsel %vm4033, %v5087, %v5092
        %v5094 = vrot.slane %v4987, 2
        %v5095 = vsel %vm4033, %v5090, %v5094
        %v5096 = vrot.slane %v4988, 2
        %v5097 = vrot.slane %v4990, 2
        %v5098 = vsel %vm4033, %v5096, %v5097
        %v5099 = vrot.slane %v4989, 2
        %v5100 = vrot.slane %v4991, 2
        %v5101 = vsel %vm4033, %v5099, %v5100
        %v5102 = vrot.slane %v4992, 2
        %v5103 = vsel %vm4033, %v5097, %v5102
        %v5104 = vrot.slane %v4993, 2
        %v5105 = vsel %vm4033, %v5100, %v5104
        %v5106 = vrot.slane %v4994, 2
        %v5107 = vrot.slane %v4996, 2
        %v5108 = vsel %vm4033, %v5106, %v5107
        %v5109 = vrot.slane %v4995, 2
        %v5110 = vrot.slane %v4997, 2
        %v5111 = vsel %vm4033, %v5109, %v5110
        %v5112 = vrot.slane %v4998, 2
        %v5113 = vsel %vm4033, %v5107, %v5112
        %v5114 = vrot.slane %v4999, 2
        %v5115 = vsel %vm4033, %v5110, %v5114
        %v5116 = vrot.slane %v5000, 2
        %v5117 = vrot.slane %v5002, 2
        %v5118 = vsel %vm4033, %v5116, %v5117
        %v5119 = vrot.slane %v5001, 2
        %v5120 = vrot.slane %v5003, 2
        %v5121 = vsel %vm4033, %v5119, %v5120
        %v5122 = vrot.slane %v5004, 2
        %v5123 = vsel %vm4033, %v5117, %v5122
        %v5124 = vrot.slane %v5005, 2
        %v5125 = vsel %vm4033, %v5120, %v5124
        %v5126 = vrot.slane %v5006, 2
        %v5127 = vrot.slane %v5008, 2
        %v5128 = vsel %vm4033, %v5126, %v5127
        %v5129 = vrot.slane %v5007, 2
        %v5130 = vrot.slane %v5009, 2
        %v5131 = vsel %vm4033, %v5129, %v5130
        %v5132 = vrot.slane %v5010, 2
        %v5133 = vsel %vm4033, %v5127, %v5132
        %v5134 = vrot.slane %v5011, 2
        %v5135 = vsel %vm4033, %v5130, %v5134
        %v5136 = vrot.slane %v5012, 2
        %v5137 = vrot.slane %v5014, 2
        %v5138 = vsel %vm4033, %v5136, %v5137
        %v5139 = vrot.slane %v5013, 2
        %v5140 = vrot.slane %v5015, 2
        %v5141 = vsel %vm4033, %v5139, %v5140
        %v5142 = vrot.slane %v5016, 2
        %v5143 = vsel %vm4033, %v5137, %v5142
        %v5144 = vrot.slane %v5017, 2
        %v5145 = vsel %vm4033, %v5140, %v5144
        %5146 = vrot.lane.b32.xlu0 %v5068, 124
        %v5147 = vpop.permute.xlu0 %5146
        %5148 = vrot.lane.b32.xlu0 %v5071, 124
        %v5149 = vpop.permute.xlu0 %5148
        %5150 = vrot.lane.b32.xlu0 %v5073, 124
        %v5151 = vpop.permute.xlu0 %5150
        %5152 = vrot.lane.b32.xlu0 %v5075, 124
        %v5153 = vpop.permute.xlu0 %5152
        %5154 = vrot.lane.b32.xlu0 %v5078, 124
        %v5155 = vpop.permute.xlu0 %5154
        %5156 = vrot.lane.b32.xlu0 %v5081, 124
        %v5157 = vpop.permute.xlu0 %5156
        %5158 = vrot.lane.b32.xlu0 %v5083, 124
        %v5159 = vpop.permute.xlu0 %5158
        %5160 = vrot.lane.b32.xlu0 %v5085, 124
        %v5161 = vpop.permute.xlu0 %5160
        %5162 = vrot.lane.b32.xlu0 %v5088, 124
        %v5163 = vpop.permute.xlu0 %5162
        %5164 = vrot.lane.b32.xlu0 %v5091, 124
        %v5165 = vpop.permute.xlu0 %5164
        %5166 = vrot.lane.b32.xlu0 %v5093, 124
        %v5167 = vpop.permute.xlu0 %5166
        %5168 = vrot.lane.b32.xlu0 %v5095, 124
        %v5169 = vpop.permute.xlu0 %5168
        %5170 = vrot.lane.b32.xlu0 %v5098, 124
        %v5171 = vpop.permute.xlu0 %5170
        %5172 = vrot.lane.b32.xlu0 %v5101, 124
        %v5173 = vpop.permute.xlu0 %5172
        %5174 = vrot.lane.b32.xlu0 %v5103, 124
        %v5175 = vpop.permute.xlu0 %5174
        %5176 = vrot.lane.b32.xlu0 %v5105, 124
        %v5177 = vpop.permute.xlu0 %5176
        %5178 = vrot.lane.b32.xlu0 %v5108, 124
        %v5179 = vpop.permute.xlu0 %5178
        %5180 = vrot.lane.b32.xlu0 %v5111, 124
        %v5181 = vpop.permute.xlu0 %5180
        %5182 = vrot.lane.b32.xlu0 %v5113, 124
        %v5183 = vpop.permute.xlu0 %5182
        %5184 = vrot.lane.b32.xlu0 %v5115, 124
        %v5185 = vpop.permute.xlu0 %5184
        %5186 = vrot.lane.b32.xlu0 %v5118, 124
        %v5187 = vpop.permute.xlu0 %5186
        %5188 = vrot.lane.b32.xlu0 %v5121, 124
        %v5189 = vpop.permute.xlu0 %5188
        %5190 = vrot.lane.b32.xlu0 %v5123, 124
        %v5191 = vpop.permute.xlu0 %5190
        %5192 = vrot.lane.b32.xlu0 %v5125, 124
        %v5193 = vpop.permute.xlu0 %5192
        %5194 = vrot.lane.b32.xlu0 %v5128, 124
        %v5195 = vpop.permute.xlu0 %5194
        %5196 = vrot.lane.b32.xlu0 %v5131, 124
        %v5197 = vpop.permute.xlu0 %5196
        %5198 = vrot.lane.b32.xlu0 %v5133, 124
        %v5199 = vpop.permute.xlu0 %5198
        %5200 = vrot.lane.b32.xlu0 %v5135, 124
        %v5201 = vpop.permute.xlu0 %5200
        %5202 = vrot.lane.b32.xlu0 %v5138, 124
        %v5203 = vpop.permute.xlu0 %5202
        %5204 = vrot.lane.b32.xlu0 %v5141, 124
        %v5205 = vpop.permute.xlu0 %5204
        %5206 = vrot.lane.b32.xlu0 %v5143, 124
        %v5207 = vpop.permute.xlu0 %5206
        %5208 = vrot.lane.b32.xlu0 %v5145, 124
        %v5209 = vpop.permute.xlu0 %5208
        %v5210 = vsel %vm816, %v5147, %v5149
        %v5211 = vsel %vm816, %v5151, %v5153
        %v5212 = vsel %vm816, %v5155, %v5157
        %v5213 = vsel %vm816, %v5159, %v5161
        %v5214 = vsel %vm816, %v5163, %v5165
        %v5215 = vsel %vm816, %v5167, %v5169
        %v5216 = vsel %vm816, %v5171, %v5173
        %v5217 = vsel %vm816, %v5175, %v5177
        %v5218 = vsel %vm816, %v5179, %v5181
        %v5219 = vsel %vm816, %v5183, %v5185
        %v5220 = vsel %vm816, %v5187, %v5189
        %v5221 = vsel %vm816, %v5191, %v5193
        %v5222 = vsel %vm816, %v5195, %v5197
        %v5223 = vsel %vm816, %v5199, %v5201
        %v5224 = vsel %vm816, %v5203, %v5205
        %v5225 = vsel %vm816, %v5207, %v5209
        %v5242 = vadd.f32 %v4948, %v5210
        %v5243 = vadd.f32 %v4949, %v5211
        %v5244 = vadd.f32 %v4950, %v5212
        %v5245 = vadd.f32 %v4951, %v5213
        %v5246 = vadd.f32 %v4952, %v5214
        %v5247 = vadd.f32 %v4953, %v5215
        %v5248 = vadd.f32 %v4954, %v5216
        %v5249 = vadd.f32 %v4955, %v5217
        %v5250 = vadd.f32 %v4956, %v5218
        %v5251 = vadd.f32 %v4957, %v5219
        %v5252 = vadd.f32 %v4958, %v5220
        %v5253 = vadd.f32 %v4959, %v5221
        %v5254 = vadd.f32 %v4960, %v5222
        %v5255 = vadd.f32 %v4961, %v5223
        %v5256 = vadd.f32 %v4962, %v5224
        %v5257 = vadd.f32 %v4963, %v5225
        %v5258 = vld [vmem:[%s3982 + $0x2] sm:$0x1]
        %v5259 = vperm.slane %v5258, 0
        %5261 = vrot.lane.b32.xlu0 %v5259, 8
        %v5262 = vpop.permute.xlu0 %5261
        %v5264 = vmul.f32 %v3958, %v5262
        %v5265 = vmul.f32 %v4352, %v5262
        %v5266 = vmul.f32 %v531, %v5262
        %v5267 = vmul.f32 %v659, %v5262
        %v5268 = vmul.f32 %v3959, %v5262
        %v5269 = vmul.f32 %v4353, %v5262
        %v5270 = vmul.f32 %v3960, %v5262
        %v5271 = vmul.f32 %v4354, %v5262
        %v5272 = vmul.f32 %v533, %v5262
        %v5273 = vmul.f32 %v661, %v5262
        %v5274 = vmul.f32 %v3961, %v5262
        %v5275 = vmul.f32 %v4355, %v5262
        %v5276 = vmul.f32 %v3962, %v5262
        %v5277 = vmul.f32 %v4356, %v5262
        %v5278 = vmul.f32 %v535, %v5262
        %v5279 = vmul.f32 %v663, %v5262
        %v5280 = vmul.f32 %v3963, %v5262
        %v5281 = vmul.f32 %v4357, %v5262
        %v5282 = vmul.f32 %v3964, %v5262
        %v5283 = vmul.f32 %v4358, %v5262
        %v5284 = vmul.f32 %v537, %v5262
        %v5285 = vmul.f32 %v665, %v5262
        %v5286 = vmul.f32 %v3965, %v5262
        %v5287 = vmul.f32 %v4359, %v5262
        %v5288 = vmul.f32 %v3966, %v5262
        %v5289 = vmul.f32 %v4360, %v5262
        %v5290 = vmul.f32 %v539, %v5262
        %v5291 = vmul.f32 %v667, %v5262
        %v5292 = vmul.f32 %v3967, %v5262
        %v5293 = vmul.f32 %v4361, %v5262
        %v5294 = vmul.f32 %v3968, %v5262
        %v5295 = vmul.f32 %v4362, %v5262
        %v5296 = vmul.f32 %v541, %v5262
        %v5297 = vmul.f32 %v669, %v5262
        %v5298 = vmul.f32 %v3969, %v5262
        %v5299 = vmul.f32 %v4363, %v5262
        %v5300 = vmul.f32 %v3970, %v5262
        %v5301 = vmul.f32 %v4364, %v5262
        %v5302 = vmul.f32 %v543, %v5262
        %v5303 = vmul.f32 %v671, %v5262
        %v5304 = vmul.f32 %v3971, %v5262
        %v5305 = vmul.f32 %v4365, %v5262
        %v5306 = vmul.f32 %v3972, %v5262
        %v5307 = vmul.f32 %v4366, %v5262
        %v5308 = vmul.f32 %v545, %v5262
        %v5309 = vmul.f32 %v673, %v5262
        %v5310 = vmul.f32 %v3973, %v5262
        %v5311 = vmul.f32 %v4367, %v5262
        %v5360 = vrot.slane %v5264, 2
        %v5361 = vrot.slane %v5266, 2
        %v5362 = vsel %vm4033, %v5360, %v5361
        %v5363 = vrot.slane %v5265, 2
        %v5364 = vrot.slane %v5267, 2
        %v5365 = vsel %vm4033, %v5363, %v5364
        %v5366 = vrot.slane %v5268, 2
        %v5367 = vsel %vm4033, %v5361, %v5366
        %v5368 = vrot.slane %v5269, 2
        %v5369 = vsel %vm4033, %v5364, %v5368
        %v5370 = vrot.slane %v5270, 2
        %v5371 = vrot.slane %v5272, 2
        %v5372 = vsel %vm4033, %v5370, %v5371
        %v5373 = vrot.slane %v5271, 2
        %v5374 = vrot.slane %v5273, 2
        %v5375 = vsel %vm4033, %v5373, %v5374
        %v5376 = vrot.slane %v5274, 2
        %v5377 = vsel %vm4033, %v5371, %v5376
        %v5378 = vrot.slane %v5275, 2
        %v5379 = vsel %vm4033, %v5374, %v5378
        %v5380 = vrot.slane %v5276, 2
        %v5381 = vrot.slane %v5278, 2
        %v5382 = vsel %vm4033, %v5380, %v5381
        %v5383 = vrot.slane %v5277, 2
        %v5384 = vrot.slane %v5279, 2
        %v5385 = vsel %vm4033, %v5383, %v5384
        %v5386 = vrot.slane %v5280, 2
        %v5387 = vsel %vm4033, %v5381, %v5386
        %v5388 = vrot.slane %v5281, 2
        %v5389 = vsel %vm4033, %v5384, %v5388
        %v5390 = vrot.slane %v5282, 2
        %v5391 = vrot.slane %v5284, 2
        %v5392 = vsel %vm4033, %v5390, %v5391
        %v5393 = vrot.slane %v5283, 2
        %v5394 = vrot.slane %v5285, 2
        %v5395 = vsel %vm4033, %v5393, %v5394
        %v5396 = vrot.slane %v5286, 2
        %v5397 = vsel %vm4033, %v5391, %v5396
        %v5398 = vrot.slane %v5287, 2
        %v5399 = vsel %vm4033, %v5394, %v5398
        %v5400 = vrot.slane %v5288, 2
        %v5401 = vrot.slane %v5290, 2
        %v5402 = vsel %vm4033, %v5400, %v5401
        %v5403 = vrot.slane %v5289, 2
        %v5404 = vrot.slane %v5291, 2
        %v5405 = vsel %vm4033, %v5403, %v5404
        %v5406 = vrot.slane %v5292, 2
        %v5407 = vsel %vm4033, %v5401, %v5406
        %v5408 = vrot.slane %v5293, 2
        %v5409 = vsel %vm4033, %v5404, %v5408
        %v5410 = vrot.slane %v5294, 2
        %v5411 = vrot.slane %v5296, 2
        %v5412 = vsel %vm4033, %v5410, %v5411
        %v5413 = vrot.slane %v5295, 2
        %v5414 = vrot.slane %v5297, 2
        %v5415 = vsel %vm4033, %v5413, %v5414
        %v5416 = vrot.slane %v5298, 2
        %v5417 = vsel %vm4033, %v5411, %v5416
        %v5418 = vrot.slane %v5299, 2
        %v5419 = vsel %vm4033, %v5414, %v5418
        %v5420 = vrot.slane %v5300, 2
        %v5421 = vrot.slane %v5302, 2
        %v5422 = vsel %vm4033, %v5420, %v5421
        %v5423 = vrot.slane %v5301, 2
        %v5424 = vrot.slane %v5303, 2
        %v5425 = vsel %vm4033, %v5423, %v5424
        %v5426 = vrot.slane %v5304, 2
        %v5427 = vsel %vm4033, %v5421, %v5426
        %v5428 = vrot.slane %v5305, 2
        %v5429 = vsel %vm4033, %v5424, %v5428
        %v5430 = vrot.slane %v5306, 2
        %v5431 = vrot.slane %v5308, 2
        %v5432 = vsel %vm4033, %v5430, %v5431
        %v5433 = vrot.slane %v5307, 2
        %v5434 = vrot.slane %v5309, 2
        %v5435 = vsel %vm4033, %v5433, %v5434
        %v5436 = vrot.slane %v5310, 2
        %v5437 = vsel %vm4033, %v5431, %v5436
        %v5438 = vrot.slane %v5311, 2
        %v5439 = vsel %vm4033, %v5434, %v5438
        %5440 = vrot.lane.b32.xlu0 %v5362, 120
        %v5441 = vpop.permute.xlu0 %5440
        %5442 = vrot.lane.b32.xlu0 %v5365, 120
        %v5443 = vpop.permute.xlu0 %5442
        %5444 = vrot.lane.b32.xlu0 %v5367, 120
        %v5445 = vpop.permute.xlu0 %5444
        %5446 = vrot.lane.b32.xlu0 %v5369, 120
        %v5447 = vpop.permute.xlu0 %5446
        %5448 = vrot.lane.b32.xlu0 %v5372, 120
        %v5449 = vpop.permute.xlu0 %5448
        %5450 = vrot.lane.b32.xlu0 %v5375, 120
        %v5451 = vpop.permute.xlu0 %5450
        %5452 = vrot.lane.b32.xlu0 %v5377, 120
        %v5453 = vpop.permute.xlu0 %5452
        %5454 = vrot.lane.b32.xlu0 %v5379, 120
        %v5455 = vpop.permute.xlu0 %5454
        %5456 = vrot.lane.b32.xlu0 %v5382, 120
        %v5457 = vpop.permute.xlu0 %5456
        %5458 = vrot.lane.b32.xlu0 %v5385, 120
        %v5459 = vpop.permute.xlu0 %5458
        %5460 = vrot.lane.b32.xlu0 %v5387, 120
        %v5461 = vpop.permute.xlu0 %5460
        %5462 = vrot.lane.b32.xlu0 %v5389, 120
        %v5463 = vpop.permute.xlu0 %5462
        %5464 = vrot.lane.b32.xlu0 %v5392, 120
        %v5465 = vpop.permute.xlu0 %5464
        %5466 = vrot.lane.b32.xlu0 %v5395, 120
        %v5467 = vpop.permute.xlu0 %5466
        %5468 = vrot.lane.b32.xlu0 %v5397, 120
        %v5469 = vpop.permute.xlu0 %5468
        %5470 = vrot.lane.b32.xlu0 %v5399, 120
        %v5471 = vpop.permute.xlu0 %5470
        %5472 = vrot.lane.b32.xlu0 %v5402, 120
        %v5473 = vpop.permute.xlu0 %5472
        %5474 = vrot.lane.b32.xlu0 %v5405, 120
        %v5475 = vpop.permute.xlu0 %5474
        %5476 = vrot.lane.b32.xlu0 %v5407, 120
        %v5477 = vpop.permute.xlu0 %5476
        %5478 = vrot.lane.b32.xlu0 %v5409, 120
        %v5479 = vpop.permute.xlu0 %5478
        %5480 = vrot.lane.b32.xlu0 %v5412, 120
        %v5481 = vpop.permute.xlu0 %5480
        %5482 = vrot.lane.b32.xlu0 %v5415, 120
        %v5483 = vpop.permute.xlu0 %5482
        %5484 = vrot.lane.b32.xlu0 %v5417, 120
        %v5485 = vpop.permute.xlu0 %5484
        %5486 = vrot.lane.b32.xlu0 %v5419, 120
        %v5487 = vpop.permute.xlu0 %5486
        %5488 = vrot.lane.b32.xlu0 %v5422, 120
        %v5489 = vpop.permute.xlu0 %5488
        %5490 = vrot.lane.b32.xlu0 %v5425, 120
        %v5491 = vpop.permute.xlu0 %5490
        %5492 = vrot.lane.b32.xlu0 %v5427, 120
        %v5493 = vpop.permute.xlu0 %5492
        %5494 = vrot.lane.b32.xlu0 %v5429, 120
        %v5495 = vpop.permute.xlu0 %5494
        %5496 = vrot.lane.b32.xlu0 %v5432, 120
        %v5497 = vpop.permute.xlu0 %5496
        %5498 = vrot.lane.b32.xlu0 %v5435, 120
        %v5499 = vpop.permute.xlu0 %5498
        %5500 = vrot.lane.b32.xlu0 %v5437, 120
        %v5501 = vpop.permute.xlu0 %5500
        %5502 = vrot.lane.b32.xlu0 %v5439, 120
        %v5503 = vpop.permute.xlu0 %5502
        %v5504 = vsel %vm1363, %v5441, %v5443
        %v5505 = vsel %vm1363, %v5445, %v5447
        %v5506 = vsel %vm1363, %v5449, %v5451
        %v5507 = vsel %vm1363, %v5453, %v5455
        %v5508 = vsel %vm1363, %v5457, %v5459
        %v5509 = vsel %vm1363, %v5461, %v5463
        %v5510 = vsel %vm1363, %v5465, %v5467
        %v5511 = vsel %vm1363, %v5469, %v5471
        %v5512 = vsel %vm1363, %v5473, %v5475
        %v5513 = vsel %vm1363, %v5477, %v5479
        %v5514 = vsel %vm1363, %v5481, %v5483
        %v5515 = vsel %vm1363, %v5485, %v5487
        %v5516 = vsel %vm1363, %v5489, %v5491
        %v5517 = vsel %vm1363, %v5493, %v5495
        %v5518 = vsel %vm1363, %v5497, %v5499
        %v5519 = vsel %vm1363, %v5501, %v5503
        %v5536 = vadd.f32 %v5242, %v5504
        %v5537 = vadd.f32 %v5243, %v5505
        %v5538 = vadd.f32 %v5244, %v5506
        %v5539 = vadd.f32 %v5245, %v5507
        %v5540 = vadd.f32 %v5246, %v5508
        %v5541 = vadd.f32 %v5247, %v5509
        %v5542 = vadd.f32 %v5248, %v5510
        %v5543 = vadd.f32 %v5249, %v5511
        %v5544 = vadd.f32 %v5250, %v5512
        %v5545 = vadd.f32 %v5251, %v5513
        %v5546 = vadd.f32 %v5252, %v5514
        %v5547 = vadd.f32 %v5253, %v5515
        %v5548 = vadd.f32 %v5254, %v5516
        %v5549 = vadd.f32 %v5255, %v5517
        %v5550 = vadd.f32 %v5256, %v5518
        %v5551 = vadd.f32 %v5257, %v5519
        %v5552 = vld [vmem:[%s4106 + $0x2] sm:$0x1]
        %v5553 = vperm.slane %v5552, 0
        %5555 = vrot.lane.b32.xlu0 %v5553, 8
        %v5556 = vpop.permute.xlu0 %5555
        %v5558 = vmul.f32 %v3962, %v5556
        %v5559 = vmul.f32 %v4356, %v5556
        %v5560 = vmul.f32 %v535, %v5556
        %v5561 = vmul.f32 %v663, %v5556
        %v5562 = vmul.f32 %v3963, %v5556
        %v5563 = vmul.f32 %v4357, %v5556
        %v5564 = vmul.f32 %v3964, %v5556
        %v5565 = vmul.f32 %v4358, %v5556
        %v5566 = vmul.f32 %v537, %v5556
        %v5567 = vmul.f32 %v665, %v5556
        %v5568 = vmul.f32 %v3965, %v5556
        %v5569 = vmul.f32 %v4359, %v5556
        %v5570 = vmul.f32 %v3966, %v5556
        %v5571 = vmul.f32 %v4360, %v5556
        %v5572 = vmul.f32 %v539, %v5556
        %v5573 = vmul.f32 %v667, %v5556
        %v5574 = vmul.f32 %v3967, %v5556
        %v5575 = vmul.f32 %v4361, %v5556
        %v5576 = vmul.f32 %v3968, %v5556
        %v5577 = vmul.f32 %v4362, %v5556
        %v5578 = vmul.f32 %v541, %v5556
        %v5579 = vmul.f32 %v669, %v5556
        %v5580 = vmul.f32 %v3969, %v5556
        %v5581 = vmul.f32 %v4363, %v5556
        %v5582 = vmul.f32 %v3970, %v5556
        %v5583 = vmul.f32 %v4364, %v5556
        %v5584 = vmul.f32 %v543, %v5556
        %v5585 = vmul.f32 %v671, %v5556
        %v5586 = vmul.f32 %v3971, %v5556
        %v5587 = vmul.f32 %v4365, %v5556
        %v5588 = vmul.f32 %v3972, %v5556
        %v5589 = vmul.f32 %v4366, %v5556
        %v5590 = vmul.f32 %v545, %v5556
        %v5591 = vmul.f32 %v673, %v5556
        %v5592 = vmul.f32 %v3973, %v5556
        %v5593 = vmul.f32 %v4367, %v5556
        %v5594 = vmul.f32 %v3974, %v5556
        %v5595 = vmul.f32 %v4368, %v5556
        %v5596 = vmul.f32 %v547, %v5556
        %v5597 = vmul.f32 %v675, %v5556
        %v5598 = vmul.f32 %v3975, %v5556
        %v5599 = vmul.f32 %v4369, %v5556
        %v5600 = vmul.f32 %v3976, %v5556
        %v5601 = vmul.f32 %v4370, %v5556
        %v5602 = vmul.f32 %v549, %v5556
        %v5603 = vmul.f32 %v677, %v5556
        %v5604 = vmul.f32 %v3977, %v5556
        %v5605 = vmul.f32 %v4371, %v5556
        %v5654 = vrot.slane %v5558, 2
        %v5655 = vrot.slane %v5560, 2
        %v5656 = vsel %vm4033, %v5654, %v5655
        %v5657 = vrot.slane %v5559, 2
        %v5658 = vrot.slane %v5561, 2
        %v5659 = vsel %vm4033, %v5657, %v5658
        %v5660 = vrot.slane %v5562, 2
        %v5661 = vsel %vm4033, %v5655, %v5660
        %v5662 = vrot.slane %v5563, 2
        %v5663 = vsel %vm4033, %v5658, %v5662
        %v5664 = vrot.slane %v5564, 2
        %v5665 = vrot.slane %v5566, 2
        %v5666 = vsel %vm4033, %v5664, %v5665
        %v5667 = vrot.slane %v5565, 2
        %v5668 = vrot.slane %v5567, 2
        %v5669 = vsel %vm4033, %v5667, %v5668
        %v5670 = vrot.slane %v5568, 2
        %v5671 = vsel %vm4033, %v5665, %v5670
        %v5672 = vrot.slane %v5569, 2
        %v5673 = vsel %vm4033, %v5668, %v5672
        %v5674 = vrot.slane %v5570, 2
        %v5675 = vrot.slane %v5572, 2
        %v5676 = vsel %vm4033, %v5674, %v5675
        %v5677 = vrot.slane %v5571, 2
        %v5678 = vrot.slane %v5573, 2
        %v5679 = vsel %vm4033, %v5677, %v5678
        %v5680 = vrot.slane %v5574, 2
        %v5681 = vsel %vm4033, %v5675, %v5680
        %v5682 = vrot.slane %v5575, 2
        %v5683 = vsel %vm4033, %v5678, %v5682
        %v5684 = vrot.slane %v5576, 2
        %v5685 = vrot.slane %v5578, 2
        %v5686 = vsel %vm4033, %v5684, %v5685
        %v5687 = vrot.slane %v5577, 2
        %v5688 = vrot.slane %v5579, 2
        %v5689 = vsel %vm4033, %v5687, %v5688
        %v5690 = vrot.slane %v5580, 2
        %v5691 = vsel %vm4033, %v5685, %v5690
        %v5692 = vrot.slane %v5581, 2
        %v5693 = vsel %vm4033, %v5688, %v5692
        %v5694 = vrot.slane %v5582, 2
        %v5695 = vrot.slane %v5584, 2
        %v5696 = vsel %vm4033, %v5694, %v5695
        %v5697 = vrot.slane %v5583, 2
        %v5698 = vrot.slane %v5585, 2
        %v5699 = vsel %vm4033, %v5697, %v5698
        %v5700 = vrot.slane %v5586, 2
        %v5701 = vsel %vm4033, %v5695, %v5700
        %v5702 = vrot.slane %v5587, 2
        %v5703 = vsel %vm4033, %v5698, %v5702
        %v5704 = vrot.slane %v5588, 2
        %v5705 = vrot.slane %v5590, 2
        %v5706 = vsel %vm4033, %v5704, %v5705
        %v5707 = vrot.slane %v5589, 2
        %v5708 = vrot.slane %v5591, 2
        %v5709 = vsel %vm4033, %v5707, %v5708
        %v5710 = vrot.slane %v5592, 2
        %v5711 = vsel %vm4033, %v5705, %v5710
        %v5712 = vrot.slane %v5593, 2
        %v5713 = vsel %vm4033, %v5708, %v5712
        %v5714 = vrot.slane %v5594, 2
        %v5715 = vrot.slane %v5596, 2
        %v5716 = vsel %vm4033, %v5714, %v5715
        %v5717 = vrot.slane %v5595, 2
        %v5718 = vrot.slane %v5597, 2
        %v5719 = vsel %vm4033, %v5717, %v5718
        %v5720 = vrot.slane %v5598, 2
        %v5721 = vsel %vm4033, %v5715, %v5720
        %v5722 = vrot.slane %v5599, 2
        %v5723 = vsel %vm4033, %v5718, %v5722
        %v5724 = vrot.slane %v5600, 2
        %v5725 = vrot.slane %v5602, 2
        %v5726 = vsel %vm4033, %v5724, %v5725
        %v5727 = vrot.slane %v5601, 2
        %v5728 = vrot.slane %v5603, 2
        %v5729 = vsel %vm4033, %v5727, %v5728
        %v5730 = vrot.slane %v5604, 2
        %v5731 = vsel %vm4033, %v5725, %v5730
        %v5732 = vrot.slane %v5605, 2
        %v5733 = vsel %vm4033, %v5728, %v5732
        %5734 = vrot.lane.b32.xlu0 %v5656, 120
        %v5735 = vpop.permute.xlu0 %5734
        %5736 = vrot.lane.b32.xlu0 %v5659, 120
        %v5737 = vpop.permute.xlu0 %5736
        %5738 = vrot.lane.b32.xlu0 %v5661, 120
        %v5739 = vpop.permute.xlu0 %5738
        %5740 = vrot.lane.b32.xlu0 %v5663, 120
        %v5741 = vpop.permute.xlu0 %5740
        %5742 = vrot.lane.b32.xlu0 %v5666, 120
        %v5743 = vpop.permute.xlu0 %5742
        %5744 = vrot.lane.b32.xlu0 %v5669, 120
        %v5745 = vpop.permute.xlu0 %5744
        %5746 = vrot.lane.b32.xlu0 %v5671, 120
        %v5747 = vpop.permute.xlu0 %5746
        %5748 = vrot.lane.b32.xlu0 %v5673, 120
        %v5749 = vpop.permute.xlu0 %5748
        %5750 = vrot.lane.b32.xlu0 %v5676, 120
        %v5751 = vpop.permute.xlu0 %5750
        %5752 = vrot.lane.b32.xlu0 %v5679, 120
        %v5753 = vpop.permute.xlu0 %5752
        %5754 = vrot.lane.b32.xlu0 %v5681, 120
        %v5755 = vpop.permute.xlu0 %5754
        %5756 = vrot.lane.b32.xlu0 %v5683, 120
        %v5757 = vpop.permute.xlu0 %5756
        %5758 = vrot.lane.b32.xlu0 %v5686, 120
        %v5759 = vpop.permute.xlu0 %5758
        %5760 = vrot.lane.b32.xlu0 %v5689, 120
        %v5761 = vpop.permute.xlu0 %5760
        %5762 = vrot.lane.b32.xlu0 %v5691, 120
        %v5763 = vpop.permute.xlu0 %5762
        %5764 = vrot.lane.b32.xlu0 %v5693, 120
        %v5765 = vpop.permute.xlu0 %5764
        %5766 = vrot.lane.b32.xlu0 %v5696, 120
        %v5767 = vpop.permute.xlu0 %5766
        %5768 = vrot.lane.b32.xlu0 %v5699, 120
        %v5769 = vpop.permute.xlu0 %5768
        %5770 = vrot.lane.b32.xlu0 %v5701, 120
        %v5771 = vpop.permute.xlu0 %5770
        %5772 = vrot.lane.b32.xlu0 %v5703, 120
        %v5773 = vpop.permute.xlu0 %5772
        %5774 = vrot.lane.b32.xlu0 %v5706, 120
        %v5775 = vpop.permute.xlu0 %5774
        %5776 = vrot.lane.b32.xlu0 %v5709, 120
        %v5777 = vpop.permute.xlu0 %5776
        %5778 = vrot.lane.b32.xlu0 %v5711, 120
        %v5779 = vpop.permute.xlu0 %5778
        %5780 = vrot.lane.b32.xlu0 %v5713, 120
        %v5781 = vpop.permute.xlu0 %5780
        %5782 = vrot.lane.b32.xlu0 %v5716, 120
        %v5783 = vpop.permute.xlu0 %5782
        %5784 = vrot.lane.b32.xlu0 %v5719, 120
        %v5785 = vpop.permute.xlu0 %5784
        %5786 = vrot.lane.b32.xlu0 %v5721, 120
        %v5787 = vpop.permute.xlu0 %5786
        %5788 = vrot.lane.b32.xlu0 %v5723, 120
        %v5789 = vpop.permute.xlu0 %5788
        %5790 = vrot.lane.b32.xlu0 %v5726, 120
        %v5791 = vpop.permute.xlu0 %5790
        %5792 = vrot.lane.b32.xlu0 %v5729, 120
        %v5793 = vpop.permute.xlu0 %5792
        %5794 = vrot.lane.b32.xlu0 %v5731, 120
        %v5795 = vpop.permute.xlu0 %5794
        %5796 = vrot.lane.b32.xlu0 %v5733, 120
        %v5797 = vpop.permute.xlu0 %5796
        %v5798 = vsel %vm1363, %v5735, %v5737
        %v5799 = vsel %vm1363, %v5739, %v5741
        %v5800 = vsel %vm1363, %v5743, %v5745
        %v5801 = vsel %vm1363, %v5747, %v5749
        %v5802 = vsel %vm1363, %v5751, %v5753
        %v5803 = vsel %vm1363, %v5755, %v5757
        %v5804 = vsel %vm1363, %v5759, %v5761
        %v5805 = vsel %vm1363, %v5763, %v5765
        %v5806 = vsel %vm1363, %v5767, %v5769
        %v5807 = vsel %vm1363, %v5771, %v5773
        %v5808 = vsel %vm1363, %v5775, %v5777
        %v5809 = vsel %vm1363, %v5779, %v5781
        %v5810 = vsel %vm1363, %v5783, %v5785
        %v5811 = vsel %vm1363, %v5787, %v5789
        %v5812 = vsel %vm1363, %v5791, %v5793
        %v5813 = vsel %vm1363, %v5795, %v5797
        %v5830 = vadd.f32 %v5536, %v5798
        %v5831 = vadd.f32 %v5537, %v5799
        %v5832 = vadd.f32 %v5538, %v5800
        %v5833 = vadd.f32 %v5539, %v5801
        %v5834 = vadd.f32 %v5540, %v5802
        %v5835 = vadd.f32 %v5541, %v5803
        %v5836 = vadd.f32 %v5542, %v5804
        %v5837 = vadd.f32 %v5543, %v5805
        %v5838 = vadd.f32 %v5544, %v5806
        %v5839 = vadd.f32 %v5545, %v5807
        %v5840 = vadd.f32 %v5546, %v5808
        %v5841 = vadd.f32 %v5547, %v5809
        %v5842 = vadd.f32 %v5548, %v5810
        %v5843 = vadd.f32 %v5549, %v5811
        %v5844 = vadd.f32 %v5550, %v5812
        %v5845 = vadd.f32 %v5551, %v5813
        %v5846 = vld [vmem:[%s4229 + $0x2] sm:$0x1]
        %v5847 = vperm.slane %v5846, 0
        %5849 = vrot.lane.b32.xlu0 %v5847, 8
        %v5850 = vpop.permute.xlu0 %5849
        %v5852 = vmul.f32 %v3966, %v5850
        %v5853 = vmul.f32 %v4360, %v5850
        %v5854 = vmul.f32 %v539, %v5850
        %v5855 = vmul.f32 %v667, %v5850
        %v5856 = vmul.f32 %v3967, %v5850
        %v5857 = vmul.f32 %v4361, %v5850
        %v5858 = vmul.f32 %v3968, %v5850
        %v5859 = vmul.f32 %v4362, %v5850
        %v5860 = vmul.f32 %v541, %v5850
        %v5861 = vmul.f32 %v669, %v5850
        %v5862 = vmul.f32 %v3969, %v5850
        %v5863 = vmul.f32 %v4363, %v5850
        %v5864 = vmul.f32 %v3970, %v5850
        %v5865 = vmul.f32 %v4364, %v5850
        %v5866 = vmul.f32 %v543, %v5850
        %v5867 = vmul.f32 %v671, %v5850
        %v5868 = vmul.f32 %v3971, %v5850
        %v5869 = vmul.f32 %v4365, %v5850
        %v5870 = vmul.f32 %v3972, %v5850
        %v5871 = vmul.f32 %v4366, %v5850
        %v5872 = vmul.f32 %v545, %v5850
        %v5873 = vmul.f32 %v673, %v5850
        %v5874 = vmul.f32 %v3973, %v5850
        %v5875 = vmul.f32 %v4367, %v5850
        %v5876 = vmul.f32 %v3974, %v5850
        %v5877 = vmul.f32 %v4368, %v5850
        %v5878 = vmul.f32 %v547, %v5850
        %v5879 = vmul.f32 %v675, %v5850
        %v5880 = vmul.f32 %v3975, %v5850
        %v5881 = vmul.f32 %v4369, %v5850
        %v5882 = vmul.f32 %v3976, %v5850
        %v5883 = vmul.f32 %v4370, %v5850
        %v5884 = vmul.f32 %v549, %v5850
        %v5885 = vmul.f32 %v677, %v5850
        %v5886 = vmul.f32 %v3977, %v5850
        %v5887 = vmul.f32 %v4371, %v5850
        %v5888 = vmul.f32 %v3978, %v5850
        %v5889 = vmul.f32 %v4372, %v5850
        %v5890 = vmul.f32 %v551, %v5850
        %v5891 = vmul.f32 %v679, %v5850
        %v5892 = vmul.f32 %v3979, %v5850
        %v5893 = vmul.f32 %v4373, %v5850
        %v5894 = vmul.f32 %v3980, %v5850
        %v5895 = vmul.f32 %v4374, %v5850
        %v5896 = vmul.f32 %v553, %v5850
        %v5897 = vmul.f32 %v681, %v5850
        %v5898 = vmul.f32 %v3981, %v5850
        %v5899 = vmul.f32 %v4375, %v5850
        %v5948 = vrot.slane %v5852, 2
        %v5949 = vrot.slane %v5854, 2
        %v5950 = vsel %vm4033, %v5948, %v5949
        %v5951 = vrot.slane %v5853, 2
        %v5952 = vrot.slane %v5855, 2
        %v5953 = vsel %vm4033, %v5951, %v5952
        %v5954 = vrot.slane %v5856, 2
        %v5955 = vsel %vm4033, %v5949, %v5954
        %v5956 = vrot.slane %v5857, 2
        %v5957 = vsel %vm4033, %v5952, %v5956
        %v5958 = vrot.slane %v5858, 2
        %v5959 = vrot.slane %v5860, 2
        %v5960 = vsel %vm4033, %v5958, %v5959
        %v5961 = vrot.slane %v5859, 2
        %v5962 = vrot.slane %v5861, 2
        %v5963 = vsel %vm4033, %v5961, %v5962
        %v5964 = vrot.slane %v5862, 2
        %v5965 = vsel %vm4033, %v5959, %v5964
        %v5966 = vrot.slane %v5863, 2
        %v5967 = vsel %vm4033, %v5962, %v5966
        %v5968 = vrot.slane %v5864, 2
        %v5969 = vrot.slane %v5866, 2
        %v5970 = vsel %vm4033, %v5968, %v5969
        %v5971 = vrot.slane %v5865, 2
        %v5972 = vrot.slane %v5867, 2
        %v5973 = vsel %vm4033, %v5971, %v5972
        %v5974 = vrot.slane %v5868, 2
        %v5975 = vsel %vm4033, %v5969, %v5974
        %v5976 = vrot.slane %v5869, 2
        %v5977 = vsel %vm4033, %v5972, %v5976
        %v5978 = vrot.slane %v5870, 2
        %v5979 = vrot.slane %v5872, 2
        %v5980 = vsel %vm4033, %v5978, %v5979
        %v5981 = vrot.slane %v5871, 2
        %v5982 = vrot.slane %v5873, 2
        %v5983 = vsel %vm4033, %v5981, %v5982
        %v5984 = vrot.slane %v5874, 2
        %v5985 = vsel %vm4033, %v5979, %v5984
        %v5986 = vrot.slane %v5875, 2
        %v5987 = vsel %vm4033, %v5982, %v5986
        %v5988 = vrot.slane %v5876, 2
        %v5989 = vrot.slane %v5878, 2
        %v5990 = vsel %vm4033, %v5988, %v5989
        %v5991 = vrot.slane %v5877, 2
        %v5992 = vrot.slane %v5879, 2
        %v5993 = vsel %vm4033, %v5991, %v5992
        %v5994 = vrot.slane %v5880, 2
        %v5995 = vsel %vm4033, %v5989, %v5994
        %v5996 = vrot.slane %v5881, 2
        %v5997 = vsel %vm4033, %v5992, %v5996
        %v5998 = vrot.slane %v5882, 2
        %v5999 = vrot.slane %v5884, 2
        %v6000 = vsel %vm4033, %v5998, %v5999
        %v6001 = vrot.slane %v5883, 2
        %v6002 = vrot.slane %v5885, 2
        %v6003 = vsel %vm4033, %v6001, %v6002
        %v6004 = vrot.slane %v5886, 2
        %v6005 = vsel %vm4033, %v5999, %v6004
        %v6006 = vrot.slane %v5887, 2
        %v6007 = vsel %vm4033, %v6002, %v6006
        %v6008 = vrot.slane %v5888, 2
        %v6009 = vrot.slane %v5890, 2
        %v6010 = vsel %vm4033, %v6008, %v6009
        %v6011 = vrot.slane %v5889, 2
        %v6012 = vrot.slane %v5891, 2
        %v6013 = vsel %vm4033, %v6011, %v6012
        %v6014 = vrot.slane %v5892, 2
        %v6015 = vsel %vm4033, %v6009, %v6014
        %v6016 = vrot.slane %v5893, 2
        %v6017 = vsel %vm4033, %v6012, %v6016
        %v6018 = vrot.slane %v5894, 2
        %v6019 = vrot.slane %v5896, 2
        %v6020 = vsel %vm4033, %v6018, %v6019
        %v6021 = vrot.slane %v5895, 2
        %v6022 = vrot.slane %v5897, 2
        %v6023 = vsel %vm4033, %v6021, %v6022
        %v6024 = vrot.slane %v5898, 2
        %v6025 = vsel %vm4033, %v6019, %v6024
        %v6026 = vrot.slane %v5899, 2
        %v6027 = vsel %vm4033, %v6022, %v6026
        %6028 = vrot.lane.b32.xlu0 %v5950, 120
        %v6029 = vpop.permute.xlu0 %6028
        %6030 = vrot.lane.b32.xlu0 %v5953, 120
        %v6031 = vpop.permute.xlu0 %6030
        %6032 = vrot.lane.b32.xlu0 %v5955, 120
        %v6033 = vpop.permute.xlu0 %6032
        %6034 = vrot.lane.b32.xlu0 %v5957, 120
        %v6035 = vpop.permute.xlu0 %6034
        %6036 = vrot.lane.b32.xlu0 %v5960, 120
        %v6037 = vpop.permute.xlu0 %6036
        %6038 = vrot.lane.b32.xlu0 %v5963, 120
        %v6039 = vpop.permute.xlu0 %6038
        %6040 = vrot.lane.b32.xlu0 %v5965, 120
        %v6041 = vpop.permute.xlu0 %6040
        %6042 = vrot.lane.b32.xlu0 %v5967, 120
        %v6043 = vpop.permute.xlu0 %6042
        %6044 = vrot.lane.b32.xlu0 %v5970, 120
        %v6045 = vpop.permute.xlu0 %6044
        %6046 = vrot.lane.b32.xlu0 %v5973, 120
        %v6047 = vpop.permute.xlu0 %6046
        %6048 = vrot.lane.b32.xlu0 %v5975, 120
        %v6049 = vpop.permute.xlu0 %6048
        %6050 = vrot.lane.b32.xlu0 %v5977, 120
        %v6051 = vpop.permute.xlu0 %6050
        %6052 = vrot.lane.b32.xlu0 %v5980, 120
        %v6053 = vpop.permute.xlu0 %6052
        %6054 = vrot.lane.b32.xlu0 %v5983, 120
        %v6055 = vpop.permute.xlu0 %6054
        %6056 = vrot.lane.b32.xlu0 %v5985, 120
        %v6057 = vpop.permute.xlu0 %6056
        %6058 = vrot.lane.b32.xlu0 %v5987, 120
        %v6059 = vpop.permute.xlu0 %6058
        %6060 = vrot.lane.b32.xlu0 %v5990, 120
        %v6061 = vpop.permute.xlu0 %6060
        %6062 = vrot.lane.b32.xlu0 %v5993, 120
        %v6063 = vpop.permute.xlu0 %6062
        %6064 = vrot.lane.b32.xlu0 %v5995, 120
        %v6065 = vpop.permute.xlu0 %6064
        %6066 = vrot.lane.b32.xlu0 %v5997, 120
        %v6067 = vpop.permute.xlu0 %6066
        %6068 = vrot.lane.b32.xlu0 %v6000, 120
        %v6069 = vpop.permute.xlu0 %6068
        %6070 = vrot.lane.b32.xlu0 %v6003, 120
        %v6071 = vpop.permute.xlu0 %6070
        %6072 = vrot.lane.b32.xlu0 %v6005, 120
        %v6073 = vpop.permute.xlu0 %6072
        %6074 = vrot.lane.b32.xlu0 %v6007, 120
        %v6075 = vpop.permute.xlu0 %6074
        %6076 = vrot.lane.b32.xlu0 %v6010, 120
        %v6077 = vpop.permute.xlu0 %6076
        %6078 = vrot.lane.b32.xlu0 %v6013, 120
        %v6079 = vpop.permute.xlu0 %6078
        %6080 = vrot.lane.b32.xlu0 %v6015, 120
        %v6081 = vpop.permute.xlu0 %6080
        %6082 = vrot.lane.b32.xlu0 %v6017, 120
        %v6083 = vpop.permute.xlu0 %6082
        %6084 = vrot.lane.b32.xlu0 %v6020, 120
        %v6085 = vpop.permute.xlu0 %6084
        %6086 = vrot.lane.b32.xlu0 %v6023, 120
        %v6087 = vpop.permute.xlu0 %6086
        %6088 = vrot.lane.b32.xlu0 %v6025, 120
        %v6089 = vpop.permute.xlu0 %6088
        %6090 = vrot.lane.b32.xlu0 %v6027, 120
        %v6091 = vpop.permute.xlu0 %6090
        %v6092 = vsel %vm1363, %v6029, %v6031
        %v6093 = vsel %vm1363, %v6033, %v6035
        %v6094 = vsel %vm1363, %v6037, %v6039
        %v6095 = vsel %vm1363, %v6041, %v6043
        %v6096 = vsel %vm1363, %v6045, %v6047
        %v6097 = vsel %vm1363, %v6049, %v6051
        %v6098 = vsel %vm1363, %v6053, %v6055
        %v6099 = vsel %vm1363, %v6057, %v6059
        %v6100 = vsel %vm1363, %v6061, %v6063
        %v6101 = vsel %vm1363, %v6065, %v6067
        %v6102 = vsel %vm1363, %v6069, %v6071
        %v6103 = vsel %vm1363, %v6073, %v6075
        %v6104 = vsel %vm1363, %v6077, %v6079
        %v6105 = vsel %vm1363, %v6081, %v6083
        %v6106 = vsel %vm1363, %v6085, %v6087
        %v6107 = vsel %vm1363, %v6089, %v6091
        %v6124 = vadd.f32 %v5830, %v6092
        %v6125 = vadd.f32 %v5831, %v6093
        %v6126 = vadd.f32 %v5832, %v6094
        %v6127 = vadd.f32 %v5833, %v6095
        %v6128 = vadd.f32 %v5834, %v6096
        %v6129 = vadd.f32 %v5835, %v6097
        %v6130 = vadd.f32 %v5836, %v6098
        %v6131 = vadd.f32 %v5837, %v6099
        %v6132 = vadd.f32 %v5838, %v6100
        %v6133 = vadd.f32 %v5839, %v6101
        %v6134 = vadd.f32 %v5840, %v6102
        %v6135 = vadd.f32 %v5841, %v6103
        %v6136 = vadd.f32 %v5842, %v6104
        %v6137 = vadd.f32 %v5843, %v6105
        %v6138 = vadd.f32 %v5844, %v6106
        %v6139 = vadd.f32 %v5845, %v6107
        %v6140 = vld [vmem:[%s2] sm:$0x1]
        %v6142 = vperm.slane %v6140, 0
        %v6144 = vmul.f32 %v6124, %v6142
        %v6145 = vmul.f32 %v6125, %v6142
        %v6146 = vmul.f32 %v6126, %v6142
        %v6147 = vmul.f32 %v6127, %v6142
        %v6148 = vmul.f32 %v6128, %v6142
        %v6149 = vmul.f32 %v6129, %v6142
        %v6150 = vmul.f32 %v6130, %v6142
        %v6151 = vmul.f32 %v6131, %v6142
        %v6152 = vmul.f32 %v6132, %v6142
        %v6153 = vmul.f32 %v6133, %v6142
        %v6154 = vmul.f32 %v6134, %v6142
        %v6155 = vmul.f32 %v6135, %v6142
        %v6156 = vmul.f32 %v6136, %v6142
        %v6157 = vmul.f32 %v6137, %v6142
        %v6158 = vmul.f32 %v6138, %v6142
        %v6159 = vmul.f32 %v6139, %v6142
        %v6160 = vld [vmem:[%s3] sm:$0x1]
        %v6162 = vperm.slane %v6160, 0
        %v6164 = vadd.f32 %v6144, %v6162
        %v6165 = vadd.f32 %v6145, %v6162
        %v6166 = vadd.f32 %v6146, %v6162
        %v6167 = vadd.f32 %v6147, %v6162
        %v6168 = vadd.f32 %v6148, %v6162
        %v6169 = vadd.f32 %v6149, %v6162
        %v6170 = vadd.f32 %v6150, %v6162
        %v6171 = vadd.f32 %v6151, %v6162
        %v6172 = vadd.f32 %v6152, %v6162
        %v6173 = vadd.f32 %v6153, %v6162
        %v6174 = vadd.f32 %v6154, %v6162
        %v6175 = vadd.f32 %v6155, %v6162
        %v6176 = vadd.f32 %v6156, %v6162
        %v6177 = vadd.f32 %v6157, %v6162
        %v6178 = vadd.f32 %v6158, %v6162
        %v6179 = vadd.f32 %v6159, %v6162
        %v6180 = vmax.f32 %v6164, 0.0
        %v6181 = vmax.f32 %v6165, 0.0
        %v6182 = vmax.f32 %v6166, 0.0
        %v6183 = vmax.f32 %v6167, 0.0
        %v6184 = vmax.f32 %v6168, 0.0
        %v6185 = vmax.f32 %v6169, 0.0
        %v6186 = vmax.f32 %v6170, 0.0
        %v6187 = vmax.f32 %v6171, 0.0
        %v6188 = vmax.f32 %v6172, 0.0
        %v6189 = vmax.f32 %v6173, 0.0
        %v6190 = vmax.f32 %v6174, 0.0
        %v6191 = vmax.f32 %v6175, 0.0
        %v6192 = vmax.f32 %v6176, 0.0
        %v6193 = vmax.f32 %v6177, 0.0
        %v6194 = vmax.f32 %v6178, 0.0
        %v6195 = vmax.f32 %v6179, 0.0
        %v6196 = vld [vmem:[%s4] sm:$0xff]
        %v6197 = vld [vmem:[%s4 + $0x8] sm:$0xff]
        %v6198 = vld [vmem:[%s4 + $0x10] sm:$0xff]
        %v6199 = vld [vmem:[%s4 + $0x18] sm:$0xff]
        %v6200 = vld [vmem:[%s4 + $0x20] sm:$0xff]
        %v6201 = vld [vmem:[%s4 + $0x28] sm:$0xff]
        %v6202 = vld [vmem:[%s4 + $0x30] sm:$0xff]
        %v6203 = vld [vmem:[%s4 + $0x38] sm:$0xff]
        %v6204 = vld [vmem:[%s4 + $0x40] sm:$0xff]
        %v6205 = vld [vmem:[%s4 + $0x48] sm:$0xff]
        %v6206 = vld [vmem:[%s4 + $0x50] sm:$0xff]
        %v6207 = vld [vmem:[%s4 + $0x58] sm:$0xff]
        %v6208 = vld [vmem:[%s4 + $0x60] sm:$0xff]
        %v6209 = vld [vmem:[%s4 + $0x68] sm:$0xff]
        %v6210 = vld [vmem:[%s4 + $0x70] sm:$0xff]
        %v6211 = vld [vmem:[%s4 + $0x78] sm:$0xff]
        %v6212 = vld [vmem:[%s5] sm:$0x1]
        %v6214 = vperm.slane %v6212, 0
        %6216 = vmatpush.msra.mxu0 %v6211
        %6217 = vmatpush.msra.mxu0 %v6210
        %6218 = vmatpush.msra.mxu0 %v6209
        %6219 = vmatpush.msra.mxu0 %v6208
        %6220 = vmatpush.msra.mxu0 %v6207
        %6221 = vmatpush.msra.mxu0 %v6206
        %6222 = vmatpush.msra.mxu0 %v6205
        %6223 = vmatpush.msra.mxu0 %v6204
        %6224 = vmatpush.msra.mxu0 %v6203
        %6225 = vmatpush.msra.mxu0 %v6202
        %6226 = vmatpush.msra.mxu0 %v6201
        %6227 = vmatpush.msra.mxu0 %v6200
        %6228 = vmatpush.msra.mxu0 %v6199
        %6229 = vmatpush.msra.mxu0 %v6198
        %6230 = vmatpush.msra.mxu0 %v6197
        %6231 = vmatpush.msra.mxu0 %v6196
        %6232 = vmatmul.f32.gmra.mxu0 %v6180
        %v6233 = vpop.f32.mrf.mxu0
        %v6234 = vadd.f32 %v6214, %v6233
        %6235 = vmatmul.f32.gmra.mxu0 %v6181
        %v6236 = vpop.f32.mrf.mxu0
        %v6237 = vadd.f32 %v6214, %v6236
        %6238 = vmatmul.f32.gmra.mxu0 %v6182
        %v6239 = vpop.f32.mrf.mxu0
        %v6240 = vadd.f32 %v6214, %v6239
        %6241 = vmatmul.f32.gmra.mxu0 %v6183
        %v6242 = vpop.f32.mrf.mxu0
        %v6243 = vadd.f32 %v6214, %v6242
        %6244 = vmatmul.f32.gmra.mxu0 %v6184
        %v6245 = vpop.f32.mrf.mxu0
        %v6246 = vadd.f32 %v6214, %v6245
        %6247 = vmatmul.f32.gmra.mxu0 %v6185
        %v6248 = vpop.f32.mrf.mxu0
        %v6249 = vadd.f32 %v6214, %v6248
        %6250 = vmatmul.f32.gmra.mxu0 %v6186
        %v6251 = vpop.f32.mrf.mxu0
        %v6252 = vadd.f32 %v6214, %v6251
        %6253 = vmatmul.f32.gmra.mxu0 %v6187
        %v6254 = vpop.f32.mrf.mxu0
        %v6255 = vadd.f32 %v6214, %v6254
        %6256 = vmatmul.f32.gmra.mxu0 %v6188
        %v6257 = vpop.f32.mrf.mxu0
        %v6258 = vadd.f32 %v6214, %v6257
        %6259 = vmatmul.f32.gmra.mxu0 %v6189
        %v6260 = vpop.f32.mrf.mxu0
        %v6261 = vadd.f32 %v6214, %v6260
        %6262 = vmatmul.f32.gmra.mxu0 %v6190
        %v6263 = vpop.f32.mrf.mxu0
        %v6264 = vadd.f32 %v6214, %v6263
        %6265 = vmatmul.f32.gmra.mxu0 %v6191
        %v6266 = vpop.f32.mrf.mxu0
        %v6267 = vadd.f32 %v6214, %v6266
        %6268 = vmatmul.f32.gmra.mxu0 %v6192
        %v6269 = vpop.f32.mrf.mxu0
        %v6270 = vadd.f32 %v6214, %v6269
        %6271 = vmatmul.f32.gmra.mxu0 %v6193
        %v6272 = vpop.f32.mrf.mxu0
        %v6273 = vadd.f32 %v6214, %v6272
        %6274 = vmatmul.f32.gmra.mxu0 %v6194
        %v6275 = vpop.f32.mrf.mxu0
        %v6276 = vadd.f32 %v6214, %v6275
        %6277 = vmatmul.f32.gmra.mxu0 %v6195
        %v6278 = vpop.f32.mrf.mxu0
        %v6279 = vadd.f32 %v6214, %v6278
        %6280 = vdwg.mxu0
        %v6281 = vadd.f32 %v272, %v6234
        %v6282 = vadd.f32 %v273, %v6237
        %v6283 = vadd.f32 %v274, %v6240
        %v6284 = vadd.f32 %v275, %v6243
        %v6285 = vadd.f32 %v276, %v6246
        %v6286 = vadd.f32 %v277, %v6249
        %v6287 = vadd.f32 %v278, %v6252
        %v6288 = vadd.f32 %v279, %v6255
        %v6289 = vadd.f32 %v280, %v6258
        %v6290 = vadd.f32 %v281, %v6261
        %v6291 = vadd.f32 %v282, %v6264
        %v6292 = vadd.f32 %v283, %v6267
        %v6293 = vadd.f32 %v284, %v6270
        %v6294 = vadd.f32 %v285, %v6273
        %v6295 = vadd.f32 %v286, %v6276
        %v6296 = vadd.f32 %v287, %v6279
        %6297 = vst [vmem:[%s271] sm:$0xff] %v6281
        %6298 = vst [vmem:[%s271 + $0x8] sm:$0xff] %v6282
        %6299 = vst [vmem:[%s271 + $0x10] sm:$0xff] %v6283
        %6300 = vst [vmem:[%s271 + $0x18] sm:$0xff] %v6284
        %6301 = vst [vmem:[%s271 + $0x20] sm:$0xff] %v6285
        %6302 = vst [vmem:[%s271 + $0x28] sm:$0xff] %v6286
        %6303 = vst [vmem:[%s271 + $0x30] sm:$0xff] %v6287
        %6304 = vst [vmem:[%s271 + $0x38] sm:$0xff] %v6288
        %6305 = vst [vmem:[%s271 + $0x40] sm:$0xff] %v6289
        %6306 = vst [vmem:[%s271 + $0x48] sm:$0xff] %v6290
        %6307 = vst [vmem:[%s271 + $0x50] sm:$0xff] %v6291
        %6308 = vst [vmem:[%s271 + $0x58] sm:$0xff] %v6292
        %6309 = vst [vmem:[%s271 + $0x60] sm:$0xff] %v6293
        %6310 = vst [vmem:[%s271 + $0x68] sm:$0xff] %v6294
        %6311 = vst [vmem:[%s271 + $0x70] sm:$0xff] %v6295
        %6312 = vst [vmem:[%s271 + $0x78] sm:$0xff] %v6296
        %s6313 = sand.u32 %s162, 1
        %s6314 = scalar_lea.sflag [#allocation5], %s6313
        %s6315 = sand.u32 %s162, 1
        %s6316 = smul.addr %s6315, 128
        %s6317 = scalar_lea.vmem [#allocation6], %s6316
        // Predicated region
        $region49: #{tpu_custom_call.1} parent=43 // pred_check
          %p6318 = pneg %p172
        $region50: #{tpu_custom_call.1} parent=43 // pred_check_branch
          %6320 = sbr.rel (%p6318) target = $region52
        $region51: #{tpu_custom_call.1} parent=43 // pred_region
          %6322 = vsyncadd %s6314, 0
          %s6323 = smul.addr %s23, 16
          %s6324 = smul.addr %s6323, 8
          %s6325 = scalar_lea.hbm %s6, %s6324
          %s6326 = sshll.u32 %s6317, 4
          %s6327 = int_to_ptr.vmem [resolvable:$true] %s6326
          %s6328 = sshll.u32 %s6325, 4
          %s6329 = int_to_ptr.hbm [resolvable:$true] %s6328
          %6334 = dma.vmem_to_hbm [thread:$0]  %s6327, 2048, %s6329, %s6314, 128, 128, 8
        $region52: #{tpu_custom_call.1} parent=43 // pred_fallthru
          _
      $region44: #{tpu_custom_call.1} parent=5 // pred_fallthru
        _
      %p6335 = scmp.le.s32.totalorder 2, %s18
      // Predicated region
      $region53: #{tpu_custom_call.1} parent=5 // pred_check
        %p6336 = pneg %p6335
      $region54: #{tpu_custom_call.1} parent=5 // pred_check_branch
        %6338 = sbr.rel (%p6336) target = $region56
      $region55: #{tpu_custom_call.1} parent=5 // pred_region
        %s6339 = ssub.s32 %s18, 2
        // Predicated region
        $region57: #{tpu_custom_call.1} parent=55 // pred_check
          %p6340 = pneg %p178
        $region58: #{tpu_custom_call.1} parent=55 // pred_check_branch
          %6342 = sbr.rel (%p6340) target = $region60
        $region59: #{tpu_custom_call.1} parent=55 // pred_region
          %s6343 = sand.u32 %s163, 1
          %s6344 = scalar_lea.sflag [#allocation5], %s6343
          %s6345 = sand.u32 %s163, 1
          %s6346 = smul.addr %s6345, 128
          %s6347 = scalar_lea.vmem [#allocation6], %s6346
          %6349 = dma.done %s6344, 2048
        $region60: #{tpu_custom_call.1} parent=55 // pred_fallthru
          _
      $region56: #{tpu_custom_call.1} parent=5 // pred_fallthru
        _
    $region6: #{tpu_custom_call.1} parent=1 // loop_footer
      %s22 = sadd.s32 1, %s18
    $region7: #{tpu_custom_call.1} parent=1 // loop_footer_branch
      %17 = sbr.rel target = $region3
    $region8: #{tpu_custom_call.1} parent=1 // loop_exit
      _
    %6350 = vsyncpa [#allocation4], 1
    %s6351 = scalar_lea.sflag [#allocation4], 1
    %6352 = vsyncpa %s6351, 1
    %6353 = vsyncpa [#allocation5], 1
    %s6354 = scalar_lea.sflag [#allocation5], 1
    %6355 = vsyncpa %s6354, 1

</llo_original>
